<compile_context>
chip_gen: v7x
topology: tpu7x:2x2x1
jax: 0.10.0
libtpu: 0.0.40
codegen_flags: <defaults>
</compile_context>

<pallas_src>
import jax
import jax.numpy as jnp
from jax import lax
from jax.experimental import pallas as pl
from jax.experimental.pallas import tpu as pltpu


# -----------------------------------------------------------------------------
# Kernel 1: 3x3 same conv on one (batch, H-tile) halo band, as 3 accumulated
# K=3*CP matmuls (bf16 operands, f32 accumulation), with fused partial stats.
# -----------------------------------------------------------------------------
def _conv3x3_kernel(xb_ref, w_ref, b_ref, out_ref, stats_ref):
    # xb_ref   : (TH+2, W+2, CP) bf16   halo band of this (batch, H-tile)
    # w_ref    : (3, 3*CP, CP)   bf16   [kx, (ky, ci), co]
    # b_ref    : (1, CP)         f32
    # out_ref  : (TH, W, CP)     bf16   conv output tile
    # stats_ref: (2, CP)         f32    row0 = sum, row1 = sum of squares
    TH, W, CP = out_ref.shape

    acc = None
    for kx in range(3):
        # One sublane-shifted buffer per kx (the only relayout copies: 3 not 9).
        x_kx = xb_ref[:, kx:kx + W, :]                     # (TH+2, W, CP)
        # 3 ky slices are cheap major-dim slices; concat along K -> (TH*W, 3*CP).
        cols = jnp.concatenate(
            [x_kx[ky:ky + TH, :, :].reshape(TH * W, CP) for ky in range(3)],
            axis=1)
        d = jnp.dot(cols, w_ref[kx], preferred_element_type=jnp.float32)
        acc = d if acc is None else acc + d

    acc = acc + b_ref[...]                                 # (TH*W, CP) f32

    out_ref[...] = acc.reshape(TH, W, CP).astype(out_ref.dtype)

    # Fused partial batch statistics (f32, from the f32 accumulator).
    ssum = jnp.sum(acc, axis=0, keepdims=True)             # (1, CP)
    ssq = jnp.sum(acc * acc, axis=0, keepdims=True)        # (1, CP)
    stats_ref[...] = jnp.concatenate([ssum, ssq], axis=0)  # (2, CP)


# -----------------------------------------------------------------------------
# Kernel 2: BatchNorm (precomputed scale/shift) + ReLU over big lane-dense
# (TR, CP) tiles of the flattened activation.  Pure FMA + max, HBM-roofline.
# -----------------------------------------------------------------------------
def _bn_relu_kernel(x_ref, scale_ref, shift_ref, out_ref):
    # x_ref: (TR, CP) bf16 ; scale/shift: (1, CP) f32 ; out_ref: (TR, CP) f32
    y = x_ref[...].astype(jnp.float32) * scale_ref[...] + shift_ref[...]
    out_ref[...] = jnp.maximum(y, 0.0)


# -----------------------------------------------------------------------------
# Tile-size helpers
# -----------------------------------------------------------------------------
def _pick_tile_h(H, W, CP, budget_bytes=24 * 1024 * 1024):
    """Divisor of H: smallest with TH*W >= 512 that fits the VMEM budget,
    otherwise the largest that fits (double-buffered band + output tile)."""
    divs = [d for d in range(1, H + 1) if H % d == 0]

    def band_bytes(th):
        inp = 2 * (th + 2) * (W + 2) * CP * 2          # bf16, double-buffered
        out = 2 * th * W * CP * 2                      # bf16, double-buffered
        return inp + out

    good = [d for d in divs if band_bytes(d) <= budget_bytes]
    if not good:
        return divs[0]
    big_enough = [d for d in good if d * W >= 512]
    return big_enough[0] if big_enough else good[-1]


def _pick_tile_rows(M, cap=4096):
    """Largest multiple-of-8 divisor of M not exceeding cap."""
    cap = min(M, cap)
    return max(d for d in range(8, cap + 1, 8) if M % d == 0)


# -----------------------------------------------------------------------------
# Wrapper
# -----------------------------------------------------------------------------
def conv_block_forward(x_nchw, w_oihw, b, gamma, beta):
    """x_nchw: (N, C, H, W) f32. Returns (N, C, H, W) f32."""
    N, C, H, W = x_nchw.shape
    assert W % 8 == 0, "W must be a multiple of 8 (sublane-aligned im2col)"
    CP = ((C + 127) // 128) * 128            # lane-dense channel padding
    TH = _pick_tile_h(H, W, CP)
    n_ht = H // TH
    G = N * n_ht

    # --- wrapper glue (XLA): NCHW->NHWC, pad channels to CP, 1-px halo pad,
    # --- bf16 cast, and pre-tile into overlapping halo bands so that each
    # --- grid step only DMAs a (TH+2, W+2, CP) band (2 duplicated rows/tile).
    x = jnp.transpose(x_nchw, (0, 2, 3, 1))
    x = jnp.pad(x, ((0, 0), (1, 1), (1, 1), (0, CP - C))).astype(jnp.bfloat16)
    xb = jnp.stack([x[:, t * TH:t * TH + TH + 2] for t in range(n_ht)],
                   axis=1)                                   # (N,n_ht,TH+2,W+2,CP)

    w = jnp.transpose(w_oihw, (3, 2, 1, 0))                  # (kx, ky, ci, co)
    w = jnp.pad(w, ((0, 0), (0, 0), (0, CP - C), (0, CP - C)))
    w = w.reshape(3, 3 * CP, CP).astype(jnp.bfloat16)        # [kx, (ky,ci), co]
    b2 = jnp.pad(b, (0, CP - C)).reshape(1, CP).astype(jnp.float32)
    g_pad = jnp.pad(gamma, (0, CP - C)).astype(jnp.float32)
    be_pad = jnp.pad(beta, (0, CP - C)).astype(jnp.float32)

    # ---- conv (+ fused partial batch stats): grid over (batch, H-tiles) ----
    conv_out, stats = pl.pallas_call(
        _conv3x3_kernel,
        grid=(N, n_ht),
        in_specs=[
            pl.BlockSpec((None, None, TH + 2, W + 2, CP),
                         lambda n, t: (n, t, 0, 0, 0)),
            pl.BlockSpec((3, 3 * CP, CP), lambda n, t: (0, 0, 0)),
            pl.BlockSpec((1, CP), lambda n, t: (0, 0)),
        ],
        out_specs=[
            pl.BlockSpec((None, TH, W, CP), lambda n, t: (n, t, 0, 0)),
            pl.BlockSpec((None, 2, CP), lambda n, t: (n * n_ht + t, 0, 0)),
        ],
        out_shape=[
            jax.ShapeDtypeStruct((N, H, W, CP), jnp.bfloat16),
            jax.ShapeDtypeStruct((G, 2, CP), jnp.float32),
        ],
        compiler_params=pltpu.CompilerParams(
            dimension_semantics=("parallel", "parallel"),
            vmem_limit_bytes=32 * 1024 * 1024),
    )(xb, w, b2)

    # ---- BN stats reduction hoisted to the wrapper (tiny (G,2,CP) array) ----
    inv_count = 1.0 / float(N * H * W)
    tot = jnp.sum(stats, axis=0)                             # (2, CP)
    mean = tot[0] * inv_count
    var = tot[1] * inv_count - mean * mean                   # biased batch var
    scale = g_pad * lax.rsqrt(var + 1e-5)                    # (CP,)
    shift = be_pad - mean * scale
    scale2 = scale.reshape(1, CP)
    shift2 = shift.reshape(1, CP)

    # ---- BN + ReLU: big lane-dense tiles over the flattened activation ----
    M = N * H * W
    TR = _pick_tile_rows(M)
    conv_flat = conv_out.reshape(M, CP)
    bn = pl.pallas_call(
        _bn_relu_kernel,
        grid=(M // TR,),
        in_specs=[
            pl.BlockSpec((TR, CP), lambda i: (i, 0)),
            pl.BlockSpec((1, CP), lambda i: (0, 0)),
            pl.BlockSpec((1, CP), lambda i: (0, 0)),
        ],
        out_specs=pl.BlockSpec((TR, CP), lambda i: (i, 0)),
        out_shape=jax.ShapeDtypeStruct((M, CP), jnp.float32),
        compiler_params=pltpu.CompilerParams(
            dimension_semantics=("parallel",),
            vmem_limit_bytes=32 * 1024 * 1024),
    )(conv_flat, scale2, shift2)

    # Glue: drop channel padding, NHWC -> NCHW.
    bn = bn.reshape(N, H, W, CP)[..., :C]
    return jnp.transpose(bn, (0, 3, 1, 2))


# -----------------------------------------------------------------------------
# Pure-JAX reference (same semantics) for the correctness check.
# -----------------------------------------------------------------------------
def conv_block_ref(x_nchw, w_oihw, b, gamma, beta):
    conv = lax.conv_general_dilated(
        x_nchw, w_oihw,
        window_strides=(1, 1), padding=((1, 1), (1, 1)),
        dimension_numbers=("NCHW", "OIHW", "NCHW"),
    ) + b.reshape(1, -1, 1, 1)
    mean = jnp.mean(conv, axis=(0, 2, 3), keepdims=True)
    var = jnp.mean((conv - mean) ** 2, axis=(0, 2, 3), keepdims=True)
    y = (conv - mean) * lax.rsqrt(var + 1e-5)
    y = y * gamma.reshape(1, -1, 1, 1) + beta.reshape(1, -1, 1, 1)
    return jnp.maximum(y, 0.0)


if __name__ == "__main__":
    key = jax.random.PRNGKey(0)
    k_x, k_w, k_b = jax.random.split(key, 3)

    N, C, H, W = 2, 4, 16, 16
    x = jax.random.normal(k_x, (N, C, H, W), dtype=jnp.float32)

    # Deterministic parameter init (PyTorch-like uniform bounds for conv;
    # BatchNorm defaults: weight=1, bias=0).
    fan_in = C * 3 * 3
    bound = 1.0 / (fan_in ** 0.5)
    w_conv = jax.random.uniform(k_w, (C, C, 3, 3), jnp.float32, -bound, bound)
    b_conv = jax.random.uniform(k_b, (C,), jnp.float32, -bound, bound)
    gamma = jnp.ones((C,), jnp.float32)
    beta = jnp.zeros((C,), jnp.float32)

    fwd = jax.jit(conv_block_forward)
    out = jax.block_until_ready(fwd(x, w_conv, b_conv, gamma, beta))

    ref = conv_block_ref(x, w_conv, b_conv, gamma, beta)
    assert out.shape == (N, C, H, W)
    # bf16 MXU operands + bf16 intermediate (f32 accumulation/stats)
    # -> compare at bf16-level tolerance.
    max_err = float(jnp.max(jnp.abs(out - ref)))
    assert jnp.allclose(out, ref, rtol=2e-2, atol=2e-2), max_err

    print("KERNEL_OK")
</pallas_src>

<mosaic_0001>
module attributes {stable_mosaic.version = 11 : i64} {
  func.func @_conv3x3_kernel(%arg0: i32, %arg1: i32, %arg2: memref<1x1x18x18x128xbf16, #tpu.memory_space<vmem>>, %arg3: memref<3x384x128xbf16, #tpu.memory_space<vmem>>, %arg4: memref<1x128xf32, #tpu.memory_space<vmem>>, %arg5: memref<1x16x16x128xbf16, #tpu.memory_space<vmem>>, %arg6: memref<1x2x128xf32, #tpu.memory_space<vmem>>) attributes {dimension_semantics = [#tpu.dimension_semantics<parallel>, #tpu.dimension_semantics<parallel>], iteration_bounds = array<i64: 2, 1>, scalar_prefetch = 0 : i64, scratch_operands = 0 : i64, tpu.core_type = #tpu.core_type<tc>, window_params = [{transform_indices = @transform_0, window_bounds = array<i64: 1, 1, 18, 18, 128>}, {pipeline_mode = #tpu.pipeline_mode<synchronous>, transform_indices = @transform_1, window_bounds = array<i64: 3, 384, 128>}, {pipeline_mode = #tpu.pipeline_mode<synchronous>, transform_indices = @transform_2, window_bounds = array<i64: 1, 128>}, {transform_indices = @transform_3, window_bounds = array<i64: 1, 16, 16, 128>}, {transform_indices = @transform_4, window_bounds = array<i64: 1, 2, 128>}]} {
    %c0 = arith.constant 0 : index
    %c0_0 = arith.constant 0 : index
    %c0_1 = arith.constant 0 : index
    %c0_2 = arith.constant 0 : index
    %c0_3 = arith.constant 0 : index
    %0 = vector.load %arg2[%c0, %c0_0, %c0_1, %c0_2, %c0_3] : memref<1x1x18x18x128xbf16, #tpu.memory_space<vmem>>, vector<1x1x18x16x128xbf16>
    %1 = vector.shape_cast %0 : vector<1x1x18x16x128xbf16> to vector<18x16x128xbf16>
    %2 = vector.extract_strided_slice %1 {offsets = [0, 0, 0], sizes = [16, 16, 128], strides = [1, 1, 1]} : vector<18x16x128xbf16> to vector<16x16x128xbf16>
    %3 = vector.shape_cast %2 : vector<16x16x128xbf16> to vector<256x128xbf16>
    %4 = vector.extract_strided_slice %1 {offsets = [1, 0, 0], sizes = [16, 16, 128], strides = [1, 1, 1]} : vector<18x16x128xbf16> to vector<16x16x128xbf16>
    %5 = vector.shape_cast %4 : vector<16x16x128xbf16> to vector<256x128xbf16>
    %6 = vector.extract_strided_slice %1 {offsets = [2, 0, 0], sizes = [16, 16, 128], strides = [1, 1, 1]} : vector<18x16x128xbf16> to vector<16x16x128xbf16>
    %7 = vector.shape_cast %6 : vector<16x16x128xbf16> to vector<256x128xbf16>
    %8 = tpu.concatenate %3, %5, %7 in 1 : vector<256x128xbf16>, vector<256x128xbf16>, vector<256x128xbf16> -> vector<256x384xbf16>
    %c0_4 = arith.constant 0 : index
    %c0_5 = arith.constant 0 : index
    %c0_6 = arith.constant 0 : index
    %9 = vector.load %arg3[%c0_4, %c0_5, %c0_6] : memref<3x384x128xbf16, #tpu.memory_space<vmem>>, vector<1x384x128xbf16>
    %10 = vector.shape_cast %9 : vector<1x384x128xbf16> to vector<384x128xbf16>
    %cst = arith.constant dense<0.000000e+00> : vector<256x128xf32>
    %11 = tpu.matmul %8, %10, %cst {dimension_numbers = #tpu.dot_dimension_numbers<[1], [0], [0], [1], [0, 0, 1, 1], [], []>} : vector<256x384xbf16>, vector<384x128xbf16>, vector<256x128xf32> -> vector<256x128xf32>
    %c0_7 = arith.constant 0 : index
    %c0_8 = arith.constant 0 : index
    %c0_9 = arith.constant 0 : index
    %c1 = arith.constant 1 : index
    %c0_10 = arith.constant 0 : index
    %12 = vector.load %arg2[%c0_7, %c0_8, %c0_9, %c1, %c0_10] : memref<1x1x18x18x128xbf16, #tpu.memory_space<vmem>>, vector<1x1x18x16x128xbf16>
    %13 = vector.shape_cast %12 : vector<1x1x18x16x128xbf16> to vector<18x16x128xbf16>
    %14 = vector.extract_strided_slice %13 {offsets = [0, 0, 0], sizes = [16, 16, 128], strides = [1, 1, 1]} : vector<18x16x128xbf16> to vector<16x16x128xbf16>
    %15 = vector.shape_cast %14 : vector<16x16x128xbf16> to vector<256x128xbf16>
    %16 = vector.extract_strided_slice %13 {offsets = [1, 0, 0], sizes = [16, 16, 128], strides = [1, 1, 1]} : vector<18x16x128xbf16> to vector<16x16x128xbf16>
    %17 = vector.shape_cast %16 : vector<16x16x128xbf16> to vector<256x128xbf16>
    %18 = vector.extract_strided_slice %13 {offsets = [2, 0, 0], sizes = [16, 16, 128], strides = [1, 1, 1]} : vector<18x16x128xbf16> to vector<16x16x128xbf16>
    %19 = vector.shape_cast %18 : vector<16x16x128xbf16> to vector<256x128xbf16>
    %20 = tpu.concatenate %15, %17, %19 in 1 : vector<256x128xbf16>, vector<256x128xbf16>, vector<256x128xbf16> -> vector<256x384xbf16>
    %c1_11 = arith.constant 1 : index
    %c0_12 = arith.constant 0 : index
    %c0_13 = arith.constant 0 : index
    %21 = vector.load %arg3[%c1_11, %c0_12, %c0_13] : memref<3x384x128xbf16, #tpu.memory_space<vmem>>, vector<1x384x128xbf16>
    %22 = vector.shape_cast %21 : vector<1x384x128xbf16> to vector<384x128xbf16>
    %cst_14 = arith.constant dense<0.000000e+00> : vector<256x128xf32>
    %23 = tpu.matmul %20, %22, %cst_14 {dimension_numbers = #tpu.dot_dimension_numbers<[1], [0], [0], [1], [0, 0, 1, 1], [], []>} : vector<256x384xbf16>, vector<384x128xbf16>, vector<256x128xf32> -> vector<256x128xf32>
    %24 = arith.addf %11, %23 : vector<256x128xf32>
    %c0_15 = arith.constant 0 : index
    %c0_16 = arith.constant 0 : index
    %c0_17 = arith.constant 0 : index
    %c2 = arith.constant 2 : index
    %c0_18 = arith.constant 0 : index
    %25 = vector.load %arg2[%c0_15, %c0_16, %c0_17, %c2, %c0_18] : memref<1x1x18x18x128xbf16, #tpu.memory_space<vmem>>, vector<1x1x18x16x128xbf16>
    %26 = vector.shape_cast %25 : vector<1x1x18x16x128xbf16> to vector<18x16x128xbf16>
    %27 = vector.extract_strided_slice %26 {offsets = [0, 0, 0], sizes = [16, 16, 128], strides = [1, 1, 1]} : vector<18x16x128xbf16> to vector<16x16x128xbf16>
    %28 = vector.shape_cast %27 : vector<16x16x128xbf16> to vector<256x128xbf16>
    %29 = vector.extract_strided_slice %26 {offsets = [1, 0, 0], sizes = [16, 16, 128], strides = [1, 1, 1]} : vector<18x16x128xbf16> to vector<16x16x128xbf16>
    %30 = vector.shape_cast %29 : vector<16x16x128xbf16> to vector<256x128xbf16>
    %31 = vector.extract_strided_slice %26 {offsets = [2, 0, 0], sizes = [16, 16, 128], strides = [1, 1, 1]} : vector<18x16x128xbf16> to vector<16x16x128xbf16>
    %32 = vector.shape_cast %31 : vector<16x16x128xbf16> to vector<256x128xbf16>
    %33 = tpu.concatenate %28, %30, %32 in 1 : vector<256x128xbf16>, vector<256x128xbf16>, vector<256x128xbf16> -> vector<256x384xbf16>
    %c2_19 = arith.constant 2 : index
    %c0_20 = arith.constant 0 : index
    %c0_21 = arith.constant 0 : index
    %34 = vector.load %arg3[%c2_19, %c0_20, %c0_21] : memref<3x384x128xbf16, #tpu.memory_space<vmem>>, vector<1x384x128xbf16>
    %35 = vector.shape_cast %34 : vector<1x384x128xbf16> to vector<384x128xbf16>
    %cst_22 = arith.constant dense<0.000000e+00> : vector<256x128xf32>
    %36 = tpu.matmul %33, %35, %cst_22 {dimension_numbers = #tpu.dot_dimension_numbers<[1], [0], [0], [1], [0, 0, 1, 1], [], []>} : vector<256x384xbf16>, vector<384x128xbf16>, vector<256x128xf32> -> vector<256x128xf32>
    %37 = arith.addf %24, %36 : vector<256x128xf32>
    %c0_23 = arith.constant 0 : index
    %c0_24 = arith.constant 0 : index
    %38 = vector.load %arg4[%c0_23, %c0_24] : memref<1x128xf32, #tpu.memory_space<vmem>>, vector<1x128xf32>
    %39 = vector.broadcast %38 : vector<1x128xf32> to vector<256x128xf32>
    %40 = arith.addf %37, %39 : vector<256x128xf32>
    %41 = vector.shape_cast %40 : vector<256x128xf32> to vector<16x16x128xf32>
    %42 = arith.truncf %41 : vector<16x16x128xf32> to vector<16x16x128xbf16>
    %c0_25 = arith.constant 0 : index
    %c0_26 = arith.constant 0 : index
    %c0_27 = arith.constant 0 : index
    %c0_28 = arith.constant 0 : index
    %43 = vector.load %arg5[%c0_25, %c0_26, %c0_27, %c0_28] : memref<1x16x16x128xbf16, #tpu.memory_space<vmem>>, vector<1x16x16x128xbf16>
    %44 = vector.shape_cast %43 : vector<1x16x16x128xbf16> to vector<16x16x128xbf16>
    %45 = vector.shape_cast %42 : vector<16x16x128xbf16> to vector<1x16x16x128xbf16>
    tpu.vector_store %arg5[%c0_25, %c0_26, %c0_27, %c0_28], %45 {strides = array<i32>} : memref<1x16x16x128xbf16, #tpu.memory_space<vmem>>, vector<1x16x16x128xbf16>,
    %cst_29 = arith.constant dense<0.000000e+00> : vector<128xf32>
    %46 = vector.multi_reduction <add>, %40, %cst_29 [0] : vector<256x128xf32> to vector<128xf32>
    %47 = vector.shape_cast %46 : vector<128xf32> to vector<1x128xf32>
    %48 = arith.mulf %40, %40 : vector<256x128xf32>
    %cst_30 = arith.constant dense<0.000000e+00> : vector<128xf32>
    %49 = vector.multi_reduction <add>, %48, %cst_30 [0] : vector<256x128xf32> to vector<128xf32>
    %50 = vector.shape_cast %49 : vector<128xf32> to vector<1x128xf32>
    %51 = tpu.concatenate %47, %50 in 0 : vector<1x128xf32>, vector<1x128xf32> -> vector<2x128xf32>
    %c0_31 = arith.constant 0 : index
    %c0_32 = arith.constant 0 : index
    %c0_33 = arith.constant 0 : index
    %52 = vector.load %arg6[%c0_31, %c0_32, %c0_33] : memref<1x2x128xf32, #tpu.memory_space<vmem>>, vector<1x2x128xf32>
    %53 = vector.shape_cast %52 : vector<1x2x128xf32> to vector<2x128xf32>
    %54 = vector.shape_cast %51 : vector<2x128xf32> to vector<1x2x128xf32>
    tpu.vector_store %arg6[%c0_31, %c0_32, %c0_33], %54 {strides = array<i32>} : memref<1x2x128xf32, #tpu.memory_space<vmem>>, vector<1x2x128xf32>,
    return
  }
  func.func @transform_0(%arg0: i32, %arg1: i32) -> (i32, i32, i32, i32, i32) {
    %c0_i32 = arith.constant 0 : i32
    %c0_i32_0 = arith.constant 0 : i32
    %c0_i32_1 = arith.constant 0 : i32
    %c0_i32_2 = arith.constant 0 : i32
    return %arg0, %arg1, %c0_i32, %c0_i32_0, %c0_i32_1 : i32, i32, i32, i32, i32
  }
  func.func @transform_1(%arg0: i32, %arg1: i32) -> (i32, i32, i32) {
    %c0_i32 = arith.constant 0 : i32
    %c0_i32_0 = arith.constant 0 : i32
    %c0_i32_1 = arith.constant 0 : i32
    %c0_i32_2 = arith.constant 0 : i32
    return %c0_i32, %c0_i32_0, %c0_i32_1 : i32, i32, i32
  }
  func.func @transform_2(%arg0: i32, %arg1: i32) -> (i32, i32) {
    %c0_i32 = arith.constant 0 : i32
    %c0_i32_0 = arith.constant 0 : i32
    %c0_i32_1 = arith.constant 0 : i32
    return %c0_i32, %c0_i32_0 : i32, i32
  }
  func.func @transform_3(%arg0: i32, %arg1: i32) -> (i32, i32, i32, i32) {
    %c0_i32 = arith.constant 0 : i32
    %c0_i32_0 = arith.constant 0 : i32
    %c0_i32_1 = arith.constant 0 : i32
    return %arg0, %arg1, %c0_i32, %c0_i32_0 : i32, i32, i32, i32
  }
  func.func @transform_4(%arg0: i32, %arg1: i32) -> (i32, i32, i32) {
    %c1_i32 = arith.constant 1 : i32
    %0 = arith.muli %arg0, %c1_i32 : i32
    %1 = arith.addi %0, %arg1 : i32
    %c0_i32 = arith.constant 0 : i32
    %c0_i32_0 = arith.constant 0 : i32
    %c0_i32_1 = arith.constant 0 : i32
    return %1, %c0_i32, %c0_i32_0 : i32, i32, i32
  }
}

module attributes {stable_mosaic.version = 11 : i64} {
  func.func @_bn_relu_kernel(%arg0: i32, %arg1: memref<512x128xbf16, #tpu.memory_space<vmem>>, %arg2: memref<1x128xf32, #tpu.memory_space<vmem>>, %arg3: memref<1x128xf32, #tpu.memory_space<vmem>>, %arg4: memref<512x128xf32, #tpu.memory_space<vmem>>) attributes {dimension_semantics = [#tpu.dimension_semantics<parallel>], iteration_bounds = array<i64: 1>, scalar_prefetch = 0 : i64, scratch_operands = 0 : i64, tpu.core_type = #tpu.core_type<tc>, window_params = [{transform_indices = @transform_0, window_bounds = array<i64: 512, 128>}, {pipeline_mode = #tpu.pipeline_mode<synchronous>, transform_indices = @transform_1, window_bounds = array<i64: 1, 128>}, {pipeline_mode = #tpu.pipeline_mode<synchronous>, transform_indices = @transform_2, window_bounds = array<i64: 1, 128>}, {transform_indices = @transform_3, window_bounds = array<i64: 512, 128>}]} {
    %c0 = arith.constant 0 : index
    %c0_0 = arith.constant 0 : index
    %0 = vector.load %arg1[%c0, %c0_0] : memref<512x128xbf16, #tpu.memory_space<vmem>>, vector<512x128xbf16>
    %1 = arith.extf %0 : vector<512x128xbf16> to vector<512x128xf32>
    %c0_1 = arith.constant 0 : index
    %c0_2 = arith.constant 0 : index
    %2 = vector.load %arg2[%c0_1, %c0_2] : memref<1x128xf32, #tpu.memory_space<vmem>>, vector<1x128xf32>
    %3 = vector.broadcast %2 : vector<1x128xf32> to vector<512x128xf32>
    %4 = arith.mulf %1, %3 : vector<512x128xf32>
    %c0_3 = arith.constant 0 : index
    %c0_4 = arith.constant 0 : index
    %5 = vector.load %arg3[%c0_3, %c0_4] : memref<1x128xf32, #tpu.memory_space<vmem>>, vector<1x128xf32>
    %6 = vector.broadcast %5 : vector<1x128xf32> to vector<512x128xf32>
    %7 = arith.addf %4, %6 : vector<512x128xf32>
    %cst = arith.constant 0.000000e+00 : f32
    %8 = vector.broadcast %cst : f32 to vector<512x128xf32>
    %9 = arith.maximumf %7, %8 : vector<512x128xf32>
    %c0_5 = arith.constant 0 : index
    %c0_6 = arith.constant 0 : index
    %10 = vector.load %arg4[%c0_5, %c0_6] : memref<512x128xf32, #tpu.memory_space<vmem>>, vector<512x128xf32>
    tpu.vector_store %arg4[%c0_5, %c0_6], %9 {strides = array<i32>} : memref<512x128xf32, #tpu.memory_space<vmem>>, vector<512x128xf32>,
    return
  }
  func.func @transform_0(%arg0: i32) -> (i32, i32) {
    %c0_i32 = arith.constant 0 : i32
    %c0_i32_0 = arith.constant 0 : i32
    return %arg0, %c0_i32 : i32, i32
  }
  func.func @transform_1(%arg0: i32) -> (i32, i32) {
    %c0_i32 = arith.constant 0 : i32
    %c0_i32_0 = arith.constant 0 : i32
    %c0_i32_1 = arith.constant 0 : i32
    return %c0_i32, %c0_i32_0 : i32, i32
  }
  func.func @transform_2(%arg0: i32) -> (i32, i32) {
    %c0_i32 = arith.constant 0 : i32
    %c0_i32_0 = arith.constant 0 : i32
    %c0_i32_1 = arith.constant 0 : i32
    return %c0_i32, %c0_i32_0 : i32, i32
  }
  func.func @transform_3(%arg0: i32) -> (i32, i32) {
    %c0_i32 = arith.constant 0 : i32
    %c0_i32_0 = arith.constant 0 : i32
    return %arg0, %c0_i32 : i32, i32
  }
}

</mosaic_0001>

<llo_original>
// kernel: conv_block_forward.3
$region0: #{conv_block_forward.3}
  #allocation0 [shape = 'u32[]', space=smem, size = 0x4, offset = 0x4, fixed_abs, tag = 'smem constant byte address 0x4 - core index']
  #allocation1 [shape = 'u32[144,128]{1,0:T(1,128)}', space=vmem, size = 0x12000, scoped, tag = 'internal scratch']
  %s0 = inlined_call_operand.vmem [shape: bf16[512,128], index: 0, kind: input, shape index: {}]
  %s1 = inlined_call_operand.vmem [shape: f32[1,128], index: 1, kind: input, shape index: {}]
  %s2 = inlined_call_operand.vmem [shape: f32[1,128], index: 2, kind: input, shape index: {}]
  %s3 = inlined_call_operand.vmem [shape: f32[512,128], index: 3, kind: output, shape index: {}]
  %s4 = sld [smem:[#allocation0]]
  $region22: #{conv_block_forward.3} parent=0
    _
  %s6 = ssub.s32 1, %s4
  %s7 = scalar_select 0, %s6, %s4
  // Predicated region
  $region2: #{conv_block_forward.3} parent=0 // pred_check
    _
  $region3: #{conv_block_forward.3} parent=0 // pred_check_branch
    %9 = sbr.rel (0) target = $region5
  $region4: #{conv_block_forward.3} parent=0 // pred_region
    _
  $region5: #{conv_block_forward.3} parent=0 // pred_fallthru
    _
  // Predicated region
  $region6: #{conv_block_forward.3} parent=0 // pred_check
    _
  $region7: #{conv_block_forward.3} parent=0 // pred_check_branch
    %11 = sbr.rel (0) target = $region9
  $region8: #{conv_block_forward.3} parent=0 // pred_region
    _
  $region9: #{conv_block_forward.3} parent=0 // pred_fallthru
    _
  // Predicated region
  $region10: #{conv_block_forward.3} parent=0 // pred_check
    _
  $region11: #{conv_block_forward.3} parent=0 // pred_check_branch
    %13 = sbr.rel (0) target = $region13
  $region12: #{conv_block_forward.3} parent=0 // pred_region
    _
  $region13: #{conv_block_forward.3} parent=0 // pred_fallthru
    _
  %v14 = vld [vmem:[%s0] sm:$0xf]
  %v15 = vld [vmem:[%s0 + $0x4] sm:$0xf]
  %v16 = vld [vmem:[%s0 + $0x8] sm:$0xf]
  %v17 = vld [vmem:[%s0 + $0xc] sm:$0xf]
  %v18 = vld [vmem:[%s0 + $0x10] sm:$0xf]
  %v19 = vld [vmem:[%s0 + $0x14] sm:$0xf]
  %v20 = vld [vmem:[%s0 + $0x18] sm:$0xf]
  %v21 = vld [vmem:[%s0 + $0x1c] sm:$0xf]
  %v22 = vld [vmem:[%s0 + $0x20] sm:$0xf]
  %v23 = vld [vmem:[%s0 + $0x24] sm:$0xf]
  %v24 = vld [vmem:[%s0 + $0x28] sm:$0xf]
  %v25 = vld [vmem:[%s0 + $0x2c] sm:$0xf]
  %v26 = vld [vmem:[%s0 + $0x30] sm:$0xf]
  %v27 = vld [vmem:[%s0 + $0x34] sm:$0xf]
  %v28 = vld [vmem:[%s0 + $0x38] sm:$0xf]
  %v29 = vld [vmem:[%s0 + $0x3c] sm:$0xf]
  %v30 = vld [vmem:[%s0 + $0x40] sm:$0xf]
  %v31 = vld [vmem:[%s0 + $0x44] sm:$0xf]
  %v32 = vld [vmem:[%s0 + $0x48] sm:$0xf]
  %v33 = vld [vmem:[%s0 + $0x4c] sm:$0xf]
  %v34 = vld [vmem:[%s0 + $0x50] sm:$0xf]
  %v35 = vld [vmem:[%s0 + $0x54] sm:$0xf]
  %v36 = vld [vmem:[%s0 + $0x58] sm:$0xf]
  %v37 = vld [vmem:[%s0 + $0x5c] sm:$0xf]
  %v38 = vld [vmem:[%s0 + $0x60] sm:$0xf]
  %v39 = vld [vmem:[%s0 + $0x64] sm:$0xf]
  %v40 = vld [vmem:[%s0 + $0x68] sm:$0xf]
  %v41 = vld [vmem:[%s0 + $0x6c] sm:$0xf]
  %v42 = vld [vmem:[%s0 + $0x70] sm:$0xf]
  %v43 = vld [vmem:[%s0 + $0x74] sm:$0xf]
  %v44 = vld [vmem:[%s0 + $0x78] sm:$0xf]
  %v45 = vld [vmem:[%s0 + $0x7c] sm:$0xf]
  %v46 = vld [vmem:[%s0 + $0x80] sm:$0xf]
  %v47 = vld [vmem:[%s0 + $0x84] sm:$0xf]
  %v48 = vld [vmem:[%s0 + $0x88] sm:$0xf]
  %v49 = vld [vmem:[%s0 + $0x8c] sm:$0xf]
  %v50 = vld [vmem:[%s0 + $0x90] sm:$0xf]
  %v51 = vld [vmem:[%s0 + $0x94] sm:$0xf]
  %v52 = vld [vmem:[%s0 + $0x98] sm:$0xf]
  %v53 = vld [vmem:[%s0 + $0x9c] sm:$0xf]
  %v54 = vld [vmem:[%s0 + $0xa0] sm:$0xf]
  %v55 = vld [vmem:[%s0 + $0xa4] sm:$0xf]
  %v56 = vld [vmem:[%s0 + $0xa8] sm:$0xf]
  %v57 = vld [vmem:[%s0 + $0xac] sm:$0xf]
  %v58 = vld [vmem:[%s0 + $0xb0] sm:$0xf]
  %v59 = vld [vmem:[%s0 + $0xb4] sm:$0xf]
  %v60 = vld [vmem:[%s0 + $0xb8] sm:$0xf]
  %v61 = vld [vmem:[%s0 + $0xbc] sm:$0xf]
  %v62 = vld [vmem:[%s0 + $0xc0] sm:$0xf]
  %v63 = vld [vmem:[%s0 + $0xc4] sm:$0xf]
  %v64 = vld [vmem:[%s0 + $0xc8] sm:$0xf]
  %v65 = vld [vmem:[%s0 + $0xcc] sm:$0xf]
  %v66 = vld [vmem:[%s0 + $0xd0] sm:$0xf]
  %v67 = vld [vmem:[%s0 + $0xd4] sm:$0xf]
  %v68 = vld [vmem:[%s0 + $0xd8] sm:$0xf]
  %v69 = vld [vmem:[%s0 + $0xdc] sm:$0xf]
  %v70 = vld [vmem:[%s0 + $0xe0] sm:$0xf]
  %v71 = vld [vmem:[%s0 + $0xe4] sm:$0xf]
  %v72 = vld [vmem:[%s0 + $0xe8] sm:$0xf]
  %v73 = vld [vmem:[%s0 + $0xec] sm:$0xf]
  %v74 = vld [vmem:[%s0 + $0xf0] sm:$0xf]
  %v75 = vld [vmem:[%s0 + $0xf4] sm:$0xf]
  %v76 = vld [vmem:[%s0 + $0xf8] sm:$0xf]
  %v77 = vld [vmem:[%s0 + $0xfc] sm:$0xf]
  %v78 = vunpack.c.l.bf16 %v14
  %v79 = vunpack.c.l.bf16 %v15
  %v80 = vunpack.c.l.bf16 %v16
  %v81 = vunpack.c.l.bf16 %v17
  %v82 = vunpack.c.l.bf16 %v18
  %v83 = vunpack.c.l.bf16 %v19
  %v84 = vunpack.c.l.bf16 %v20
  %v85 = vunpack.c.l.bf16 %v21
  %v86 = vunpack.c.l.bf16 %v22
  %v87 = vunpack.c.l.bf16 %v23
  %v88 = vunpack.c.l.bf16 %v24
  %v89 = vunpack.c.l.bf16 %v25
  %v90 = vunpack.c.l.bf16 %v26
  %v91 = vunpack.c.l.bf16 %v27
  %v92 = vunpack.c.l.bf16 %v28
  %v93 = vunpack.c.l.bf16 %v29
  %v94 = vunpack.c.l.bf16 %v30
  %v95 = vunpack.c.l.bf16 %v31
  %v96 = vunpack.c.l.bf16 %v32
  %v97 = vunpack.c.l.bf16 %v33
  %v98 = vunpack.c.l.bf16 %v34
  %v99 = vunpack.c.l.bf16 %v35
  %v100 = vunpack.c.l.bf16 %v36
  %v101 = vunpack.c.l.bf16 %v37
  %v102 = vunpack.c.l.bf16 %v38
  %v103 = vunpack.c.l.bf16 %v39
  %v104 = vunpack.c.l.bf16 %v40
  %v105 = vunpack.c.l.bf16 %v41
  %v106 = vunpack.c.l.bf16 %v42
  %v107 = vunpack.c.l.bf16 %v43
  %v108 = vunpack.c.l.bf16 %v44
  %v109 = vunpack.c.l.bf16 %v45
  %v110 = vunpack.c.l.bf16 %v46
  %v111 = vunpack.c.l.bf16 %v47
  %v112 = vunpack.c.l.bf16 %v48
  %v113 = vunpack.c.l.bf16 %v49
  %v114 = vunpack.c.l.bf16 %v50
  %v115 = vunpack.c.l.bf16 %v51
  %v116 = vunpack.c.l.bf16 %v52
  %v117 = vunpack.c.l.bf16 %v53
  %v118 = vunpack.c.l.bf16 %v54
  %v119 = vunpack.c.l.bf16 %v55
  %v120 = vunpack.c.l.bf16 %v56
  %v121 = vunpack.c.l.bf16 %v57
  %v122 = vunpack.c.l.bf16 %v58
  %v123 = vunpack.c.l.bf16 %v59
  %v124 = vunpack.c.l.bf16 %v60
  %v125 = vunpack.c.l.bf16 %v61
  %v126 = vunpack.c.l.bf16 %v62
  %v127 = vunpack.c.l.bf16 %v63
  %v128 = vunpack.c.l.bf16 %v64
  %v129 = vunpack.c.l.bf16 %v65
  %v130 = vunpack.c.l.bf16 %v66
  %v131 = vunpack.c.l.bf16 %v67
  %v132 = vunpack.c.l.bf16 %v68
  %v133 = vunpack.c.l.bf16 %v69
  %v134 = vunpack.c.l.bf16 %v70
  %v135 = vunpack.c.l.bf16 %v71
  %v136 = vunpack.c.l.bf16 %v72
  %v137 = vunpack.c.l.bf16 %v73
  %v138 = vunpack.c.l.bf16 %v74
  %v139 = vunpack.c.l.bf16 %v75
  %v140 = vunpack.c.l.bf16 %v76
  %v141 = vunpack.c.l.bf16 %v77
  %v142 = vld [vmem:[%s1] sm:$0x1]
  %v144 = vlaneseq
  %v145 = vshrl.u32 %v144, 7
  %v146 = vsub.s32 0, %v145
  %v147 = vrot.slane %v142, %v146
  %v149 = vmul.f32 %v78, %v147
  %v150 = vmul.f32 %v79, %v147
  %v151 = vmul.f32 %v80, %v147
  %v152 = vmul.f32 %v81, %v147
  %v153 = vmul.f32 %v82, %v147
  %v154 = vmul.f32 %v83, %v147
  %v155 = vmul.f32 %v84, %v147
  %v156 = vmul.f32 %v85, %v147
  %v157 = vmul.f32 %v86, %v147
  %v158 = vmul.f32 %v87, %v147
  %v159 = vmul.f32 %v88, %v147
  %v160 = vmul.f32 %v89, %v147
  %v161 = vmul.f32 %v90, %v147
  %v162 = vmul.f32 %v91, %v147
  %v163 = vmul.f32 %v92, %v147
  %v164 = vmul.f32 %v93, %v147
  %v165 = vmul.f32 %v94, %v147
  %v166 = vmul.f32 %v95, %v147
  %v167 = vmul.f32 %v96, %v147
  %v168 = vmul.f32 %v97, %v147
  %v169 = vmul.f32 %v98, %v147
  %v170 = vmul.f32 %v99, %v147
  %v171 = vmul.f32 %v100, %v147
  %v172 = vmul.f32 %v101, %v147
  %v173 = vmul.f32 %v102, %v147
  %v174 = vmul.f32 %v103, %v147
  %v175 = vmul.f32 %v104, %v147
  %v176 = vmul.f32 %v105, %v147
  %v177 = vmul.f32 %v106, %v147
  %v178 = vmul.f32 %v107, %v147
  %v179 = vmul.f32 %v108, %v147
  %v180 = vmul.f32 %v109, %v147
  %v181 = vmul.f32 %v110, %v147
  %v182 = vmul.f32 %v111, %v147
  %v183 = vmul.f32 %v112, %v147
  %v184 = vmul.f32 %v113, %v147
  %v185 = vmul.f32 %v114, %v147
  %v186 = vmul.f32 %v115, %v147
  %v187 = vmul.f32 %v116, %v147
  %v188 = vmul.f32 %v117, %v147
  %v189 = vmul.f32 %v118, %v147
  %v190 = vmul.f32 %v119, %v147
  %v191 = vmul.f32 %v120, %v147
  %v192 = vmul.f32 %v121, %v147
  %v193 = vmul.f32 %v122, %v147
  %v194 = vmul.f32 %v123, %v147
  %v195 = vmul.f32 %v124, %v147
  %v196 = vmul.f32 %v125, %v147
  %v197 = vmul.f32 %v126, %v147
  %v198 = vmul.f32 %v127, %v147
  %v199 = vmul.f32 %v128, %v147
  %v200 = vmul.f32 %v129, %v147
  %v201 = vmul.f32 %v130, %v147
  %v202 = vmul.f32 %v131, %v147
  %v203 = vmul.f32 %v132, %v147
  %v204 = vmul.f32 %v133, %v147
  %v205 = vmul.f32 %v134, %v147
  %v206 = vmul.f32 %v135, %v147
  %v207 = vmul.f32 %v136, %v147
  %v208 = vmul.f32 %v137, %v147
  %v209 = vmul.f32 %v138, %v147
  %v210 = vmul.f32 %v139, %v147
  %v211 = vmul.f32 %v140, %v147
  %v212 = vmul.f32 %v141, %v147
  %v213 = vld [vmem:[%s2] sm:$0x1]
  %v215 = vlaneseq
  %v216 = vshrl.u32 %v215, 7
  %v217 = vsub.s32 0, %v216
  %v218 = vrot.slane %v213, %v217
  %v220 = vadd.f32 %v149, %v218
  %v221 = vadd.f32 %v150, %v218
  %v222 = vadd.f32 %v151, %v218
  %v223 = vadd.f32 %v152, %v218
  %v224 = vadd.f32 %v153, %v218
  %v225 = vadd.f32 %v154, %v218
  %v226 = vadd.f32 %v155, %v218
  %v227 = vadd.f32 %v156, %v218
  %v228 = vadd.f32 %v157, %v218
  %v229 = vadd.f32 %v158, %v218
  %v230 = vadd.f32 %v159, %v218
  %v231 = vadd.f32 %v160, %v218
  %v232 = vadd.f32 %v161, %v218
  %v233 = vadd.f32 %v162, %v218
  %v234 = vadd.f32 %v163, %v218
  %v235 = vadd.f32 %v164, %v218
  %v236 = vadd.f32 %v165, %v218
  %v237 = vadd.f32 %v166, %v218
  %v238 = vadd.f32 %v167, %v218
  %v239 = vadd.f32 %v168, %v218
  %v240 = vadd.f32 %v169, %v218
  %v241 = vadd.f32 %v170, %v218
  %v242 = vadd.f32 %v171, %v218
  %v243 = vadd.f32 %v172, %v218
  %v244 = vadd.f32 %v173, %v218
  %v245 = vadd.f32 %v174, %v218
  %v246 = vadd.f32 %v175, %v218
  %v247 = vadd.f32 %v176, %v218
  %v248 = vadd.f32 %v177, %v218
  %v249 = vadd.f32 %v178, %v218
  %v250 = vadd.f32 %v179, %v218
  %v251 = vadd.f32 %v180, %v218
  %v252 = vadd.f32 %v181, %v218
  %v253 = vadd.f32 %v182, %v218
  %v254 = vadd.f32 %v183, %v218
  %v255 = vadd.f32 %v184, %v218
  %v256 = vadd.f32 %v185, %v218
  %v257 = vadd.f32 %v186, %v218
  %v258 = vadd.f32 %v187, %v218
  %v259 = vadd.f32 %v188, %v218
  %v260 = vadd.f32 %v189, %v218
  %v261 = vadd.f32 %v190, %v218
  %v262 = vadd.f32 %v191, %v218
  %v263 = vadd.f32 %v192, %v218
  %v264 = vadd.f32 %v193, %v218
  %v265 = vadd.f32 %v194, %v218
  %v266 = vadd.f32 %v195, %v218
  %v267 = vadd.f32 %v196, %v218
  %v268 = vadd.f32 %v197, %v218
  %v269 = vadd.f32 %v198, %v218
  %v270 = vadd.f32 %v199, %v218
  %v271 = vadd.f32 %v200, %v218
  %v272 = vadd.f32 %v201, %v218
  %v273 = vadd.f32 %v202, %v218
  %v274 = vadd.f32 %v203, %v218
  %v275 = vadd.f32 %v204, %v218
  %v276 = vadd.f32 %v205, %v218
  %v277 = vadd.f32 %v206, %v218
  %v278 = vadd.f32 %v207, %v218
  %v279 = vadd.f32 %v208, %v218
  %v280 = vadd.f32 %v209, %v218
  %v281 = vadd.f32 %v210, %v218
  %v282 = vadd.f32 %v211, %v218
  %v283 = vadd.f32 %v212, %v218
  %v284 = vmax.f32 %v220, 0.0
  %v285 = vmax.f32 %v221, 0.0
  %v286 = vmax.f32 %v222, 0.0
  %v287 = vmax.f32 %v223, 0.0
  %v288 = vmax.f32 %v224, 0.0
  %v289 = vmax.f32 %v225, 0.0
  %v290 = vmax.f32 %v226, 0.0
  %v291 = vmax.f32 %v227, 0.0
  %v292 = vmax.f32 %v228, 0.0
  %v293 = vmax.f32 %v229, 0.0
  %v294 = vmax.f32 %v230, 0.0
  %v295 = vmax.f32 %v231, 0.0
  %v296 = vmax.f32 %v232, 0.0
  %v297 = vmax.f32 %v233, 0.0
  %v298 = vmax.f32 %v234, 0.0
  %v299 = vmax.f32 %v235, 0.0
  %v300 = vmax.f32 %v236, 0.0
  %v301 = vmax.f32 %v237, 0.0
  %v302 = vmax.f32 %v238, 0.0
  %v303 = vmax.f32 %v239, 0.0
  %v304 = vmax.f32 %v240, 0.0
  %v305 = vmax.f32 %v241, 0.0
  %v306 = vmax.f32 %v242, 0.0
  %v307 = vmax.f32 %v243, 0.0
  %v308 = vmax.f32 %v244, 0.0
  %v309 = vmax.f32 %v245, 0.0
  %v310 = vmax.f32 %v246, 0.0
  %v311 = vmax.f32 %v247, 0.0
  %v312 = vmax.f32 %v248, 0.0
  %v313 = vmax.f32 %v249, 0.0
  %v314 = vmax.f32 %v250, 0.0
  %v315 = vmax.f32 %v251, 0.0
  %v316 = vmax.f32 %v252, 0.0
  %v317 = vmax.f32 %v253, 0.0
  %v318 = vmax.f32 %v254, 0.0
  %v319 = vmax.f32 %v255, 0.0
  %v320 = vmax.f32 %v256, 0.0
  %v321 = vmax.f32 %v257, 0.0
  %v322 = vmax.f32 %v258, 0.0
  %v323 = vmax.f32 %v259, 0.0
  %v324 = vmax.f32 %v260, 0.0
  %v325 = vmax.f32 %v261, 0.0
  %v326 = vmax.f32 %v262, 0.0
  %v327 = vmax.f32 %v263, 0.0
  %v328 = vmax.f32 %v264, 0.0
  %v329 = vmax.f32 %v265, 0.0
  %v330 = vmax.f32 %v266, 0.0
  %v331 = vmax.f32 %v267, 0.0
  %v332 = vmax.f32 %v268, 0.0
  %v333 = vmax.f32 %v269, 0.0
  %v334 = vmax.f32 %v270, 0.0
  %v335 = vmax.f32 %v271, 0.0
  %v336 = vmax.f32 %v272, 0.0
  %v337 = vmax.f32 %v273, 0.0
  %v338 = vmax.f32 %v274, 0.0
  %v339 = vmax.f32 %v275, 0.0
  %v340 = vmax.f32 %v276, 0.0
  %v341 = vmax.f32 %v277, 0.0
  %v342 = vmax.f32 %v278, 0.0
  %v343 = vmax.f32 %v279, 0.0
  %v344 = vmax.f32 %v280, 0.0
  %v345 = vmax.f32 %v281, 0.0
  %v346 = vmax.f32 %v282, 0.0
  %v347 = vmax.f32 %v283, 0.0
  %348 = vst [vmem:[%s3] sm:$0xff] %v284
  %349 = vst [vmem:[%s3 + $0x8] sm:$0xff] %v285
  %350 = vst [vmem:[%s3 + $0x10] sm:$0xff] %v286
  %351 = vst [vmem:[%s3 + $0x18] sm:$0xff] %v287
  %352 = vst [vmem:[%s3 + $0x20] sm:$0xff] %v288
  %353 = vst [vmem:[%s3 + $0x28] sm:$0xff] %v289
  %354 = vst [vmem:[%s3 + $0x30] sm:$0xff] %v290
  %355 = vst [vmem:[%s3 + $0x38] sm:$0xff] %v291
  %356 = vst [vmem:[%s3 + $0x40] sm:$0xff] %v292
  %357 = vst [vmem:[%s3 + $0x48] sm:$0xff] %v293
  %358 = vst [vmem:[%s3 + $0x50] sm:$0xff] %v294
  %359 = vst [vmem:[%s3 + $0x58] sm:$0xff] %v295
  %360 = vst [vmem:[%s3 + $0x60] sm:$0xff] %v296
  %361 = vst [vmem:[%s3 + $0x68] sm:$0xff] %v297
  %362 = vst [vmem:[%s3 + $0x70] sm:$0xff] %v298
  %363 = vst [vmem:[%s3 + $0x78] sm:$0xff] %v299
  %364 = vst [vmem:[%s3 + $0x80] sm:$0xff] %v300
  %365 = vst [vmem:[%s3 + $0x88] sm:$0xff] %v301
  %366 = vst [vmem:[%s3 + $0x90] sm:$0xff] %v302
  %367 = vst [vmem:[%s3 + $0x98] sm:$0xff] %v303
  %368 = vst [vmem:[%s3 + $0xa0] sm:$0xff] %v304
  %369 = vst [vmem:[%s3 + $0xa8] sm:$0xff] %v305
  %370 = vst [vmem:[%s3 + $0xb0] sm:$0xff] %v306
  %371 = vst [vmem:[%s3 + $0xb8] sm:$0xff] %v307
  %372 = vst [vmem:[%s3 + $0xc0] sm:$0xff] %v308
  %373 = vst [vmem:[%s3 + $0xc8] sm:$0xff] %v309
  %374 = vst [vmem:[%s3 + $0xd0] sm:$0xff] %v310
  %375 = vst [vmem:[%s3 + $0xd8] sm:$0xff] %v311
  %376 = vst [vmem:[%s3 + $0xe0] sm:$0xff] %v312
  %377 = vst [vmem:[%s3 + $0xe8] sm:$0xff] %v313
  %378 = vst [vmem:[%s3 + $0xf0] sm:$0xff] %v314
  %379 = vst [vmem:[%s3 + $0xf8] sm:$0xff] %v315
  %380 = vst [vmem:[%s3 + $0x100] sm:$0xff] %v316
  %381 = vst [vmem:[%s3 + $0x108] sm:$0xff] %v317
  %382 = vst [vmem:[%s3 + $0x110] sm:$0xff] %v318
  %383 = vst [vmem:[%s3 + $0x118] sm:$0xff] %v319
  %384 = vst [vmem:[%s3 + $0x120] sm:$0xff] %v320
  %385 = vst [vmem:[%s3 + $0x128] sm:$0xff] %v321
  %386 = vst [vmem:[%s3 + $0x130] sm:$0xff] %v322
  %387 = vst [vmem:[%s3 + $0x138] sm:$0xff] %v323
  %388 = vst [vmem:[%s3 + $0x140] sm:$0xff] %v324
  %389 = vst [vmem:[%s3 + $0x148] sm:$0xff] %v325
  %390 = vst [vmem:[%s3 + $0x150] sm:$0xff] %v326
  %391 = vst [vmem:[%s3 + $0x158] sm:$0xff] %v327
  %392 = vst [vmem:[%s3 + $0x160] sm:$0xff] %v328
  %393 = vst [vmem:[%s3 + $0x168] sm:$0xff] %v329
  %394 = vst [vmem:[%s3 + $0x170] sm:$0xff] %v330
  %395 = vst [vmem:[%s3 + $0x178] sm:$0xff] %v331
  %396 = vst [vmem:[%s3 + $0x180] sm:$0xff] %v332
  %397 = vst [vmem:[%s3 + $0x188] sm:$0xff] %v333
  %398 = vst [vmem:[%s3 + $0x190] sm:$0xff] %v334
  %399 = vst [vmem:[%s3 + $0x198] sm:$0xff] %v335
  %400 = vst [vmem:[%s3 + $0x1a0] sm:$0xff] %v336
  %401 = vst [vmem:[%s3 + $0x1a8] sm:$0xff] %v337
  %402 = vst [vmem:[%s3 + $0x1b0] sm:$0xff] %v338
  %403 = vst [vmem:[%s3 + $0x1b8] sm:$0xff] %v339
  %404 = vst [vmem:[%s3 + $0x1c0] sm:$0xff] %v340
  %405 = vst [vmem:[%s3 + $0x1c8] sm:$0xff] %v341
  %406 = vst [vmem:[%s3 + $0x1d0] sm:$0xff] %v342
  %407 = vst [vmem:[%s3 + $0x1d8] sm:$0xff] %v343
  %408 = vst [vmem:[%s3 + $0x1e0] sm:$0xff] %v344
  %409 = vst [vmem:[%s3 + $0x1e8] sm:$0xff] %v345
  %410 = vst [vmem:[%s3 + $0x1f0] sm:$0xff] %v346
  %411 = vst [vmem:[%s3 + $0x1f8] sm:$0xff] %v347
  // Predicated region
  $region14: #{conv_block_forward.3} parent=0 // pred_check
    _
  $region15: #{conv_block_forward.3} parent=0 // pred_check_branch
    %413 = sbr.rel (0) target = $region17
  $region16: #{conv_block_forward.3} parent=0 // pred_region
    _
  $region17: #{conv_block_forward.3} parent=0 // pred_fallthru
    _
  // Predicated region
  $region18: #{conv_block_forward.3} parent=0 // pred_check
    _
  $region19: #{conv_block_forward.3} parent=0 // pred_check_branch
    %415 = sbr.rel (0) target = $region21
  $region20: #{conv_block_forward.3} parent=0 // pred_region
    _
  $region21: #{conv_block_forward.3} parent=0 // pred_fallthru
    _

// kernel: conv_block_forward.2
$region0: #{conv_block_forward.2}
  #allocation0 [shape = 'u32[]', space=smem, size = 0x4, offset = 0x4, fixed_abs, tag = 'smem constant byte address 0x4 - core index']
  #allocation1 [shape = 'u32[144,128]{1,0:T(1,128)}', space=vmem, size = 0x12000, scoped, tag = 'internal scratch']
  %s0 = inlined_call_operand.vmem [shape: bf16[2,1,18,18,128], index: 0, kind: input, shape index: {}]
  %s1 = inlined_call_operand.vmem [shape: bf16[3,384,128], index: 1, kind: input, shape index: {}]
  %s2 = inlined_call_operand.vmem [shape: f32[1,128], index: 2, kind: input, shape index: {}]
  %s3 = inlined_call_operand.vmem [shape: bf16[2,16,16,128], index: 3, kind: output, shape index: {0}]
  %s4 = inlined_call_operand.vmem [shape: f32[2,2,128], index: 4, kind: output, shape index: {1}]
  %5 = xla_tuple %s3, %s4
  %s6 = sld [smem:[#allocation0]]
  $region53: #{conv_block_forward.2} parent=0
    _
  %s8 = ssub.s32 1, %s6
  %s9 = scalar_select 0, %s8, %s6
  loop: start=0, step=1, limit=4
  $region2: #{conv_block_forward.2} parent=0 // loop_pre_header
    _
  $region3: #{conv_block_forward.2} parent=0 // loop_header
    %s11 = sphi 0, %s15
    %p12 = scmp.ge.s32.totalorder %s11, 4
    %s18 = sphi 0, %s30
    %s19 = sphi 0, %s26
    %s20 = sphi 0, %s18
    %s21 = sphi 0, %s19
    %s22 = sphi 0, %s20
    %s23 = sphi 0, %s21
    %s35 = sphi 0, %s37
    %s38 = sphi 0, %s35
    %s39 = sphi 0, %s38
    %s55 = sphi 0, %s39
    %s59 = sphi 0, %s59
    %s61 = sphi 0, %s59
    %s62 = sphi 0, %s61
    %s76 = sphi 0, %s62
    %s80 = sphi 0, %s80
    %s82 = sphi 0, %s80
    %s83 = sphi 0, %s82
    %s97 = sphi 0, %s83
    %s105 = sphi 0, %s107
    %s108 = sphi 0, %s105
    %s109 = sphi 0, %s108
    %s125 = sphi 0, %s109
    %s133 = sphi 0, %s135
    %s136 = sphi 0, %s133
    %s137 = sphi 0, %s136
    %s153 = sphi 0, %s137
  $region4: #{conv_block_forward.2} parent=0 // loop_header_branch
    %14 = sbr.rel (%p12) target = $region8
  $region5: #{conv_block_forward.2} parent=0 // loop_body
    %s16 = ssub.s32 %s11, 1
    %s17 = ssub.s32 %s11, 2
    %s24 = sadd.s32 1, %s19
    %p25 = scmp.ge.s32.totalorder %s24, 1
    %s26 = scalar_select %p25, 0, %s24
    %s27 = sadd.s32 1, %s18
    %s28 = scalar_select %p25, %s27, %s18
    %p29 = scmp.ge.s32.totalorder %s28, 2
    %s30 = scalar_select %p29, 0, %s28
    %s31 = ssub.s32 %s18, %s30
    %s32 = ssub.s32 %s19, %s26
    %s33 = sor.u32 %s31, %s32
    %p34 = scmp.eq.s32.totalorder %s33, 0
    %s36 = sadd.s32 %s35, 1
    %s37 = scalar_select %p34, %s35, %s36
    %p40 = pneg %p34
    %p41 = scmp.eq.s32.totalorder %s11, 1
    %p42 = por %p40, %p41
    %p43 = scmp.ne.s32.totalorder %s35, %s38
    %p44 = scmp.eq.s32.totalorder %s11, 0
    %p45 = por %p43, %p44
    %p46 = scmp.ne.s32.totalorder %s35, %s38
    %p47 = scmp.eq.s32.totalorder %s16, 1
    %p48 = por %p46, %p47
    %p49 = scmp.ne.s32.totalorder %s38, %s39
    %p50 = scmp.eq.s32.totalorder %s16, 0
    %p51 = por %p49, %p50
    %p52 = scmp.ne.s32.totalorder %s38, %s39
    %p53 = scmp.eq.s32.totalorder %s17, 1
    %p54 = por %p52, %p53
    %p56 = scmp.ne.s32.totalorder %s39, %s55
    %p57 = scmp.eq.s32.totalorder %s17, 0
    %p58 = por %p56, %p57
    %s60 = sadd.s32 %s59, 1
    %p63 = scmp.eq.s32.totalorder %s11, 1
    %p64 = scmp.ne.s32.totalorder %s59, %s61
    %p65 = scmp.eq.s32.totalorder %s11, 0
    %p66 = por %p64, %p65
    %p67 = scmp.ne.s32.totalorder %s59, %s61
    %p68 = scmp.eq.s32.totalorder %s16, 1
    %p69 = por %p67, %p68
    %p70 = scmp.ne.s32.totalorder %s61, %s62
    %p71 = scmp.eq.s32.totalorder %s16, 0
    %p72 = por %p70, %p71
    %p73 = scmp.ne.s32.totalorder %s61, %s62
    %p74 = scmp.eq.s32.totalorder %s17, 1
    %p75 = por %p73, %p74
    %p77 = scmp.ne.s32.totalorder %s62, %s76
    %p78 = scmp.eq.s32.totalorder %s17, 0
    %p79 = por %p77, %p78
    %s81 = sadd.s32 %s80, 1
    %p84 = scmp.eq.s32.totalorder %s11, 1
    %p85 = scmp.ne.s32.totalorder %s80, %s82
    %p86 = scmp.eq.s32.totalorder %s11, 0
    %p87 = por %p85, %p86
    %p88 = scmp.ne.s32.totalorder %s80, %s82
    %p89 = scmp.eq.s32.totalorder %s16, 1
    %p90 = por %p88, %p89
    %p91 = scmp.ne.s32.totalorder %s82, %s83
    %p92 = scmp.eq.s32.totalorder %s16, 0
    %p93 = por %p91, %p92
    %p94 = scmp.ne.s32.totalorder %s82, %s83
    %p95 = scmp.eq.s32.totalorder %s17, 1
    %p96 = por %p94, %p95
    %p98 = scmp.ne.s32.totalorder %s83, %s97
    %p99 = scmp.eq.s32.totalorder %s17, 0
    %p100 = por %p98, %p99
    %s101 = ssub.s32 %s18, %s30
    %s102 = ssub.s32 %s19, %s26
    %s103 = sor.u32 %s101, %s102
    %p104 = scmp.eq.s32.totalorder %s103, 0
    %s106 = sadd.s32 %s105, 1
    %s107 = scalar_select %p104, %s105, %s106
    %p110 = pneg %p104
    %p111 = scmp.eq.s32.totalorder %s11, 1
    %p112 = por %p110, %p111
    %p113 = scmp.ne.s32.totalorder %s105, %s108
    %p114 = scmp.eq.s32.totalorder %s11, 0
    %p115 = por %p113, %p114
    %p116 = scmp.ne.s32.totalorder %s105, %s108
    %p117 = scmp.eq.s32.totalorder %s16, 1
    %p118 = por %p116, %p117
    %p119 = scmp.ne.s32.totalorder %s108, %s109
    %p120 = scmp.eq.s32.totalorder %s16, 0
    %p121 = por %p119, %p120
    %p122 = scmp.ne.s32.totalorder %s108, %s109
    %p123 = scmp.eq.s32.totalorder %s17, 1
    %p124 = por %p122, %p123
    %p126 = scmp.ne.s32.totalorder %s109, %s125
    %p127 = scmp.eq.s32.totalorder %s17, 0
    %p128 = por %p126, %p127
    %s129 = sadd.s32 %s18, %s19
    %s130 = sadd.s32 %s30, %s26
    %s131 = ssub.s32 %s129, %s130
    %p132 = scmp.eq.s32.totalorder %s131, 0
    %s134 = sadd.s32 %s133, 1
    %s135 = scalar_select %p132, %s133, %s134
    %p138 = pneg %p132
    %p139 = scmp.eq.s32.totalorder %s11, 1
    %p140 = por %p138, %p139
    %p141 = scmp.ne.s32.totalorder %s133, %s136
    %p142 = scmp.eq.s32.totalorder %s11, 0
    %p143 = por %p141, %p142
    %p144 = scmp.ne.s32.totalorder %s133, %s136
    %p145 = scmp.eq.s32.totalorder %s16, 1
    %p146 = por %p144, %p145
    %p147 = scmp.ne.s32.totalorder %s136, %s137
    %p148 = scmp.eq.s32.totalorder %s16, 0
    %p149 = por %p147, %p148
    %p150 = scmp.ne.s32.totalorder %s136, %s137
    %p151 = scmp.eq.s32.totalorder %s17, 1
    %p152 = por %p150, %p151
    %p154 = scmp.ne.s32.totalorder %s137, %s153
    %p155 = scmp.eq.s32.totalorder %s17, 0
    %p156 = por %p154, %p155
    %p157 = scmp.le.s32.totalorder 1, %s11
    %p158 = scmp.lt.s32.totalorder %s11, 3
    %p159 = pnand %p157, %p158
    %p160 = pneg %p159
    // Predicated region
    $region9: #{conv_block_forward.2} parent=5 // pred_check
      _
    $region10: #{conv_block_forward.2} parent=5 // pred_check_branch
      %162 = sbr.rel (%p159) target = $region12
    $region11: #{conv_block_forward.2} parent=5 // pred_region
      %s163 = ssub.s32 %s11, 1
      // Predicated region
      $region13: #{conv_block_forward.2} parent=11 // pred_check
        %p164 = pneg %p72
      $region14: #{conv_block_forward.2} parent=11 // pred_check_branch
        %166 = sbr.rel (%p164) target = $region16
      $region15: #{conv_block_forward.2} parent=11 // pred_region
        _
      $region16: #{conv_block_forward.2} parent=11 // pred_fallthru
        _
      // Predicated region
      $region17: #{conv_block_forward.2} parent=11 // pred_check
        %p167 = pneg %p93
      $region18: #{conv_block_forward.2} parent=11 // pred_check_branch
        %169 = sbr.rel (%p167) target = $region20
      $region19: #{conv_block_forward.2} parent=11 // pred_region
        _
      $region20: #{conv_block_forward.2} parent=11 // pred_fallthru
        _
    $region12: #{conv_block_forward.2} parent=5 // pred_fallthru
      _
    %p170 = scmp.lt.s32.totalorder %s11, 2
    // Predicated region
    $region21: #{conv_block_forward.2} parent=5 // pred_check
      %p171 = pneg %p170
    $region22: #{conv_block_forward.2} parent=5 // pred_check_branch
      %173 = sbr.rel (%p171) target = $region24
    $region23: #{conv_block_forward.2} parent=5 // pred_region
      // Predicated region
      $region25: #{conv_block_forward.2} parent=23 // pred_check
        %p174 = pneg %p45
      $region26: #{conv_block_forward.2} parent=23 // pred_check_branch
        %176 = sbr.rel (%p174) target = $region28
      $region27: #{conv_block_forward.2} parent=23 // pred_region
        %p177 = scmp.lt.s32.totalorder %s18, 1
        %s178 = scalar_select %p177, %s18, 1
        %p179 = scmp.lt.s32.totalorder %s19, 0
        %s180 = scalar_select %p179, %s19, 0
        %s181 = smul.addr %s180, 54
        %s182 = smul.addr %s178, 54
        %s183 = sadd.s32 %s181, %s182
        %s184 = smul.addr %s183, 4
        %s185 = scalar_lea.vmem %s0, %s184
      $region28: #{conv_block_forward.2} parent=23 // pred_fallthru
        _
    $region24: #{conv_block_forward.2} parent=5 // pred_fallthru
      _
    %p186 = scmp.le.s32.totalorder 1, %s11
    %p187 = scmp.lt.s32.totalorder %s11, 3
    %p188 = pnand %p186, %p187
    %p189 = pneg %p188
    // Predicated region
    $region29: #{conv_block_forward.2} parent=5 // pred_check
      _
    $region30: #{conv_block_forward.2} parent=5 // pred_check_branch
      %191 = sbr.rel (%p188) target = $region32
    $region31: #{conv_block_forward.2} parent=5 // pred_region
      %s192 = ssub.s32 %s11, 1
      %p193 = scmp.lt.s32.totalorder %s20, 1
      %s194 = scalar_select %p193, %s20, 1
      %p195 = scmp.lt.s32.totalorder %s21, 0
      %s196 = scalar_select %p195, %s21, 0
      %s197 = smul.addr %s196, 54
      %s198 = smul.addr %s194, 54
      %s199 = sadd.s32 %s197, %s198
      %s200 = smul.addr %s199, 4
      %s201 = scalar_lea.vmem %s0, %s200
      %p202 = pneg %p51
      %p203 = pneg %p48
      %p204 = pneg %p72
      %p205 = pneg %p69
      %p206 = pneg %p93
      %p207 = pneg %p90
      %p208 = pneg %p121
      %p209 = pneg %p118
      %s210 = smul.u32 16, %s21
      %p211 = scmp.lt.s32.totalorder %s20, 1
      %s212 = scalar_select %p211, %s20, 1
      %p213 = scmp.lt.s32.totalorder %s210, 15
      %s214 = scalar_select %p213, %s210, 15
      %s215 = smul.addr %s214, 2
      %s216 = smul.addr %s212, 32
      %s217 = sadd.s32 %s215, %s216
      %s218 = smul.addr %s217, 4
      %s219 = scalar_lea.vmem %s3, %s218
      %p220 = pneg %p149
      %p221 = pneg %p146
      %s222 = sadd.s32 %s20, %s21
      %p223 = scmp.lt.s32.totalorder %s222, 1
      %s224 = scalar_select %p223, %s222, 1
      %s225 = smul.addr %s224, 2
      %s226 = scalar_lea.vmem %s4, %s225
      %p227 = scmp.lt.s32.totalorder %s20, 1
      %s228 = scalar_select %p227, %s20, 1
      %p229 = scmp.lt.s32.totalorder %s21, 0
      %s230 = scalar_select %p229, %s21, 0
      %s231 = smul.addr %s230, 54
      %s232 = smul.addr %s228, 54
      %s233 = sadd.s32 %s231, %s232
      %s234 = smul.addr %s233, 4
      %s235 = scalar_lea.vmem %s0, %s234
      %s236 = smul.u32 16, %s21
      %p237 = scmp.lt.s32.totalorder %s20, 1
      %s238 = scalar_select %p237, %s20, 1
      %p239 = scmp.lt.s32.totalorder %s236, 15
      %s240 = scalar_select %p239, %s236, 15
      %s241 = smul.addr %s240, 2
      %s242 = smul.addr %s238, 32
      %s243 = sadd.s32 %s241, %s242
      %s244 = smul.addr %s243, 4
      %s245 = scalar_lea.vmem %s3, %s244
      %s246 = smul.u32 16, %s21
      %s247 = sadd.s32 %s20, %s21
      %p248 = scmp.lt.s32.totalorder %s247, 1
      %s249 = scalar_select %p248, %s247, 1
      %s250 = smul.addr %s249, 2
      %s251 = scalar_lea.vmem %s4, %s250
      %s252 = sadd.s32 %s20, %s21
      %v254 = vld [vmem:[%s235] sm:$0xf]
      %v255 = vld [vmem:[%s235 + $0x4] sm:$0xf]
      %v256 = vld [vmem:[%s235 + $0xc] sm:$0xf]
      %v257 = vld [vmem:[%s235 + $0x10] sm:$0xf]
      %v258 = vld [vmem:[%s235 + $0x18] sm:$0xf]
      %v259 = vld [vmem:[%s235 + $0x1c] sm:$0xf]
      %v260 = vld [vmem:[%s235 + $0x24] sm:$0xf]
      %v261 = vld [vmem:[%s235 + $0x28] sm:$0xf]
      %v262 = vld [vmem:[%s235 + $0x30] sm:$0xf]
      %v263 = vld [vmem:[%s235 + $0x34] sm:$0xf]
      %v264 = vld [vmem:[%s235 + $0x3c] sm:$0xf]
      %v265 = vld [vmem:[%s235 + $0x40] sm:$0xf]
      %v266 = vld [vmem:[%s235 + $0x48] sm:$0xf]
      %v267 = vld [vmem:[%s235 + $0x4c] sm:$0xf]
      %v268 = vld [vmem:[%s235 + $0x54] sm:$0xf]
      %v269 = vld [vmem:[%s235 + $0x58] sm:$0xf]
      %v270 = vld [vmem:[%s235 + $0x60] sm:$0xf]
      %v271 = vld [vmem:[%s235 + $0x64] sm:$0xf]
      %v272 = vld [vmem:[%s235 + $0x6c] sm:$0xf]
      %v273 = vld [vmem:[%s235 + $0x70] sm:$0xf]
      %v274 = vld [vmem:[%s235 + $0x78] sm:$0xf]
      %v275 = vld [vmem:[%s235 + $0x7c] sm:$0xf]
      %v276 = vld [vmem:[%s235 + $0x84] sm:$0xf]
      %v277 = vld [vmem:[%s235 + $0x88] sm:$0xf]
      %v278 = vld [vmem:[%s235 + $0x90] sm:$0xf]
      %v279 = vld [vmem:[%s235 + $0x94] sm:$0xf]
      %v280 = vld [vmem:[%s235 + $0x9c] sm:$0xf]
      %v281 = vld [vmem:[%s235 + $0xa0] sm:$0xf]
      %v282 = vld [vmem:[%s235 + $0xa8] sm:$0xf]
      %v283 = vld [vmem:[%s235 + $0xac] sm:$0xf]
      %v284 = vld [vmem:[%s235 + $0xb4] sm:$0xf]
      %v285 = vld [vmem:[%s235 + $0xb8] sm:$0xf]
      %v286 = vld [vmem:[%s235 + $0xc0] sm:$0xf]
      %v287 = vld [vmem:[%s235 + $0xc4] sm:$0xf]
      %v288 = vld [vmem:[%s235 + $0xcc] sm:$0xf]
      %v289 = vld [vmem:[%s235 + $0xd0] sm:$0xf]
      %v322 = vunpack.c.l.b16 %v254
      %v323 = vunpack.c.l.b16 %v255
      %v324 = vunpack.c.l.b16 %v256
      %v325 = vunpack.c.l.b16 %v257
      %v326 = vunpack.c.l.b16 %v258
      %v327 = vunpack.c.l.b16 %v259
      %v328 = vunpack.c.l.b16 %v260
      %v329 = vunpack.c.l.b16 %v261
      %v330 = vunpack.c.l.b16 %v262
      %v331 = vunpack.c.l.b16 %v263
      %v332 = vunpack.c.l.b16 %v264
      %v333 = vunpack.c.l.b16 %v265
      %v334 = vunpack.c.l.b16 %v266
      %v335 = vunpack.c.l.b16 %v267
      %v336 = vunpack.c.l.b16 %v268
      %v337 = vunpack.c.l.b16 %v269
      %v338 = vunpack.c.l.b16 %v270
      %v339 = vunpack.c.l.b16 %v271
      %v340 = vunpack.c.l.b16 %v272
      %v341 = vunpack.c.l.b16 %v273
      %v342 = vunpack.c.l.b16 %v274
      %v343 = vunpack.c.l.b16 %v275
      %v344 = vunpack.c.l.b16 %v276
      %v345 = vunpack.c.l.b16 %v277
      %v346 = vunpack.c.l.b16 %v278
      %v347 = vunpack.c.l.b16 %v279
      %v348 = vunpack.c.l.b16 %v280
      %v349 = vunpack.c.l.b16 %v281
      %v350 = vunpack.c.l.b16 %v282
      %v351 = vunpack.c.l.b16 %v283
      %v352 = vunpack.c.l.b16 %v284
      %v353 = vunpack.c.l.b16 %v285
      %v354 = vpack.c.b16 %v323, %v322
      %v355 = vpack.c.b16 %v325, %v324
      %v356 = vpack.c.b16 %v327, %v326
      %v357 = vpack.c.b16 %v329, %v328
      %v358 = vpack.c.b16 %v331, %v330
      %v359 = vpack.c.b16 %v333, %v332
      %v360 = vpack.c.b16 %v335, %v334
      %v361 = vpack.c.b16 %v337, %v336
      %v362 = vpack.c.b16 %v339, %v338
      %v363 = vpack.c.b16 %v341, %v340
      %v364 = vpack.c.b16 %v343, %v342
      %v365 = vpack.c.b16 %v345, %v344
      %v366 = vpack.c.b16 %v347, %v346
      %v367 = vpack.c.b16 %v349, %v348
      %v368 = vpack.c.b16 %v351, %v350
      %v369 = vpack.c.b16 %v353, %v352
      %v388 = vunpack.c.l.b16 %v286
      %v389 = vunpack.c.l.b16 %v287
      %v390 = vpack.c.b16 %v389, %v388
      %v394 = vunpack.c.l.b16 %v288
      %v395 = vunpack.c.l.b16 %v289
      %v396 = vpack.c.b16 %v395, %v394
      %v398 = vld [vmem:[%s1] sm:$0xf]
      %v399 = vld [vmem:[%s1 + $0x4] sm:$0xf]
      %v400 = vld [vmem:[%s1 + $0x8] sm:$0xf]
      %v401 = vld [vmem:[%s1 + $0xc] sm:$0xf]
      %v402 = vld [vmem:[%s1 + $0x10] sm:$0xf]
      %v403 = vld [vmem:[%s1 + $0x14] sm:$0xf]
      %v404 = vld [vmem:[%s1 + $0x18] sm:$0xf]
      %v405 = vld [vmem:[%s1 + $0x1c] sm:$0xf]
      %v406 = vld [vmem:[%s1 + $0x20] sm:$0xf]
      %v407 = vld [vmem:[%s1 + $0x24] sm:$0xf]
      %v408 = vld [vmem:[%s1 + $0x28] sm:$0xf]
      %v409 = vld [vmem:[%s1 + $0x2c] sm:$0xf]
      %v410 = vld [vmem:[%s1 + $0x30] sm:$0xf]
      %v411 = vld [vmem:[%s1 + $0x34] sm:$0xf]
      %v412 = vld [vmem:[%s1 + $0x38] sm:$0xf]
      %v413 = vld [vmem:[%s1 + $0x3c] sm:$0xf]
      %v414 = vld [vmem:[%s1 + $0x40] sm:$0xf]
      %v415 = vld [vmem:[%s1 + $0x44] sm:$0xf]
      %v416 = vld [vmem:[%s1 + $0x48] sm:$0xf]
      %v417 = vld [vmem:[%s1 + $0x4c] sm:$0xf]
      %v418 = vld [vmem:[%s1 + $0x50] sm:$0xf]
      %v419 = vld [vmem:[%s1 + $0x54] sm:$0xf]
      %v420 = vld [vmem:[%s1 + $0x58] sm:$0xf]
      %v421 = vld [vmem:[%s1 + $0x5c] sm:$0xf]
      %v422 = vld [vmem:[%s1 + $0x60] sm:$0xf]
      %v423 = vld [vmem:[%s1 + $0x64] sm:$0xf]
      %v424 = vld [vmem:[%s1 + $0x68] sm:$0xf]
      %v425 = vld [vmem:[%s1 + $0x6c] sm:$0xf]
      %v426 = vld [vmem:[%s1 + $0x70] sm:$0xf]
      %v427 = vld [vmem:[%s1 + $0x74] sm:$0xf]
      %v428 = vld [vmem:[%s1 + $0x78] sm:$0xf]
      %v429 = vld [vmem:[%s1 + $0x7c] sm:$0xf]
      %v430 = vld [vmem:[%s1 + $0x80] sm:$0xf]
      %v431 = vld [vmem:[%s1 + $0x84] sm:$0xf]
      %v432 = vld [vmem:[%s1 + $0x88] sm:$0xf]
      %v433 = vld [vmem:[%s1 + $0x8c] sm:$0xf]
      %v434 = vld [vmem:[%s1 + $0x90] sm:$0xf]
      %v435 = vld [vmem:[%s1 + $0x94] sm:$0xf]
      %v436 = vld [vmem:[%s1 + $0x98] sm:$0xf]
      %v437 = vld [vmem:[%s1 + $0x9c] sm:$0xf]
      %v438 = vld [vmem:[%s1 + $0xa0] sm:$0xf]
      %v439 = vld [vmem:[%s1 + $0xa4] sm:$0xf]
      %v440 = vld [vmem:[%s1 + $0xa8] sm:$0xf]
      %v441 = vld [vmem:[%s1 + $0xac] sm:$0xf]
      %v442 = vld [vmem:[%s1 + $0xb0] sm:$0xf]
      %v443 = vld [vmem:[%s1 + $0xb4] sm:$0xf]
      %v444 = vld [vmem:[%s1 + $0xb8] sm:$0xf]
      %v445 = vld [vmem:[%s1 + $0xbc] sm:$0xf]
      %v446 = vld [vmem:[%s235 + $0x8] sm:$0x1]
      %v447 = vld [vmem:[%s235 + $0x14] sm:$0x1]
      %v448 = vld [vmem:[%s235 + $0x20] sm:$0x1]
      %v449 = vld [vmem:[%s235 + $0x2c] sm:$0x1]
      %v450 = vld [vmem:[%s235 + $0x38] sm:$0x1]
      %v451 = vld [vmem:[%s235 + $0x44] sm:$0x1]
      %v452 = vld [vmem:[%s235 + $0x50] sm:$0x1]
      %v453 = vld [vmem:[%s235 + $0x5c] sm:$0x1]
      %v454 = vld [vmem:[%s235 + $0x68] sm:$0x1]
      %v455 = vld [vmem:[%s235 + $0x74] sm:$0x1]
      %v456 = vld [vmem:[%s235 + $0x80] sm:$0x1]
      %v457 = vld [vmem:[%s235 + $0x8c] sm:$0x1]
      %v458 = vld [vmem:[%s235 + $0x98] sm:$0x1]
      %v459 = vld [vmem:[%s235 + $0xa4] sm:$0x1]
      %v460 = vld [vmem:[%s235 + $0xb0] sm:$0x1]
      %v461 = vld [vmem:[%s235 + $0xbc] sm:$0x1]
      %v462 = vld [vmem:[%s235 + $0xc8] sm:$0x1]
      %v463 = vld [vmem:[%s235 + $0xd4] sm:$0x1]
      %vm464 = vsmask.f32 3328
      %vm465 = vsmask.f32 7440
      %vm466 = vmor %vm464, %vm465
      %v468 = vshrl.u32 %v254, 16
      %v470 = vrot.slane %v468, 4
      %v471 = vshll.u32 %v254, 16
      %v473 = vrot.slane %v471, 5
      %v474 = vor.u32 %v470, %v473
      %v475 = vrot.slane %v474, 4
      %v477 = vshll.u32 %v255, 16
      %v479 = vrot.slane %v477, 5
      %v480 = vsel %vm466, %v475, %v479
      %v481 = vshrl.u32 %v255, 16
      %v483 = vrot.slane %v481, 4
      %v484 = vor.u32 %v483, %v479
      %v485 = vrot.slane %v484, 4
      %v487 = vshll.u32 %v446, 16
      %v489 = vrot.slane %v487, 5
      %v490 = vsel %vm466, %v485, %v489
      %v492 = vshrl.u32 %v256, 16
      %v494 = vrot.slane %v492, 4
      %v495 = vshll.u32 %v256, 16
      %v497 = vrot.slane %v495, 5
      %v498 = vor.u32 %v494, %v497
      %v499 = vrot.slane %v498, 4
      %v501 = vshll.u32 %v257, 16
      %v503 = vrot.slane %v501, 5
      %v504 = vsel %vm466, %v499, %v503
      %v505 = vshrl.u32 %v257, 16
      %v507 = vrot.slane %v505, 4
      %v508 = vor.u32 %v507, %v503
      %v509 = vrot.slane %v508, 4
      %v511 = vshll.u32 %v447, 16
      %v513 = vrot.slane %v511, 5
      %v514 = vsel %vm466, %v509, %v513
      %v516 = vshrl.u32 %v258, 16
      %v518 = vrot.slane %v516, 4
      %v519 = vshll.u32 %v258, 16
      %v521 = vrot.slane %v519, 5
      %v522 = vor.u32 %v518, %v521
      %v523 = vrot.slane %v522, 4
      %v525 = vshll.u32 %v259, 16
      %v527 = vrot.slane %v525, 5
      %v528 = vsel %vm466, %v523, %v527
      %v529 = vshrl.u32 %v259, 16
      %v531 = vrot.slane %v529, 4
      %v532 = vor.u32 %v531, %v527
      %v533 = vrot.slane %v532, 4
      %v535 = vshll.u32 %v448, 16
      %v537 = vrot.slane %v535, 5
      %v538 = vsel %vm466, %v533, %v537
      %v540 = vshrl.u32 %v260, 16
      %v542 = vrot.slane %v540, 4
      %v543 = vshll.u32 %v260, 16
      %v545 = vrot.slane %v543, 5
      %v546 = vor.u32 %v542, %v545
      %v547 = vrot.slane %v546, 4
      %v549 = vshll.u32 %v261, 16
      %v551 = vrot.slane %v549, 5
      %v552 = vsel %vm466, %v547, %v551
      %v553 = vshrl.u32 %v261, 16
      %v555 = vrot.slane %v553, 4
      %v556 = vor.u32 %v555, %v551
      %v557 = vrot.slane %v556, 4
      %v559 = vshll.u32 %v449, 16
      %v561 = vrot.slane %v559, 5
      %v562 = vsel %vm466, %v557, %v561
      %v564 = vshrl.u32 %v262, 16
      %v566 = vrot.slane %v564, 4
      %v567 = vshll.u32 %v262, 16
      %v569 = vrot.slane %v567, 5
      %v570 = vor.u32 %v566, %v569
      %v571 = vrot.slane %v570, 4
      %v573 = vshll.u32 %v263, 16
      %v575 = vrot.slane %v573, 5
      %v576 = vsel %vm466, %v571, %v575
      %v577 = vshrl.u32 %v263, 16
      %v579 = vrot.slane %v577, 4
      %v580 = vor.u32 %v579, %v575
      %v581 = vrot.slane %v580, 4
      %v583 = vshll.u32 %v450, 16
      %v585 = vrot.slane %v583, 5
      %v586 = vsel %vm466, %v581, %v585
      %v588 = vshrl.u32 %v264, 16
      %v590 = vrot.slane %v588, 4
      %v591 = vshll.u32 %v264, 16
      %v593 = vrot.slane %v591, 5
      %v594 = vor.u32 %v590, %v593
      %v595 = vrot.slane %v594, 4
      %v597 = vshll.u32 %v265, 16
      %v599 = vrot.slane %v597, 5
      %v600 = vsel %vm466, %v595, %v599
      %v601 = vshrl.u32 %v265, 16
      %v603 = vrot.slane %v601, 4
      %v604 = vor.u32 %v603, %v599
      %v605 = vrot.slane %v604, 4
      %v607 = vshll.u32 %v451, 16
      %v609 = vrot.slane %v607, 5
      %v610 = vsel %vm466, %v605, %v609
      %v612 = vshrl.u32 %v266, 16
      %v614 = vrot.slane %v612, 4
      %v615 = vshll.u32 %v266, 16
      %v617 = vrot.slane %v615, 5
      %v618 = vor.u32 %v614, %v617
      %v619 = vrot.slane %v618, 4
      %v621 = vshll.u32 %v267, 16
      %v623 = vrot.slane %v621, 5
      %v624 = vsel %vm466, %v619, %v623
      %v625 = vshrl.u32 %v267, 16
      %v627 = vrot.slane %v625, 4
      %v628 = vor.u32 %v627, %v623
      %v629 = vrot.slane %v628, 4
      %v631 = vshll.u32 %v452, 16
      %v633 = vrot.slane %v631, 5
      %v634 = vsel %vm466, %v629, %v633
      %v636 = vshrl.u32 %v268, 16
      %v638 = vrot.slane %v636, 4
      %v639 = vshll.u32 %v268, 16
      %v641 = vrot.slane %v639, 5
      %v642 = vor.u32 %v638, %v641
      %v643 = vrot.slane %v642, 4
      %v645 = vshll.u32 %v269, 16
      %v647 = vrot.slane %v645, 5
      %v648 = vsel %vm466, %v643, %v647
      %v649 = vshrl.u32 %v269, 16
      %v651 = vrot.slane %v649, 4
      %v652 = vor.u32 %v651, %v647
      %v653 = vrot.slane %v652, 4
      %v655 = vshll.u32 %v453, 16
      %v657 = vrot.slane %v655, 5
      %v658 = vsel %vm466, %v653, %v657
      %v660 = vshrl.u32 %v270, 16
      %v662 = vrot.slane %v660, 4
      %v663 = vshll.u32 %v270, 16
      %v665 = vrot.slane %v663, 5
      %v666 = vor.u32 %v662, %v665
      %v667 = vrot.slane %v666, 4
      %v669 = vshll.u32 %v271, 16
      %v671 = vrot.slane %v669, 5
      %v672 = vsel %vm466, %v667, %v671
      %v673 = vshrl.u32 %v271, 16
      %v675 = vrot.slane %v673, 4
      %v676 = vor.u32 %v675, %v671
      %v677 = vrot.slane %v676, 4
      %v679 = vshll.u32 %v454, 16
      %v681 = vrot.slane %v679, 5
      %v682 = vsel %vm466, %v677, %v681
      %v684 = vshrl.u32 %v272, 16
      %v686 = vrot.slane %v684, 4
      %v687 = vshll.u32 %v272, 16
      %v689 = vrot.slane %v687, 5
      %v690 = vor.u32 %v686, %v689
      %v691 = vrot.slane %v690, 4
      %v693 = vshll.u32 %v273, 16
      %v695 = vrot.slane %v693, 5
      %v696 = vsel %vm466, %v691, %v695
      %v697 = vshrl.u32 %v273, 16
      %v699 = vrot.slane %v697, 4
      %v700 = vor.u32 %v699, %v695
      %v701 = vrot.slane %v700, 4
      %v703 = vshll.u32 %v455, 16
      %v705 = vrot.slane %v703, 5
      %v706 = vsel %vm466, %v701, %v705
      %v708 = vshrl.u32 %v274, 16
      %v710 = vrot.slane %v708, 4
      %v711 = vshll.u32 %v274, 16
      %v713 = vrot.slane %v711, 5
      %v714 = vor.u32 %v710, %v713
      %v715 = vrot.slane %v714, 4
      %v717 = vshll.u32 %v275, 16
      %v719 = vrot.slane %v717, 5
      %v720 = vsel %vm466, %v715, %v719
      %v721 = vshrl.u32 %v275, 16
      %v723 = vrot.slane %v721, 4
      %v724 = vor.u32 %v723, %v719
      %v725 = vrot.slane %v724, 4
      %v727 = vshll.u32 %v456, 16
      %v729 = vrot.slane %v727, 5
      %v730 = vsel %vm466, %v725, %v729
      %v732 = vshrl.u32 %v276, 16
      %v734 = vrot.slane %v732, 4
      %v735 = vshll.u32 %v276, 16
      %v737 = vrot.slane %v735, 5
      %v738 = vor.u32 %v734, %v737
      %v739 = vrot.slane %v738, 4
      %v741 = vshll.u32 %v277, 16
      %v743 = vrot.slane %v741, 5
      %v744 = vsel %vm466, %v739, %v743
      %v745 = vshrl.u32 %v277, 16
      %v747 = vrot.slane %v745, 4
      %v748 = vor.u32 %v747, %v743
      %v749 = vrot.slane %v748, 4
      %v751 = vshll.u32 %v457, 16
      %v753 = vrot.slane %v751, 5
      %v754 = vsel %vm466, %v749, %v753
      %v756 = vshrl.u32 %v278, 16
      %v758 = vrot.slane %v756, 4
      %v759 = vshll.u32 %v278, 16
      %v761 = vrot.slane %v759, 5
      %v762 = vor.u32 %v758, %v761
      %v763 = vrot.slane %v762, 4
      %v765 = vshll.u32 %v279, 16
      %v767 = vrot.slane %v765, 5
      %v768 = vsel %vm466, %v763, %v767
      %v769 = vshrl.u32 %v279, 16
      %v771 = vrot.slane %v769, 4
      %v772 = vor.u32 %v771, %v767
      %v773 = vrot.slane %v772, 4
      %v775 = vshll.u32 %v458, 16
      %v777 = vrot.slane %v775, 5
      %v778 = vsel %vm466, %v773, %v777
      %v780 = vshrl.u32 %v280, 16
      %v782 = vrot.slane %v780, 4
      %v783 = vshll.u32 %v280, 16
      %v785 = vrot.slane %v783, 5
      %v786 = vor.u32 %v782, %v785
      %v787 = vrot.slane %v786, 4
      %v789 = vshll.u32 %v281, 16
      %v791 = vrot.slane %v789, 5
      %v792 = vsel %vm466, %v787, %v791
      %v793 = vshrl.u32 %v281, 16
      %v795 = vrot.slane %v793, 4
      %v796 = vor.u32 %v795, %v791
      %v797 = vrot.slane %v796, 4
      %v799 = vshll.u32 %v459, 16
      %v801 = vrot.slane %v799, 5
      %v802 = vsel %vm466, %v797, %v801
      %v804 = vshrl.u32 %v282, 16
      %v806 = vrot.slane %v804, 4
      %v807 = vshll.u32 %v282, 16
      %v809 = vrot.slane %v807, 5
      %v810 = vor.u32 %v806, %v809
      %v811 = vrot.slane %v810, 4
      %v813 = vshll.u32 %v283, 16
      %v815 = vrot.slane %v813, 5
      %v816 = vsel %vm466, %v811, %v815
      %v817 = vshrl.u32 %v283, 16
      %v819 = vrot.slane %v817, 4
      %v820 = vor.u32 %v819, %v815
      %v821 = vrot.slane %v820, 4
      %v823 = vshll.u32 %v460, 16
      %v825 = vrot.slane %v823, 5
      %v826 = vsel %vm466, %v821, %v825
      %v828 = vshrl.u32 %v284, 16
      %v830 = vrot.slane %v828, 4
      %v831 = vshll.u32 %v284, 16
      %v833 = vrot.slane %v831, 5
      %v834 = vor.u32 %v830, %v833
      %v835 = vrot.slane %v834, 4
      %v837 = vshll.u32 %v285, 16
      %v839 = vrot.slane %v837, 5
      %v840 = vsel %vm466, %v835, %v839
      %v841 = vshrl.u32 %v285, 16
      %v843 = vrot.slane %v841, 4
      %v844 = vor.u32 %v843, %v839
      %v845 = vrot.slane %v844, 4
      %v847 = vshll.u32 %v461, 16
      %v849 = vrot.slane %v847, 5
      %v850 = vsel %vm466, %v845, %v849
      %v852 = vshrl.u32 %v286, 16
      %v854 = vrot.slane %v852, 4
      %v855 = vshll.u32 %v286, 16
      %v857 = vrot.slane %v855, 5
      %v858 = vor.u32 %v854, %v857
      %v859 = vrot.slane %v858, 4
      %v861 = vshll.u32 %v287, 16
      %v863 = vrot.slane %v861, 5
      %v864 = vsel %vm466, %v859, %v863
      %v865 = vshrl.u32 %v287, 16
      %v867 = vrot.slane %v865, 4
      %v868 = vor.u32 %v867, %v863
      %v869 = vrot.slane %v868, 4
      %v871 = vshll.u32 %v462, 16
      %v873 = vrot.slane %v871, 5
      %v874 = vsel %vm466, %v869, %v873
      %v876 = vshrl.u32 %v288, 16
      %v878 = vrot.slane %v876, 4
      %v879 = vshll.u32 %v288, 16
      %v881 = vrot.slane %v879, 5
      %v882 = vor.u32 %v878, %v881
      %v883 = vrot.slane %v882, 4
      %v885 = vshll.u32 %v289, 16
      %v887 = vrot.slane %v885, 5
      %v888 = vsel %vm466, %v883, %v887
      %v889 = vshrl.u32 %v289, 16
      %v891 = vrot.slane %v889, 4
      %v892 = vor.u32 %v891, %v887
      %v893 = vrot.slane %v892, 4
      %v895 = vshll.u32 %v463, 16
      %v897 = vrot.slane %v895, 5
      %v898 = vsel %vm466, %v893, %v897
      %v899 = vunpack.c.l.b16 %v480
      %v900 = vunpack.c.l.b16 %v490
      %v901 = vunpack.c.l.b16 %v504
      %v902 = vunpack.c.l.b16 %v514
      %v903 = vunpack.c.l.b16 %v528
      %v904 = vunpack.c.l.b16 %v538
      %v905 = vunpack.c.l.b16 %v552
      %v906 = vunpack.c.l.b16 %v562
      %v907 = vunpack.c.l.b16 %v576
      %v908 = vunpack.c.l.b16 %v586
      %v909 = vunpack.c.l.b16 %v600
      %v910 = vunpack.c.l.b16 %v610
      %v911 = vunpack.c.l.b16 %v624
      %v912 = vunpack.c.l.b16 %v634
      %v913 = vunpack.c.l.b16 %v648
      %v914 = vunpack.c.l.b16 %v658
      %v915 = vunpack.c.l.b16 %v672
      %v916 = vunpack.c.l.b16 %v682
      %v917 = vunpack.c.l.b16 %v696
      %v918 = vunpack.c.l.b16 %v706
      %v919 = vunpack.c.l.b16 %v720
      %v920 = vunpack.c.l.b16 %v730
      %v921 = vunpack.c.l.b16 %v744
      %v922 = vunpack.c.l.b16 %v754
      %v923 = vunpack.c.l.b16 %v768
      %v924 = vunpack.c.l.b16 %v778
      %v925 = vunpack.c.l.b16 %v792
      %v926 = vunpack.c.l.b16 %v802
      %v927 = vunpack.c.l.b16 %v816
      %v928 = vunpack.c.l.b16 %v826
      %v929 = vunpack.c.l.b16 %v840
      %v930 = vunpack.c.l.b16 %v850
      %v931 = vpack.c.b16 %v900, %v899
      %v932 = vpack.c.b16 %v902, %v901
      %v933 = vpack.c.b16 %v904, %v903
      %v934 = vpack.c.b16 %v906, %v905
      %v935 = vpack.c.b16 %v908, %v907
      %v936 = vpack.c.b16 %v910, %v909
      %v937 = vpack.c.b16 %v912, %v911
      %v938 = vpack.c.b16 %v914, %v913
      %v939 = vpack.c.b16 %v916, %v915
      %v940 = vpack.c.b16 %v918, %v917
      %v941 = vpack.c.b16 %v920, %v919
      %v942 = vpack.c.b16 %v922, %v921
      %v943 = vpack.c.b16 %v924, %v923
      %v944 = vpack.c.b16 %v926, %v925
      %v945 = vpack.c.b16 %v928, %v927
      %v946 = vpack.c.b16 %v930, %v929
      %v963 = vunpack.c.l.b16 %v864
      %v964 = vunpack.c.l.b16 %v874
      %v965 = vpack.c.b16 %v964, %v963
      %v967 = vunpack.c.l.b16 %v888
      %v968 = vunpack.c.l.b16 %v898
      %v969 = vpack.c.b16 %v968, %v967
      %s971 = scalar_lea.vmem %s1, 192
      %v972 = vld [vmem:[%s971] sm:$0xf]
      %v973 = vld [vmem:[%s971 + $0x4] sm:$0xf]
      %v974 = vld [vmem:[%s971 + $0x8] sm:$0xf]
      %v975 = vld [vmem:[%s971 + $0xc] sm:$0xf]
      %v976 = vld [vmem:[%s971 + $0x10] sm:$0xf]
      %v977 = vld [vmem:[%s971 + $0x14] sm:$0xf]
      %v978 = vld [vmem:[%s971 + $0x18] sm:$0xf]
      %v979 = vld [vmem:[%s971 + $0x1c] sm:$0xf]
      %v980 = vld [vmem:[%s971 + $0x20] sm:$0xf]
      %v981 = vld [vmem:[%s971 + $0x24] sm:$0xf]
      %v982 = vld [vmem:[%s971 + $0x28] sm:$0xf]
      %v983 = vld [vmem:[%s971 + $0x2c] sm:$0xf]
      %v984 = vld [vmem:[%s971 + $0x30] sm:$0xf]
      %v985 = vld [vmem:[%s971 + $0x34] sm:$0xf]
      %v986 = vld [vmem:[%s971 + $0x38] sm:$0xf]
      %v987 = vld [vmem:[%s971 + $0x3c] sm:$0xf]
      %v988 = vld [vmem:[%s971 + $0x40] sm:$0xf]
      %v989 = vld [vmem:[%s971 + $0x44] sm:$0xf]
      %v990 = vld [vmem:[%s971 + $0x48] sm:$0xf]
      %v991 = vld [vmem:[%s971 + $0x4c] sm:$0xf]
      %v992 = vld [vmem:[%s971 + $0x50] sm:$0xf]
      %v993 = vld [vmem:[%s971 + $0x54] sm:$0xf]
      %v994 = vld [vmem:[%s971 + $0x58] sm:$0xf]
      %v995 = vld [vmem:[%s971 + $0x5c] sm:$0xf]
      %v996 = vld [vmem:[%s971 + $0x60] sm:$0xf]
      %v997 = vld [vmem:[%s971 + $0x64] sm:$0xf]
      %v998 = vld [vmem:[%s971 + $0x68] sm:$0xf]
      %v999 = vld [vmem:[%s971 + $0x6c] sm:$0xf]
      %v1000 = vld [vmem:[%s971 + $0x70] sm:$0xf]
      %v1001 = vld [vmem:[%s971 + $0x74] sm:$0xf]
      %v1002 = vld [vmem:[%s971 + $0x78] sm:$0xf]
      %v1003 = vld [vmem:[%s971 + $0x7c] sm:$0xf]
      %v1004 = vld [vmem:[%s971 + $0x80] sm:$0xf]
      %v1005 = vld [vmem:[%s971 + $0x84] sm:$0xf]
      %v1006 = vld [vmem:[%s971 + $0x88] sm:$0xf]
      %v1007 = vld [vmem:[%s971 + $0x8c] sm:$0xf]
      %v1008 = vld [vmem:[%s971 + $0x90] sm:$0xf]
      %v1009 = vld [vmem:[%s971 + $0x94] sm:$0xf]
      %v1010 = vld [vmem:[%s971 + $0x98] sm:$0xf]
      %v1011 = vld [vmem:[%s971 + $0x9c] sm:$0xf]
      %v1012 = vld [vmem:[%s971 + $0xa0] sm:$0xf]
      %v1013 = vld [vmem:[%s971 + $0xa4] sm:$0xf]
      %v1014 = vld [vmem:[%s971 + $0xa8] sm:$0xf]
      %v1015 = vld [vmem:[%s971 + $0xac] sm:$0xf]
      %v1016 = vld [vmem:[%s971 + $0xb0] sm:$0xf]
      %v1017 = vld [vmem:[%s971 + $0xb4] sm:$0xf]
      %v1018 = vld [vmem:[%s971 + $0xb8] sm:$0xf]
      %v1019 = vld [vmem:[%s971 + $0xbc] sm:$0xf]
      %v1068 = vunpack.c.l.b16 %v972
      %v1069 = vunpack.c.l.b16 %v973
      %v1070 = vunpack.c.l.b16 %v974
      %v1071 = vunpack.c.l.b16 %v975
      %v1072 = vunpack.c.l.b16 %v976
      %v1073 = vunpack.c.l.b16 %v977
      %v1074 = vunpack.c.l.b16 %v978
      %v1075 = vunpack.c.l.b16 %v979
      %v1076 = vunpack.c.l.b16 %v980
      %v1077 = vunpack.c.l.b16 %v981
      %v1078 = vunpack.c.l.b16 %v982
      %v1079 = vunpack.c.l.b16 %v983
      %v1080 = vunpack.c.l.b16 %v984
      %v1081 = vunpack.c.l.b16 %v985
      %v1082 = vunpack.c.l.b16 %v986
      %v1083 = vunpack.c.l.b16 %v987
      %v1084 = vunpack.c.l.b16 %v988
      %v1085 = vunpack.c.l.b16 %v989
      %v1086 = vunpack.c.l.b16 %v990
      %v1087 = vunpack.c.l.b16 %v991
      %v1088 = vunpack.c.l.b16 %v992
      %v1089 = vunpack.c.l.b16 %v993
      %v1090 = vunpack.c.l.b16 %v994
      %v1091 = vunpack.c.l.b16 %v995
      %v1092 = vunpack.c.l.b16 %v996
      %v1093 = vunpack.c.l.b16 %v997
      %v1094 = vunpack.c.l.b16 %v998
      %v1095 = vunpack.c.l.b16 %v999
      %v1096 = vunpack.c.l.b16 %v1000
      %v1097 = vunpack.c.l.b16 %v1001
      %v1098 = vunpack.c.l.b16 %v1002
      %v1099 = vunpack.c.l.b16 %v1003
      %v1100 = vunpack.c.l.b16 %v1004
      %v1101 = vunpack.c.l.b16 %v1005
      %v1102 = vunpack.c.l.b16 %v1006
      %v1103 = vunpack.c.l.b16 %v1007
      %v1104 = vunpack.c.l.b16 %v1008
      %v1105 = vunpack.c.l.b16 %v1009
      %v1106 = vunpack.c.l.b16 %v1010
      %v1107 = vunpack.c.l.b16 %v1011
      %v1108 = vunpack.c.l.b16 %v1012
      %v1109 = vunpack.c.l.b16 %v1013
      %v1110 = vunpack.c.l.b16 %v1014
      %v1111 = vunpack.c.l.b16 %v1015
      %v1112 = vunpack.c.l.b16 %v1016
      %v1113 = vunpack.c.l.b16 %v1017
      %v1114 = vunpack.c.l.b16 %v1018
      %v1115 = vunpack.c.l.b16 %v1019
      %v1116 = vpack.c.b16 %v1069, %v1068
      %v1117 = vpack.c.b16 %v1071, %v1070
      %v1118 = vpack.c.b16 %v1073, %v1072
      %v1119 = vpack.c.b16 %v1075, %v1074
      %v1120 = vpack.c.b16 %v1077, %v1076
      %v1121 = vpack.c.b16 %v1079, %v1078
      %v1122 = vpack.c.b16 %v1081, %v1080
      %v1123 = vpack.c.b16 %v1083, %v1082
      %v1124 = vpack.c.b16 %v1085, %v1084
      %v1125 = vpack.c.b16 %v1087, %v1086
      %v1126 = vpack.c.b16 %v1089, %v1088
      %v1127 = vpack.c.b16 %v1091, %v1090
      %v1128 = vpack.c.b16 %v1093, %v1092
      %v1129 = vpack.c.b16 %v1095, %v1094
      %v1130 = vpack.c.b16 %v1097, %v1096
      %v1131 = vpack.c.b16 %v1099, %v1098
      %v1132 = vpack.c.b16 %v1101, %v1100
      %v1133 = vpack.c.b16 %v1103, %v1102
      %v1134 = vpack.c.b16 %v1105, %v1104
      %v1135 = vpack.c.b16 %v1107, %v1106
      %v1136 = vpack.c.b16 %v1109, %v1108
      %v1137 = vpack.c.b16 %v1111, %v1110
      %v1138 = vpack.c.b16 %v1113, %v1112
      %v1139 = vpack.c.b16 %v1115, %v1114
      %1164 = vmatprep.subr.bf16.mxu0 0
      %1165 = vmatpush1.bf16.msra.mxu0 %v1116
      %1166 = vmatprep.subr.bf16.mxu0 0
      %1167 = vmatpush1.bf16.msra.mxu0 %v1117
      %1168 = vmatprep.subr.bf16.mxu0 0
      %1169 = vmatpush1.bf16.msra.mxu0 %v1118
      %1170 = vmatprep.subr.bf16.mxu0 0
      %1171 = vmatpush1.bf16.msra.mxu0 %v1119
      %1172 = vmatprep.subr.bf16.mxu0 0
      %1173 = vmatpush1.bf16.msra.mxu0 %v1120
      %1174 = vmatprep.subr.bf16.mxu0 0
      %1175 = vmatpush1.bf16.msra.mxu0 %v1121
      %1176 = vmatprep.subr.bf16.mxu0 0
      %1177 = vmatpush1.bf16.msra.mxu0 %v1122
      %1178 = vmatprep.subr.bf16.mxu0 0
      %1179 = vmatpush1.bf16.msra.mxu0 %v1123
      %1180 = vmatprep.subr.bf16.mxu0 0
      %1181 = vmatpush1.bf16.msra.mxu0 %v1124
      %1182 = vmatprep.subr.bf16.mxu0 0
      %1183 = vmatpush1.bf16.msra.mxu0 %v1125
      %1184 = vmatprep.subr.bf16.mxu0 0
      %1185 = vmatpush1.bf16.msra.mxu0 %v1126
      %1186 = vmatprep.subr.bf16.mxu0 0
      %1187 = vmatpush1.bf16.msra.mxu0 %v1127
      %1188 = vmatprep.subr.bf16.mxu0 0
      %1189 = vmatpush1.bf16.msra.mxu0 %v1128
      %1190 = vmatprep.subr.bf16.mxu0 0
      %1191 = vmatpush1.bf16.msra.mxu0 %v1129
      %1192 = vmatprep.subr.bf16.mxu0 0
      %1193 = vmatpush1.bf16.msra.mxu0 %v1130
      %1194 = vmatprep.subr.bf16.mxu0 0
      %1195 = vmatpush1.bf16.msra.mxu0 %v1131
      %1196 = vmatprep.mubr.bf16.mxu0 %v932
      %1197 = vmatmul.mubr.bf16.gmra.mrb[0].mxu0 %v931
      %v1198 = vpop.f32.mrb[0].mxu0
      %v1199 = vadd.f32 0.0, %v1198
      %v1200 = vpop.f32.mrb[0].mxu0
      %v1201 = vpop.f32.mrb[0].mxu0
      %v1202 = vadd.f32 0.0, %v1201
      %v1203 = vpop.f32.mrb[0].mxu0
      %1204 = vmatprep.mubr.bf16.mxu0 %v933
      %1205 = vmatmul.mubr.bf16.gmra.mrb[0].mxu0 %v932
      %v1206 = vpop.f32.mrb[0].mxu0
      %v1207 = vadd.f32 0.0, %v1206
      %v1208 = vpop.f32.mrb[0].mxu0
      %v1209 = vpop.f32.mrb[0].mxu0
      %v1210 = vadd.f32 0.0, %v1209
      %v1211 = vpop.f32.mrb[0].mxu0
      %1212 = vmatprep.mubr.bf16.mxu0 %v934
      %1213 = vmatmul.mubr.bf16.gmra.mrb[0].mxu0 %v933
      %v1214 = vpop.f32.mrb[0].mxu0
      %v1215 = vadd.f32 0.0, %v1214
      %v1216 = vpop.f32.mrb[0].mxu0
      %v1217 = vpop.f32.mrb[0].mxu0
      %v1218 = vadd.f32 0.0, %v1217
      %v1219 = vpop.f32.mrb[0].mxu0
      %1220 = vmatprep.mubr.bf16.mxu0 %v935
      %1221 = vmatmul.mubr.bf16.gmra.mrb[0].mxu0 %v934
      %v1222 = vpop.f32.mrb[0].mxu0
      %v1223 = vadd.f32 0.0, %v1222
      %v1224 = vpop.f32.mrb[0].mxu0
      %v1225 = vpop.f32.mrb[0].mxu0
      %v1226 = vadd.f32 0.0, %v1225
      %v1227 = vpop.f32.mrb[0].mxu0
      %1228 = vmatprep.mubr.bf16.mxu0 %v936
      %1229 = vmatmul.mubr.bf16.gmra.mrb[0].mxu0 %v935
      %v1230 = vpop.f32.mrb[0].mxu0
      %v1231 = vadd.f32 0.0, %v1230
      %v1232 = vpop.f32.mrb[0].mxu0
      %v1233 = vpop.f32.mrb[0].mxu0
      %v1234 = vadd.f32 0.0, %v1233
      %v1235 = vpop.f32.mrb[0].mxu0
      %1236 = vmatprep.mubr.bf16.mxu0 %v937
      %1237 = vmatmul.mubr.bf16.gmra.mrb[0].mxu0 %v936
      %v1238 = vpop.f32.mrb[0].mxu0
      %v1239 = vadd.f32 0.0, %v1238
      %v1240 = vpop.f32.mrb[0].mxu0
      %v1241 = vpop.f32.mrb[0].mxu0
      %v1242 = vadd.f32 0.0, %v1241
      %v1243 = vpop.f32.mrb[0].mxu0
      %1244 = vmatprep.mubr.bf16.mxu0 %v938
      %1245 = vmatmul.mubr.bf16.gmra.mrb[0].mxu0 %v937
      %v1246 = vpop.f32.mrb[0].mxu0
      %v1247 = vadd.f32 0.0, %v1246
      %v1248 = vpop.f32.mrb[0].mxu0
      %v1249 = vpop.f32.mrb[0].mxu0
      %v1250 = vadd.f32 0.0, %v1249
      %v1251 = vpop.f32.mrb[0].mxu0
      %1252 = vmatprep.mubr.bf16.mxu0 %v939
      %1253 = vmatmul.mubr.bf16.gmra.mrb[0].mxu0 %v938
      %v1254 = vpop.f32.mrb[0].mxu0
      %v1255 = vadd.f32 0.0, %v1254
      %v1256 = vpop.f32.mrb[0].mxu0
      %v1257 = vpop.f32.mrb[0].mxu0
      %v1258 = vadd.f32 0.0, %v1257
      %v1259 = vpop.f32.mrb[0].mxu0
      %1260 = vmatprep.mubr.bf16.mxu0 %v940
      %1261 = vmatmul.mubr.bf16.gmra.mrb[0].mxu0 %v939
      %v1262 = vpop.f32.mrb[0].mxu0
      %v1263 = vadd.f32 0.0, %v1262
      %v1264 = vpop.f32.mrb[0].mxu0
      %v1265 = vpop.f32.mrb[0].mxu0
      %v1266 = vadd.f32 0.0, %v1265
      %v1267 = vpop.f32.mrb[0].mxu0
      %1268 = vmatprep.mubr.bf16.mxu0 %v941
      %1269 = vmatmul.mubr.bf16.gmra.mrb[0].mxu0 %v940
      %v1270 = vpop.f32.mrb[0].mxu0
      %v1271 = vadd.f32 0.0, %v1270
      %v1272 = vpop.f32.mrb[0].mxu0
      %v1273 = vpop.f32.mrb[0].mxu0
      %v1274 = vadd.f32 0.0, %v1273
      %v1275 = vpop.f32.mrb[0].mxu0
      %1276 = vmatprep.mubr.bf16.mxu0 %v942
      %1277 = vmatmul.mubr.bf16.gmra.mrb[0].mxu0 %v941
      %v1278 = vpop.f32.mrb[0].mxu0
      %v1279 = vadd.f32 0.0, %v1278
      %v1280 = vpop.f32.mrb[0].mxu0
      %v1281 = vpop.f32.mrb[0].mxu0
      %v1282 = vadd.f32 0.0, %v1281
      %v1283 = vpop.f32.mrb[0].mxu0
      %1284 = vmatprep.mubr.bf16.mxu0 %v943
      %1285 = vmatmul.mubr.bf16.gmra.mrb[0].mxu0 %v942
      %v1286 = vpop.f32.mrb[0].mxu0
      %v1287 = vadd.f32 0.0, %v1286
      %v1288 = vpop.f32.mrb[0].mxu0
      %v1289 = vpop.f32.mrb[0].mxu0
      %v1290 = vadd.f32 0.0, %v1289
      %v1291 = vpop.f32.mrb[0].mxu0
      %1292 = vmatprep.mubr.bf16.mxu0 %v944
      %1293 = vmatmul.mubr.bf16.gmra.mrb[0].mxu0 %v943
      %v1294 = vpop.f32.mrb[0].mxu0
      %v1295 = vadd.f32 0.0, %v1294
      %v1296 = vpop.f32.mrb[0].mxu0
      %v1297 = vpop.f32.mrb[0].mxu0
      %v1298 = vadd.f32 0.0, %v1297
      %v1299 = vpop.f32.mrb[0].mxu0
      %1300 = vmatprep.mubr.bf16.mxu0 %v945
      %1301 = vmatmul.mubr.bf16.gmra.mrb[0].mxu0 %v944
      %v1302 = vpop.f32.mrb[0].mxu0
      %v1303 = vadd.f32 0.0, %v1302
      %v1304 = vpop.f32.mrb[0].mxu0
      %v1305 = vpop.f32.mrb[0].mxu0
      %v1306 = vadd.f32 0.0, %v1305
      %v1307 = vpop.f32.mrb[0].mxu0
      %1308 = vmatprep.mubr.bf16.mxu0 %v946
      %1309 = vmatmul.mubr.bf16.gmra.mrb[0].mxu0 %v945
      %v1310 = vpop.f32.mrb[0].mxu0
      %v1311 = vadd.f32 0.0, %v1310
      %v1312 = vpop.f32.mrb[0].mxu0
      %v1313 = vpop.f32.mrb[0].mxu0
      %v1314 = vadd.f32 0.0, %v1313
      %v1315 = vpop.f32.mrb[0].mxu0
      %1316 = vmatprep.mubr.bf16.mxu0 %v965
      %1317 = vmatmul.mubr.bf16.gmra.mrb[0].mxu0 %v946
      %v1318 = vpop.f32.mrb[0].mxu0
      %v1319 = vadd.f32 0.0, %v1318
      %v1320 = vpop.f32.mrb[0].mxu0
      %v1321 = vpop.f32.mrb[0].mxu0
      %v1322 = vadd.f32 0.0, %v1321
      %v1323 = vpop.f32.mrb[0].mxu0
      %1324 = vdwg.mxu0
      %1325 = vmatprep.subr.bf16.mxu0 0
      %1326 = vmatpush1.bf16.msra.mxu0 %v1132
      %1327 = vmatprep.subr.bf16.mxu0 0
      %1328 = vmatpush1.bf16.msra.mxu0 %v1133
      %1329 = vmatprep.subr.bf16.mxu0 0
      %1330 = vmatpush1.bf16.msra.mxu0 %v1134
      %1331 = vmatprep.subr.bf16.mxu0 0
      %1332 = vmatpush1.bf16.msra.mxu0 %v1135
      %1333 = vmatprep.subr.bf16.mxu0 0
      %1334 = vmatpush1.bf16.msra.mxu0 %v1136
      %1335 = vmatprep.subr.bf16.mxu0 0
      %1336 = vmatpush1.bf16.msra.mxu0 %v1137
      %1337 = vmatprep.subr.bf16.mxu0 0
      %1338 = vmatpush1.bf16.msra.mxu0 %v1138
      %1339 = vmatprep.subr.bf16.mxu0 0
      %1340 = vmatpush1.bf16.msra.mxu0 %v1139
      %1341 = vmatprep.subr.bf16.mxu0 0
      %1342 = vmatpush1.bf16.msra.mxu0 0
      %1343 = vmatprep.subr.bf16.mxu0 0
      %1344 = vmatpush1.bf16.msra.mxu0 0
      %1345 = vmatprep.subr.bf16.mxu0 0
      %1346 = vmatpush1.bf16.msra.mxu0 0
      %1347 = vmatprep.subr.bf16.mxu0 0
      %1348 = vmatpush1.bf16.msra.mxu0 0
      %1349 = vmatprep.subr.bf16.mxu0 0
      %1350 = vmatpush1.bf16.msra.mxu0 0
      %1351 = vmatprep.subr.bf16.mxu0 0
      %1352 = vmatpush1.bf16.msra.mxu0 0
      %1353 = vmatprep.subr.bf16.mxu0 0
      %1354 = vmatpush1.bf16.msra.mxu0 0
      %1355 = vmatprep.subr.bf16.mxu0 0
      %1356 = vmatpush1.bf16.msra.mxu0 0
      %1357 = vmatprep.mubr.bf16.mxu0 0
      %1358 = vmatmul.mubr.bf16.gmra.mrb[0].mxu0 %v933
      %v1359 = vpop.f32.mrb[0].mxu0
      %v1360 = vadd.f32 %v1199, %v1359
      %v1361 = vpop.f32.mrb[0].mxu0
      %v1362 = vpop.f32.mrb[0].mxu0
      %v1363 = vadd.f32 %v1202, %v1362
      %v1364 = vpop.f32.mrb[0].mxu0
      %1365 = vmatprep.mubr.bf16.mxu0 0
      %1366 = vmatmul.mubr.bf16.gmra.mrb[0].mxu0 %v934
      %v1367 = vpop.f32.mrb[0].mxu0
      %v1368 = vadd.f32 %v1207, %v1367
      %v1369 = vpop.f32.mrb[0].mxu0
      %v1370 = vpop.f32.mrb[0].mxu0
      %v1371 = vadd.f32 %v1210, %v1370
      %v1372 = vpop.f32.mrb[0].mxu0
      %1373 = vmatprep.mubr.bf16.mxu0 0
      %1374 = vmatmul.mubr.bf16.gmra.mrb[0].mxu0 %v935
      %v1375 = vpop.f32.mrb[0].mxu0
      %v1376 = vadd.f32 %v1215, %v1375
      %v1377 = vpop.f32.mrb[0].mxu0
      %v1378 = vpop.f32.mrb[0].mxu0
      %v1379 = vadd.f32 %v1218, %v1378
      %v1380 = vpop.f32.mrb[0].mxu0
      %1381 = vmatprep.mubr.bf16.mxu0 0
      %1382 = vmatmul.mubr.bf16.gmra.mrb[0].mxu0 %v936
      %v1383 = vpop.f32.mrb[0].mxu0
      %v1384 = vadd.f32 %v1223, %v1383
      %v1385 = vpop.f32.mrb[0].mxu0
      %v1386 = vpop.f32.mrb[0].mxu0
      %v1387 = vadd.f32 %v1226, %v1386
      %v1388 = vpop.f32.mrb[0].mxu0
      %1389 = vmatprep.mubr.bf16.mxu0 0
      %1390 = vmatmul.mubr.bf16.gmra.mrb[0].mxu0 %v937
      %v1391 = vpop.f32.mrb[0].mxu0
      %v1392 = vadd.f32 %v1231, %v1391
      %v1393 = vpop.f32.mrb[0].mxu0
      %v1394 = vpop.f32.mrb[0].mxu0
      %v1395 = vadd.f32 %v1234, %v1394
      %v1396 = vpop.f32.mrb[0].mxu0
      %1397 = vmatprep.mubr.bf16.mxu0 0
      %1398 = vmatmul.mubr.bf16.gmra.mrb[0].mxu0 %v938
      %v1399 = vpop.f32.mrb[0].mxu0
      %v1400 = vadd.f32 %v1239, %v1399
      %v1401 = vpop.f32.mrb[0].mxu0
      %v1402 = vpop.f32.mrb[0].mxu0
      %v1403 = vadd.f32 %v1242, %v1402
      %v1404 = vpop.f32.mrb[0].mxu0
      %1405 = vmatprep.mubr.bf16.mxu0 0
      %1406 = vmatmul.mubr.bf16.gmra.mrb[0].mxu0 %v939
      %v1407 = vpop.f32.mrb[0].mxu0
      %v1408 = vadd.f32 %v1247, %v1407
      %v1409 = vpop.f32.mrb[0].mxu0
      %v1410 = vpop.f32.mrb[0].mxu0
      %v1411 = vadd.f32 %v1250, %v1410
      %v1412 = vpop.f32.mrb[0].mxu0
      %1413 = vmatprep.mubr.bf16.mxu0 0
      %1414 = vmatmul.mubr.bf16.gmra.mrb[0].mxu0 %v940
      %v1415 = vpop.f32.mrb[0].mxu0
      %v1416 = vadd.f32 %v1255, %v1415
      %v1417 = vpop.f32.mrb[0].mxu0
      %v1418 = vpop.f32.mrb[0].mxu0
      %v1419 = vadd.f32 %v1258, %v1418
      %v1420 = vpop.f32.mrb[0].mxu0
      %1421 = vmatprep.mubr.bf16.mxu0 0
      %1422 = vmatmul.mubr.bf16.gmra.mrb[0].mxu0 %v941
      %v1423 = vpop.f32.mrb[0].mxu0
      %v1424 = vadd.f32 %v1263, %v1423
      %v1425 = vpop.f32.mrb[0].mxu0
      %v1426 = vpop.f32.mrb[0].mxu0
      %v1427 = vadd.f32 %v1266, %v1426
      %v1428 = vpop.f32.mrb[0].mxu0
      %1429 = vmatprep.mubr.bf16.mxu0 0
      %1430 = vmatmul.mubr.bf16.gmra.mrb[0].mxu0 %v942
      %v1431 = vpop.f32.mrb[0].mxu0
      %v1432 = vadd.f32 %v1271, %v1431
      %v1433 = vpop.f32.mrb[0].mxu0
      %v1434 = vpop.f32.mrb[0].mxu0
      %v1435 = vadd.f32 %v1274, %v1434
      %v1436 = vpop.f32.mrb[0].mxu0
      %1437 = vmatprep.mubr.bf16.mxu0 0
      %1438 = vmatmul.mubr.bf16.gmra.mrb[0].mxu0 %v943
      %v1439 = vpop.f32.mrb[0].mxu0
      %v1440 = vadd.f32 %v1279, %v1439
      %v1441 = vpop.f32.mrb[0].mxu0
      %v1442 = vpop.f32.mrb[0].mxu0
      %v1443 = vadd.f32 %v1282, %v1442
      %v1444 = vpop.f32.mrb[0].mxu0
      %1445 = vmatprep.mubr.bf16.mxu0 0
      %1446 = vmatmul.mubr.bf16.gmra.mrb[0].mxu0 %v944
      %v1447 = vpop.f32.mrb[0].mxu0
      %v1448 = vadd.f32 %v1287, %v1447
      %v1449 = vpop.f32.mrb[0].mxu0
      %v1450 = vpop.f32.mrb[0].mxu0
      %v1451 = vadd.f32 %v1290, %v1450
      %v1452 = vpop.f32.mrb[0].mxu0
      %1453 = vmatprep.mubr.bf16.mxu0 0
      %1454 = vmatmul.mubr.bf16.gmra.mrb[0].mxu0 %v945
      %v1455 = vpop.f32.mrb[0].mxu0
      %v1456 = vadd.f32 %v1295, %v1455
      %v1457 = vpop.f32.mrb[0].mxu0
      %v1458 = vpop.f32.mrb[0].mxu0
      %v1459 = vadd.f32 %v1298, %v1458
      %v1460 = vpop.f32.mrb[0].mxu0
      %1461 = vmatprep.mubr.bf16.mxu0 0
      %1462 = vmatmul.mubr.bf16.gmra.mrb[0].mxu0 %v946
      %v1463 = vpop.f32.mrb[0].mxu0
      %v1464 = vadd.f32 %v1303, %v1463
      %v1465 = vpop.f32.mrb[0].mxu0
      %v1466 = vpop.f32.mrb[0].mxu0
      %v1467 = vadd.f32 %v1306, %v1466
      %v1468 = vpop.f32.mrb[0].mxu0
      %1469 = vmatprep.mubr.bf16.mxu0 0
      %1470 = vmatmul.mubr.bf16.gmra.mrb[0].mxu0 %v965
      %v1471 = vpop.f32.mrb[0].mxu0
      %v1472 = vadd.f32 %v1311, %v1471
      %v1473 = vpop.f32.mrb[0].mxu0
      %v1474 = vpop.f32.mrb[0].mxu0
      %v1475 = vadd.f32 %v1314, %v1474
      %v1476 = vpop.f32.mrb[0].mxu0
      %1477 = vmatprep.mubr.bf16.mxu0 0
      %1478 = vmatmul.mubr.bf16.gmra.mrb[0].mxu0 %v969
      %v1479 = vpop.f32.mrb[0].mxu0
      %v1480 = vadd.f32 %v1319, %v1479
      %v1481 = vpop.f32.mrb[0].mxu0
      %v1482 = vpop.f32.mrb[0].mxu0
      %v1483 = vadd.f32 %v1322, %v1482
      %v1484 = vpop.f32.mrb[0].mxu0
      %1485 = vdwg.mxu0
      %v1534 = vunpack.c.l.b16 %v398
      %v1535 = vunpack.c.l.b16 %v399
      %v1536 = vunpack.c.l.b16 %v400
      %v1537 = vunpack.c.l.b16 %v401
      %v1538 = vunpack.c.l.b16 %v402
      %v1539 = vunpack.c.l.b16 %v403
      %v1540 = vunpack.c.l.b16 %v404
      %v1541 = vunpack.c.l.b16 %v405
      %v1542 = vunpack.c.l.b16 %v406
      %v1543 = vunpack.c.l.b16 %v407
      %v1544 = vunpack.c.l.b16 %v408
      %v1545 = vunpack.c.l.b16 %v409
      %v1546 = vunpack.c.l.b16 %v410
      %v1547 = vunpack.c.l.b16 %v411
      %v1548 = vunpack.c.l.b16 %v412
      %v1549 = vunpack.c.l.b16 %v413
      %v1550 = vunpack.c.l.b16 %v414
      %v1551 = vunpack.c.l.b16 %v415
      %v1552 = vunpack.c.l.b16 %v416
      %v1553 = vunpack.c.l.b16 %v417
      %v1554 = vunpack.c.l.b16 %v418
      %v1555 = vunpack.c.l.b16 %v419
      %v1556 = vunpack.c.l.b16 %v420
      %v1557 = vunpack.c.l.b16 %v421
      %v1558 = vunpack.c.l.b16 %v422
      %v1559 = vunpack.c.l.b16 %v423
      %v1560 = vunpack.c.l.b16 %v424
      %v1561 = vunpack.c.l.b16 %v425
      %v1562 = vunpack.c.l.b16 %v426
      %v1563 = vunpack.c.l.b16 %v427
      %v1564 = vunpack.c.l.b16 %v428
      %v1565 = vunpack.c.l.b16 %v429
      %v1566 = vunpack.c.l.b16 %v430
      %v1567 = vunpack.c.l.b16 %v431
      %v1568 = vunpack.c.l.b16 %v432
      %v1569 = vunpack.c.l.b16 %v433
      %v1570 = vunpack.c.l.b16 %v434
      %v1571 = vunpack.c.l.b16 %v435
      %v1572 = vunpack.c.l.b16 %v436
      %v1573 = vunpack.c.l.b16 %v437
      %v1574 = vunpack.c.l.b16 %v438
      %v1575 = vunpack.c.l.b16 %v439
      %v1576 = vunpack.c.l.b16 %v440
      %v1577 = vunpack.c.l.b16 %v441
      %v1578 = vunpack.c.l.b16 %v442
      %v1579 = vunpack.c.l.b16 %v443
      %v1580 = vunpack.c.l.b16 %v444
      %v1581 = vunpack.c.l.b16 %v445
      %v1582 = vpack.c.b16 %v1535, %v1534
      %v1583 = vpack.c.b16 %v1537, %v1536
      %v1584 = vpack.c.b16 %v1539, %v1538
      %v1585 = vpack.c.b16 %v1541, %v1540
      %v1586 = vpack.c.b16 %v1543, %v1542
      %v1587 = vpack.c.b16 %v1545, %v1544
      %v1588 = vpack.c.b16 %v1547, %v1546
      %v1589 = vpack.c.b16 %v1549, %v1548
      %v1590 = vpack.c.b16 %v1551, %v1550
      %v1591 = vpack.c.b16 %v1553, %v1552
      %v1592 = vpack.c.b16 %v1555, %v1554
      %v1593 = vpack.c.b16 %v1557, %v1556
      %v1594 = vpack.c.b16 %v1559, %v1558
      %v1595 = vpack.c.b16 %v1561, %v1560
      %v1596 = vpack.c.b16 %v1563, %v1562
      %v1597 = vpack.c.b16 %v1565, %v1564
      %v1598 = vpack.c.b16 %v1567, %v1566
      %v1599 = vpack.c.b16 %v1569, %v1568
      %v1600 = vpack.c.b16 %v1571, %v1570
      %v1601 = vpack.c.b16 %v1573, %v1572
      %v1602 = vpack.c.b16 %v1575, %v1574
      %v1603 = vpack.c.b16 %v1577, %v1576
      %v1604 = vpack.c.b16 %v1579, %v1578
      %v1605 = vpack.c.b16 %v1581, %v1580
      %1630 = vmatprep.subr.bf16.mxu0 0
      %1631 = vmatpush1.bf16.msra.mxu0 %v1582
      %1632 = vmatprep.subr.bf16.mxu0 0
      %1633 = vmatpush1.bf16.msra.mxu0 %v1583
      %1634 = vmatprep.subr.bf16.mxu0 0
      %1635 = vmatpush1.bf16.msra.mxu0 %v1584
      %1636 = vmatprep.subr.bf16.mxu0 0
      %1637 = vmatpush1.bf16.msra.mxu0 %v1585
      %1638 = vmatprep.subr.bf16.mxu0 0
      %1639 = vmatpush1.bf16.msra.mxu0 %v1586
      %1640 = vmatprep.subr.bf16.mxu0 0
      %1641 = vmatpush1.bf16.msra.mxu0 %v1587
      %1642 = vmatprep.subr.bf16.mxu0 0
      %1643 = vmatpush1.bf16.msra.mxu0 %v1588
      %1644 = vmatprep.subr.bf16.mxu0 0
      %1645 = vmatpush1.bf16.msra.mxu0 %v1589
      %1646 = vmatprep.subr.bf16.mxu0 0
      %1647 = vmatpush1.bf16.msra.mxu0 %v1590
      %1648 = vmatprep.subr.bf16.mxu0 0
      %1649 = vmatpush1.bf16.msra.mxu0 %v1591
      %1650 = vmatprep.subr.bf16.mxu0 0
      %1651 = vmatpush1.bf16.msra.mxu0 %v1592
      %1652 = vmatprep.subr.bf16.mxu0 0
      %1653 = vmatpush1.bf16.msra.mxu0 %v1593
      %1654 = vmatprep.subr.bf16.mxu0 0
      %1655 = vmatpush1.bf16.msra.mxu0 %v1594
      %1656 = vmatprep.subr.bf16.mxu0 0
      %1657 = vmatpush1.bf16.msra.mxu0 %v1595
      %1658 = vmatprep.subr.bf16.mxu0 0
      %1659 = vmatpush1.bf16.msra.mxu0 %v1596
      %1660 = vmatprep.subr.bf16.mxu0 0
      %1661 = vmatpush1.bf16.msra.mxu0 %v1597
      %1662 = vmatprep.mubr.bf16.mxu0 %v355
      %1663 = vmatmul.mubr.bf16.gmra.mrb[0].mxu0 %v354
      %v1664 = vpop.f32.mrb[0].mxu0
      %v1665 = vadd.f32 %v1360, %v1664
      %v1666 = vpop.f32.mrb[0].mxu0
      %v1667 = vpop.f32.mrb[0].mxu0
      %v1668 = vadd.f32 %v1363, %v1667
      %v1669 = vpop.f32.mrb[0].mxu0
      %1670 = vmatprep.mubr.bf16.mxu0 %v356
      %1671 = vmatmul.mubr.bf16.gmra.mrb[0].mxu0 %v355
      %v1672 = vpop.f32.mrb[0].mxu0
      %v1673 = vadd.f32 %v1368, %v1672
      %v1674 = vpop.f32.mrb[0].mxu0
      %v1675 = vpop.f32.mrb[0].mxu0
      %v1676 = vadd.f32 %v1371, %v1675
      %v1677 = vpop.f32.mrb[0].mxu0
      %1678 = vmatprep.mubr.bf16.mxu0 %v357
      %1679 = vmatmul.mubr.bf16.gmra.mrb[0].mxu0 %v356
      %v1680 = vpop.f32.mrb[0].mxu0
      %v1681 = vadd.f32 %v1376, %v1680
      %v1682 = vpop.f32.mrb[0].mxu0
      %v1683 = vpop.f32.mrb[0].mxu0
      %v1684 = vadd.f32 %v1379, %v1683
      %v1685 = vpop.f32.mrb[0].mxu0
      %1686 = vmatprep.mubr.bf16.mxu0 %v358
      %1687 = vmatmul.mubr.bf16.gmra.mrb[0].mxu0 %v357
      %v1688 = vpop.f32.mrb[0].mxu0
      %v1689 = vadd.f32 %v1384, %v1688
      %v1690 = vpop.f32.mrb[0].mxu0
      %v1691 = vpop.f32.mrb[0].mxu0
      %v1692 = vadd.f32 %v1387, %v1691
      %v1693 = vpop.f32.mrb[0].mxu0
      %1694 = vmatprep.mubr.bf16.mxu0 %v359
      %1695 = vmatmul.mubr.bf16.gmra.mrb[0].mxu0 %v358
      %v1696 = vpop.f32.mrb[0].mxu0
      %v1697 = vadd.f32 %v1392, %v1696
      %v1698 = vpop.f32.mrb[0].mxu0
      %v1699 = vpop.f32.mrb[0].mxu0
      %v1700 = vadd.f32 %v1395, %v1699
      %v1701 = vpop.f32.mrb[0].mxu0
      %1702 = vmatprep.mubr.bf16.mxu0 %v360
      %1703 = vmatmul.mubr.bf16.gmra.mrb[0].mxu0 %v359
      %v1704 = vpop.f32.mrb[0].mxu0
      %v1705 = vadd.f32 %v1400, %v1704
      %v1706 = vpop.f32.mrb[0].mxu0
      %v1707 = vpop.f32.mrb[0].mxu0
      %v1708 = vadd.f32 %v1403, %v1707
      %v1709 = vpop.f32.mrb[0].mxu0
      %1710 = vmatprep.mubr.bf16.mxu0 %v361
      %1711 = vmatmul.mubr.bf16.gmra.mrb[0].mxu0 %v360
      %v1712 = vpop.f32.mrb[0].mxu0
      %v1713 = vadd.f32 %v1408, %v1712
      %v1714 = vpop.f32.mrb[0].mxu0
      %v1715 = vpop.f32.mrb[0].mxu0
      %v1716 = vadd.f32 %v1411, %v1715
      %v1717 = vpop.f32.mrb[0].mxu0
      %1718 = vmatprep.mubr.bf16.mxu0 %v362
      %1719 = vmatmul.mubr.bf16.gmra.mrb[0].mxu0 %v361
      %v1720 = vpop.f32.mrb[0].mxu0
      %v1721 = vadd.f32 %v1416, %v1720
      %v1722 = vpop.f32.mrb[0].mxu0
      %v1723 = vpop.f32.mrb[0].mxu0
      %v1724 = vadd.f32 %v1419, %v1723
      %v1725 = vpop.f32.mrb[0].mxu0
      %1726 = vmatprep.mubr.bf16.mxu0 %v363
      %1727 = vmatmul.mubr.bf16.gmra.mrb[0].mxu0 %v362
      %v1728 = vpop.f32.mrb[0].mxu0
      %v1729 = vadd.f32 %v1424, %v1728
      %v1730 = vpop.f32.mrb[0].mxu0
      %v1731 = vpop.f32.mrb[0].mxu0
      %v1732 = vadd.f32 %v1427, %v1731
      %v1733 = vpop.f32.mrb[0].mxu0
      %1734 = vmatprep.mubr.bf16.mxu0 %v364
      %1735 = vmatmul.mubr.bf16.gmra.mrb[0].mxu0 %v363
      %v1736 = vpop.f32.mrb[0].mxu0
      %v1737 = vadd.f32 %v1432, %v1736
      %v1738 = vpop.f32.mrb[0].mxu0
      %v1739 = vpop.f32.mrb[0].mxu0
      %v1740 = vadd.f32 %v1435, %v1739
      %v1741 = vpop.f32.mrb[0].mxu0
      %1742 = vmatprep.mubr.bf16.mxu0 %v365
      %1743 = vmatmul.mubr.bf16.gmra.mrb[0].mxu0 %v364
      %v1744 = vpop.f32.mrb[0].mxu0
      %v1745 = vadd.f32 %v1440, %v1744
      %v1746 = vpop.f32.mrb[0].mxu0
      %v1747 = vpop.f32.mrb[0].mxu0
      %v1748 = vadd.f32 %v1443, %v1747
      %v1749 = vpop.f32.mrb[0].mxu0
      %1750 = vmatprep.mubr.bf16.mxu0 %v366
      %1751 = vmatmul.mubr.bf16.gmra.mrb[0].mxu0 %v365
      %v1752 = vpop.f32.mrb[0].mxu0
      %v1753 = vadd.f32 %v1448, %v1752
      %v1754 = vpop.f32.mrb[0].mxu0
      %v1755 = vpop.f32.mrb[0].mxu0
      %v1756 = vadd.f32 %v1451, %v1755
      %v1757 = vpop.f32.mrb[0].mxu0
      %1758 = vmatprep.mubr.bf16.mxu0 %v367
      %1759 = vmatmul.mubr.bf16.gmra.mrb[0].mxu0 %v366
      %v1760 = vpop.f32.mrb[0].mxu0
      %v1761 = vadd.f32 %v1456, %v1760
      %v1762 = vpop.f32.mrb[0].mxu0
      %v1763 = vpop.f32.mrb[0].mxu0
      %v1764 = vadd.f32 %v1459, %v1763
      %v1765 = vpop.f32.mrb[0].mxu0
      %1766 = vmatprep.mubr.bf16.mxu0 %v368
      %1767 = vmatmul.mubr.bf16.gmra.mrb[0].mxu0 %v367
      %v1768 = vpop.f32.mrb[0].mxu0
      %v1769 = vadd.f32 %v1464, %v1768
      %v1770 = vpop.f32.mrb[0].mxu0
      %v1771 = vpop.f32.mrb[0].mxu0
      %v1772 = vadd.f32 %v1467, %v1771
      %v1773 = vpop.f32.mrb[0].mxu0
      %1774 = vmatprep.mubr.bf16.mxu0 %v369
      %1775 = vmatmul.mubr.bf16.gmra.mrb[0].mxu0 %v368
      %v1776 = vpop.f32.mrb[0].mxu0
      %v1777 = vadd.f32 %v1472, %v1776
      %v1778 = vpop.f32.mrb[0].mxu0
      %v1779 = vpop.f32.mrb[0].mxu0
      %v1780 = vadd.f32 %v1475, %v1779
      %v1781 = vpop.f32.mrb[0].mxu0
      %1782 = vmatprep.mubr.bf16.mxu0 %v390
      %1783 = vmatmul.mubr.bf16.gmra.mrb[0].mxu0 %v369
      %v1784 = vpop.f32.mrb[0].mxu0
      %v1785 = vadd.f32 %v1480, %v1784
      %v1786 = vpop.f32.mrb[0].mxu0
      %v1787 = vpop.f32.mrb[0].mxu0
      %v1788 = vadd.f32 %v1483, %v1787
      %v1789 = vpop.f32.mrb[0].mxu0
      %1790 = vdwg.mxu0
      %1791 = vmatprep.subr.bf16.mxu0 0
      %1792 = vmatpush1.bf16.msra.mxu0 %v1598
      %1793 = vmatprep.subr.bf16.mxu0 0
      %1794 = vmatpush1.bf16.msra.mxu0 %v1599
      %1795 = vmatprep.subr.bf16.mxu0 0
      %1796 = vmatpush1.bf16.msra.mxu0 %v1600
      %1797 = vmatprep.subr.bf16.mxu0 0
      %1798 = vmatpush1.bf16.msra.mxu0 %v1601
      %1799 = vmatprep.subr.bf16.mxu0 0
      %1800 = vmatpush1.bf16.msra.mxu0 %v1602
      %1801 = vmatprep.subr.bf16.mxu0 0
      %1802 = vmatpush1.bf16.msra.mxu0 %v1603
      %1803 = vmatprep.subr.bf16.mxu0 0
      %1804 = vmatpush1.bf16.msra.mxu0 %v1604
      %1805 = vmatprep.subr.bf16.mxu0 0
      %1806 = vmatpush1.bf16.msra.mxu0 %v1605
      %1807 = vmatprep.subr.bf16.mxu0 0
      %1808 = vmatpush1.bf16.msra.mxu0 0
      %1809 = vmatprep.subr.bf16.mxu0 0
      %1810 = vmatpush1.bf16.msra.mxu0 0
      %1811 = vmatprep.subr.bf16.mxu0 0
      %1812 = vmatpush1.bf16.msra.mxu0 0
      %1813 = vmatprep.subr.bf16.mxu0 0
      %1814 = vmatpush1.bf16.msra.mxu0 0
      %1815 = vmatprep.subr.bf16.mxu0 0
      %1816 = vmatpush1.bf16.msra.mxu0 0
      %1817 = vmatprep.subr.bf16.mxu0 0
      %1818 = vmatpush1.bf16.msra.mxu0 0
      %1819 = vmatprep.subr.bf16.mxu0 0
      %1820 = vmatpush1.bf16.msra.mxu0 0
      %1821 = vmatprep.subr.bf16.mxu0 0
      %1822 = vmatpush1.bf16.msra.mxu0 0
      %1823 = vmatprep.mubr.bf16.mxu0 0
      %1824 = vmatmul.mubr.bf16.gmra.mrb[0].mxu0 %v356
      %v1825 = vpop.f32.mrb[0].mxu0
      %v1826 = vadd.f32 %v1665, %v1825
      %v1827 = vpop.f32.mrb[0].mxu0
      %v1828 = vpop.f32.mrb[0].mxu0
      %v1829 = vadd.f32 %v1668, %v1828
      %v1830 = vpop.f32.mrb[0].mxu0
      %1831 = vmatprep.mubr.bf16.mxu0 0
      %1832 = vmatmul.mubr.bf16.gmra.mrb[0].mxu0 %v357
      %v1833 = vpop.f32.mrb[0].mxu0
      %v1834 = vadd.f32 %v1673, %v1833
      %v1835 = vpop.f32.mrb[0].mxu0
      %v1836 = vpop.f32.mrb[0].mxu0
      %v1837 = vadd.f32 %v1676, %v1836
      %v1838 = vpop.f32.mrb[0].mxu0
      %1839 = vmatprep.mubr.bf16.mxu0 0
      %1840 = vmatmul.mubr.bf16.gmra.mrb[0].mxu0 %v358
      %v1841 = vpop.f32.mrb[0].mxu0
      %v1842 = vadd.f32 %v1681, %v1841
      %v1843 = vpop.f32.mrb[0].mxu0
      %v1844 = vpop.f32.mrb[0].mxu0
      %v1845 = vadd.f32 %v1684, %v1844
      %v1846 = vpop.f32.mrb[0].mxu0
      %1847 = vmatprep.mubr.bf16.mxu0 0
      %1848 = vmatmul.mubr.bf16.gmra.mrb[0].mxu0 %v359
      %v1849 = vpop.f32.mrb[0].mxu0
      %v1850 = vadd.f32 %v1689, %v1849
      %v1851 = vpop.f32.mrb[0].mxu0
      %v1852 = vpop.f32.mrb[0].mxu0
      %v1853 = vadd.f32 %v1692, %v1852
      %v1854 = vpop.f32.mrb[0].mxu0
      %1855 = vmatprep.mubr.bf16.mxu0 0
      %1856 = vmatmul.mubr.bf16.gmra.mrb[0].mxu0 %v360
      %v1857 = vpop.f32.mrb[0].mxu0
      %v1858 = vadd.f32 %v1697, %v1857
      %v1859 = vpop.f32.mrb[0].mxu0
      %v1860 = vpop.f32.mrb[0].mxu0
      %v1861 = vadd.f32 %v1700, %v1860
      %v1862 = vpop.f32.mrb[0].mxu0
      %1863 = vmatprep.mubr.bf16.mxu0 0
      %1864 = vmatmul.mubr.bf16.gmra.mrb[0].mxu0 %v361
      %v1865 = vpop.f32.mrb[0].mxu0
      %v1866 = vadd.f32 %v1705, %v1865
      %v1867 = vpop.f32.mrb[0].mxu0
      %v1868 = vpop.f32.mrb[0].mxu0
      %v1869 = vadd.f32 %v1708, %v1868
      %v1870 = vpop.f32.mrb[0].mxu0
      %1871 = vmatprep.mubr.bf16.mxu0 0
      %1872 = vmatmul.mubr.bf16.gmra.mrb[0].mxu0 %v362
      %v1873 = vpop.f32.mrb[0].mxu0
      %v1874 = vadd.f32 %v1713, %v1873
      %v1875 = vpop.f32.mrb[0].mxu0
      %v1876 = vpop.f32.mrb[0].mxu0
      %v1877 = vadd.f32 %v1716, %v1876
      %v1878 = vpop.f32.mrb[0].mxu0
      %1879 = vmatprep.mubr.bf16.mxu0 0
      %1880 = vmatmul.mubr.bf16.gmra.mrb[0].mxu0 %v363
      %v1881 = vpop.f32.mrb[0].mxu0
      %v1882 = vadd.f32 %v1721, %v1881
      %v1883 = vpop.f32.mrb[0].mxu0
      %v1884 = vpop.f32.mrb[0].mxu0
      %v1885 = vadd.f32 %v1724, %v1884
      %v1886 = vpop.f32.mrb[0].mxu0
      %1887 = vmatprep.mubr.bf16.mxu0 0
      %1888 = vmatmul.mubr.bf16.gmra.mrb[0].mxu0 %v364
      %v1889 = vpop.f32.mrb[0].mxu0
      %v1890 = vadd.f32 %v1729, %v1889
      %v1891 = vpop.f32.mrb[0].mxu0
      %v1892 = vpop.f32.mrb[0].mxu0
      %v1893 = vadd.f32 %v1732, %v1892
      %v1894 = vpop.f32.mrb[0].mxu0
      %1895 = vmatprep.mubr.bf16.mxu0 0
      %1896 = vmatmul.mubr.bf16.gmra.mrb[0].mxu0 %v365
      %v1897 = vpop.f32.mrb[0].mxu0
      %v1898 = vadd.f32 %v1737, %v1897
      %v1899 = vpop.f32.mrb[0].mxu0
      %v1900 = vpop.f32.mrb[0].mxu0
      %v1901 = vadd.f32 %v1740, %v1900
      %v1902 = vpop.f32.mrb[0].mxu0
      %1903 = vmatprep.mubr.bf16.mxu0 0
      %1904 = vmatmul.mubr.bf16.gmra.mrb[0].mxu0 %v366
      %v1905 = vpop.f32.mrb[0].mxu0
      %v1906 = vadd.f32 %v1745, %v1905
      %v1907 = vpop.f32.mrb[0].mxu0
      %v1908 = vpop.f32.mrb[0].mxu0
      %v1909 = vadd.f32 %v1748, %v1908
      %v1910 = vpop.f32.mrb[0].mxu0
      %1911 = vmatprep.mubr.bf16.mxu0 0
      %1912 = vmatmul.mubr.bf16.gmra.mrb[0].mxu0 %v367
      %v1913 = vpop.f32.mrb[0].mxu0
      %v1914 = vadd.f32 %v1753, %v1913
      %v1915 = vpop.f32.mrb[0].mxu0
      %v1916 = vpop.f32.mrb[0].mxu0
      %v1917 = vadd.f32 %v1756, %v1916
      %v1918 = vpop.f32.mrb[0].mxu0
      %1919 = vmatprep.mubr.bf16.mxu0 0
      %1920 = vmatmul.mubr.bf16.gmra.mrb[0].mxu0 %v368
      %v1921 = vpop.f32.mrb[0].mxu0
      %v1922 = vadd.f32 %v1761, %v1921
      %v1923 = vpop.f32.mrb[0].mxu0
      %v1924 = vpop.f32.mrb[0].mxu0
      %v1925 = vadd.f32 %v1764, %v1924
      %v1926 = vpop.f32.mrb[0].mxu0
      %1927 = vmatprep.mubr.bf16.mxu0 0
      %1928 = vmatmul.mubr.bf16.gmra.mrb[0].mxu0 %v369
      %v1929 = vpop.f32.mrb[0].mxu0
      %v1930 = vadd.f32 %v1769, %v1929
      %v1931 = vpop.f32.mrb[0].mxu0
      %v1932 = vpop.f32.mrb[0].mxu0
      %v1933 = vadd.f32 %v1772, %v1932
      %v1934 = vpop.f32.mrb[0].mxu0
      %1935 = vmatprep.mubr.bf16.mxu0 0
      %1936 = vmatmul.mubr.bf16.gmra.mrb[0].mxu0 %v390
      %v1937 = vpop.f32.mrb[0].mxu0
      %v1938 = vadd.f32 %v1777, %v1937
      %v1939 = vpop.f32.mrb[0].mxu0
      %v1940 = vpop.f32.mrb[0].mxu0
      %v1941 = vadd.f32 %v1780, %v1940
      %v1942 = vpop.f32.mrb[0].mxu0
      %1943 = vmatprep.mubr.bf16.mxu0 0
      %1944 = vmatmul.mubr.bf16.gmra.mrb[0].mxu0 %v396
      %v1945 = vpop.f32.mrb[0].mxu0
      %v1946 = vadd.f32 %v1785, %v1945
      %v1947 = vpop.f32.mrb[0].mxu0
      %v1948 = vpop.f32.mrb[0].mxu0
      %v1949 = vadd.f32 %v1788, %v1948
      %v1950 = vpop.f32.mrb[0].mxu0
      %1951 = vdwg.mxu0
      %v1952 = vld [vmem:[%s235] sm:$0xe]
      %v1953 = vld [vmem:[%s235 + $0xc] sm:$0xe]
      %v1954 = vld [vmem:[%s235 + $0x18] sm:$0xe]
      %v1955 = vld [vmem:[%s235 + $0x24] sm:$0xe]
      %v1956 = vld [vmem:[%s235 + $0x30] sm:$0xe]
      %v1957 = vld [vmem:[%s235 + $0x3c] sm:$0xe]
      %v1958 = vld [vmem:[%s235 + $0x48] sm:$0xe]
      %v1959 = vld [vmem:[%s235 + $0x54] sm:$0xe]
      %v1960 = vld [vmem:[%s235 + $0x60] sm:$0xe]
      %v1961 = vld [vmem:[%s235 + $0x6c] sm:$0xe]
      %v1962 = vld [vmem:[%s235 + $0x78] sm:$0xe]
      %v1963 = vld [vmem:[%s235 + $0x84] sm:$0xe]
      %v1964 = vld [vmem:[%s235 + $0x90] sm:$0xe]
      %v1965 = vld [vmem:[%s235 + $0x9c] sm:$0xe]
      %v1966 = vld [vmem:[%s235 + $0xa8] sm:$0xe]
      %v1967 = vld [vmem:[%s235 + $0xb4] sm:$0xe]
      %v1968 = vld [vmem:[%s235 + $0xc0] sm:$0xe]
      %v1969 = vld [vmem:[%s235 + $0xcc] sm:$0xe]
      %vm2002 = vcmask 1042432
      %vm2003 = vcmask 1046532
      %vm2004 = vmor %vm2002, %vm2003
      %v2005 = vrot.slane %v1952, 5
      %v2006 = vrot.slane %v2005, 4
      %v2007 = vrot.slane %v255, 5
      %v2008 = vsel %vm2004, %v2006, %v2007
      %v2009 = vrot.slane %v2007, 4
      %v2010 = vrot.slane %v446, 5
      %v2011 = vsel %vm2004, %v2009, %v2010
      %v2012 = vrot.slane %v1953, 5
      %v2013 = vrot.slane %v2012, 4
      %v2014 = vrot.slane %v257, 5
      %v2015 = vsel %vm2004, %v2013, %v2014
      %v2016 = vrot.slane %v2014, 4
      %v2017 = vrot.slane %v447, 5
      %v2018 = vsel %vm2004, %v2016, %v2017
      %v2019 = vrot.slane %v1954, 5
      %v2020 = vrot.slane %v2019, 4
      %v2021 = vrot.slane %v259, 5
      %v2022 = vsel %vm2004, %v2020, %v2021
      %v2023 = vrot.slane %v2021, 4
      %v2024 = vrot.slane %v448, 5
      %v2025 = vsel %vm2004, %v2023, %v2024
      %v2026 = vrot.slane %v1955, 5
      %v2027 = vrot.slane %v2026, 4
      %v2028 = vrot.slane %v261, 5
      %v2029 = vsel %vm2004, %v2027, %v2028
      %v2030 = vrot.slane %v2028, 4
      %v2031 = vrot.slane %v449, 5
      %v2032 = vsel %vm2004, %v2030, %v2031
      %v2033 = vrot.slane %v1956, 5
      %v2034 = vrot.slane %v2033, 4
      %v2035 = vrot.slane %v263, 5
      %v2036 = vsel %vm2004, %v2034, %v2035
      %v2037 = vrot.slane %v2035, 4
      %v2038 = vrot.slane %v450, 5
      %v2039 = vsel %vm2004, %v2037, %v2038
      %v2040 = vrot.slane %v1957, 5
      %v2041 = vrot.slane %v2040, 4
      %v2042 = vrot.slane %v265, 5
      %v2043 = vsel %vm2004, %v2041, %v2042
      %v2044 = vrot.slane %v2042, 4
      %v2045 = vrot.slane %v451, 5
      %v2046 = vsel %vm2004, %v2044, %v2045
      %v2047 = vrot.slane %v1958, 5
      %v2048 = vrot.slane %v2047, 4
      %v2049 = vrot.slane %v267, 5
      %v2050 = vsel %vm2004, %v2048, %v2049
      %v2051 = vrot.slane %v2049, 4
      %v2052 = vrot.slane %v452, 5
      %v2053 = vsel %vm2004, %v2051, %v2052
      %v2054 = vrot.slane %v1959, 5
      %v2055 = vrot.slane %v2054, 4
      %v2056 = vrot.slane %v269, 5
      %v2057 = vsel %vm2004, %v2055, %v2056
      %v2058 = vrot.slane %v2056, 4
      %v2059 = vrot.slane %v453, 5
      %v2060 = vsel %vm2004, %v2058, %v2059
      %v2061 = vrot.slane %v1960, 5
      %v2062 = vrot.slane %v2061, 4
      %v2063 = vrot.slane %v271, 5
      %v2064 = vsel %vm2004, %v2062, %v2063
      %v2065 = vrot.slane %v2063, 4
      %v2066 = vrot.slane %v454, 5
      %v2067 = vsel %vm2004, %v2065, %v2066
      %v2068 = vrot.slane %v1961, 5
      %v2069 = vrot.slane %v2068, 4
      %v2070 = vrot.slane %v273, 5
      %v2071 = vsel %vm2004, %v2069, %v2070
      %v2072 = vrot.slane %v2070, 4
      %v2073 = vrot.slane %v455, 5
      %v2074 = vsel %vm2004, %v2072, %v2073
      %v2075 = vrot.slane %v1962, 5
      %v2076 = vrot.slane %v2075, 4
      %v2077 = vrot.slane %v275, 5
      %v2078 = vsel %vm2004, %v2076, %v2077
      %v2079 = vrot.slane %v2077, 4
      %v2080 = vrot.slane %v456, 5
      %v2081 = vsel %vm2004, %v2079, %v2080
      %v2082 = vrot.slane %v1963, 5
      %v2083 = vrot.slane %v2082, 4
      %v2084 = vrot.slane %v277, 5
      %v2085 = vsel %vm2004, %v2083, %v2084
      %v2086 = vrot.slane %v2084, 4
      %v2087 = vrot.slane %v457, 5
      %v2088 = vsel %vm2004, %v2086, %v2087
      %v2089 = vrot.slane %v1964, 5
      %v2090 = vrot.slane %v2089, 4
      %v2091 = vrot.slane %v279, 5
      %v2092 = vsel %vm2004, %v2090, %v2091
      %v2093 = vrot.slane %v2091, 4
      %v2094 = vrot.slane %v458, 5
      %v2095 = vsel %vm2004, %v2093, %v2094
      %v2096 = vrot.slane %v1965, 5
      %v2097 = vrot.slane %v2096, 4
      %v2098 = vrot.slane %v281, 5
      %v2099 = vsel %vm2004, %v2097, %v2098
      %v2100 = vrot.slane %v2098, 4
      %v2101 = vrot.slane %v459, 5
      %v2102 = vsel %vm2004, %v2100, %v2101
      %v2103 = vrot.slane %v1966, 5
      %v2104 = vrot.slane %v2103, 4
      %v2105 = vrot.slane %v283, 5
      %v2106 = vsel %vm2004, %v2104, %v2105
      %v2107 = vrot.slane %v2105, 4
      %v2108 = vrot.slane %v460, 5
      %v2109 = vsel %vm2004, %v2107, %v2108
      %v2110 = vrot.slane %v1967, 5
      %v2111 = vrot.slane %v2110, 4
      %v2112 = vrot.slane %v285, 5
      %v2113 = vsel %vm2004, %v2111, %v2112
      %v2114 = vrot.slane %v2112, 4
      %v2115 = vrot.slane %v461, 5
      %v2116 = vsel %vm2004, %v2114, %v2115
      %v2119 = vrot.slane %v1968, 5
      %v2120 = vrot.slane %v2119, 4
      %v2121 = vrot.slane %v287, 5
      %v2122 = vsel %vm2004, %v2120, %v2121
      %v2123 = vrot.slane %v2121, 4
      %v2124 = vrot.slane %v462, 5
      %v2125 = vsel %vm2004, %v2123, %v2124
      %v2128 = vrot.slane %v1969, 5
      %v2129 = vrot.slane %v2128, 4
      %v2130 = vrot.slane %v289, 5
      %v2131 = vsel %vm2004, %v2129, %v2130
      %v2132 = vrot.slane %v2130, 4
      %v2133 = vrot.slane %v463, 5
      %v2134 = vsel %vm2004, %v2132, %v2133
      %v2135 = vunpack.c.l.b16 %v2008
      %v2136 = vunpack.c.l.b16 %v2011
      %v2137 = vunpack.c.l.b16 %v2015
      %v2138 = vunpack.c.l.b16 %v2018
      %v2139 = vunpack.c.l.b16 %v2022
      %v2140 = vunpack.c.l.b16 %v2025
      %v2141 = vunpack.c.l.b16 %v2029
      %v2142 = vunpack.c.l.b16 %v2032
      %v2143 = vunpack.c.l.b16 %v2036
      %v2144 = vunpack.c.l.b16 %v2039
      %v2145 = vunpack.c.l.b16 %v2043
      %v2146 = vunpack.c.l.b16 %v2046
      %v2147 = vunpack.c.l.b16 %v2050
      %v2148 = vunpack.c.l.b16 %v2053
      %v2149 = vunpack.c.l.b16 %v2057
      %v2150 = vunpack.c.l.b16 %v2060
      %v2151 = vunpack.c.l.b16 %v2064
      %v2152 = vunpack.c.l.b16 %v2067
      %v2153 = vunpack.c.l.b16 %v2071
      %v2154 = vunpack.c.l.b16 %v2074
      %v2155 = vunpack.c.l.b16 %v2078
      %v2156 = vunpack.c.l.b16 %v2081
      %v2157 = vunpack.c.l.b16 %v2085
      %v2158 = vunpack.c.l.b16 %v2088
      %v2159 = vunpack.c.l.b16 %v2092
      %v2160 = vunpack.c.l.b16 %v2095
      %v2161 = vunpack.c.l.b16 %v2099
      %v2162 = vunpack.c.l.b16 %v2102
      %v2163 = vunpack.c.l.b16 %v2106
      %v2164 = vunpack.c.l.b16 %v2109
      %v2165 = vunpack.c.l.b16 %v2113
      %v2166 = vunpack.c.l.b16 %v2116
      %v2167 = vpack.c.b16 %v2136, %v2135
      %v2168 = vpack.c.b16 %v2138, %v2137
      %v2169 = vpack.c.b16 %v2140, %v2139
      %v2170 = vpack.c.b16 %v2142, %v2141
      %v2171 = vpack.c.b16 %v2144, %v2143
      %v2172 = vpack.c.b16 %v2146, %v2145
      %v2173 = vpack.c.b16 %v2148, %v2147
      %v2174 = vpack.c.b16 %v2150, %v2149
      %v2175 = vpack.c.b16 %v2152, %v2151
      %v2176 = vpack.c.b16 %v2154, %v2153
      %v2177 = vpack.c.b16 %v2156, %v2155
      %v2178 = vpack.c.b16 %v2158, %v2157
      %v2179 = vpack.c.b16 %v2160, %v2159
      %v2180 = vpack.c.b16 %v2162, %v2161
      %v2181 = vpack.c.b16 %v2164, %v2163
      %v2182 = vpack.c.b16 %v2166, %v2165
      %v2199 = vunpack.c.l.b16 %v2122
      %v2200 = vunpack.c.l.b16 %v2125
      %v2201 = vpack.c.b16 %v2200, %v2199
      %v2203 = vunpack.c.l.b16 %v2131
      %v2204 = vunpack.c.l.b16 %v2134
      %v2205 = vpack.c.b16 %v2204, %v2203
      %s2207 = scalar_lea.vmem %s1, 384
      %v2208 = vld [vmem:[%s2207] sm:$0xf]
      %v2209 = vld [vmem:[%s2207 + $0x4] sm:$0xf]
      %v2210 = vld [vmem:[%s2207 + $0x8] sm:$0xf]
      %v2211 = vld [vmem:[%s2207 + $0xc] sm:$0xf]
      %v2212 = vld [vmem:[%s2207 + $0x10] sm:$0xf]
      %v2213 = vld [vmem:[%s2207 + $0x14] sm:$0xf]
      %v2214 = vld [vmem:[%s2207 + $0x18] sm:$0xf]
      %v2215 = vld [vmem:[%s2207 + $0x1c] sm:$0xf]
      %v2216 = vld [vmem:[%s2207 + $0x20] sm:$0xf]
      %v2217 = vld [vmem:[%s2207 + $0x24] sm:$0xf]
      %v2218 = vld [vmem:[%s2207 + $0x28] sm:$0xf]
      %v2219 = vld [vmem:[%s2207 + $0x2c] sm:$0xf]
      %v2220 = vld [vmem:[%s2207 + $0x30] sm:$0xf]
      %v2221 = vld [vmem:[%s2207 + $0x34] sm:$0xf]
      %v2222 = vld [vmem:[%s2207 + $0x38] sm:$0xf]
      %v2223 = vld [vmem:[%s2207 + $0x3c] sm:$0xf]
      %v2224 = vld [vmem:[%s2207 + $0x40] sm:$0xf]
      %v2225 = vld [vmem:[%s2207 + $0x44] sm:$0xf]
      %v2226 = vld [vmem:[%s2207 + $0x48] sm:$0xf]
      %v2227 = vld [vmem:[%s2207 + $0x4c] sm:$0xf]
      %v2228 = vld [vmem:[%s2207 + $0x50] sm:$0xf]
      %v2229 = vld [vmem:[%s2207 + $0x54] sm:$0xf]
      %v2230 = vld [vmem:[%s2207 + $0x58] sm:$0xf]
      %v2231 = vld [vmem:[%s2207 + $0x5c] sm:$0xf]
      %v2232 = vld [vmem:[%s2207 + $0x60] sm:$0xf]
      %v2233 = vld [vmem:[%s2207 + $0x64] sm:$0xf]
      %v2234 = vld [vmem:[%s2207 + $0x68] sm:$0xf]
      %v2235 = vld [vmem:[%s2207 + $0x6c] sm:$0xf]
      %v2236 = vld [vmem:[%s2207 + $0x70] sm:$0xf]
      %v2237 = vld [vmem:[%s2207 + $0x74] sm:$0xf]
      %v2238 = vld [vmem:[%s2207 + $0x78] sm:$0xf]
      %v2239 = vld [vmem:[%s2207 + $0x7c] sm:$0xf]
      %v2240 = vld [vmem:[%s2207 + $0x80] sm:$0xf]
      %v2241 = vld [vmem:[%s2207 + $0x84] sm:$0xf]
      %v2242 = vld [vmem:[%s2207 + $0x88] sm:$0xf]
      %v2243 = vld [vmem:[%s2207 + $0x8c] sm:$0xf]
      %v2244 = vld [vmem:[%s2207 + $0x90] sm:$0xf]
      %v2245 = vld [vmem:[%s2207 + $0x94] sm:$0xf]
      %v2246 = vld [vmem:[%s2207 + $0x98] sm:$0xf]
      %v2247 = vld [vmem:[%s2207 + $0x9c] sm:$0xf]
      %v2248 = vld [vmem:[%s2207 + $0xa0] sm:$0xf]
      %v2249 = vld [vmem:[%s2207 + $0xa4] sm:$0xf]
      %v2250 = vld [vmem:[%s2207 + $0xa8] sm:$0xf]
      %v2251 = vld [vmem:[%s2207 + $0xac] sm:$0xf]
      %v2252 = vld [vmem:[%s2207 + $0xb0] sm:$0xf]
      %v2253 = vld [vmem:[%s2207 + $0xb4] sm:$0xf]
      %v2254 = vld [vmem:[%s2207 + $0xb8] sm:$0xf]
      %v2255 = vld [vmem:[%s2207 + $0xbc] sm:$0xf]
      %v2304 = vunpack.c.l.b16 %v2208
      %v2305 = vunpack.c.l.b16 %v2209
      %v2306 = vunpack.c.l.b16 %v2210
      %v2307 = vunpack.c.l.b16 %v2211
      %v2308 = vunpack.c.l.b16 %v2212
      %v2309 = vunpack.c.l.b16 %v2213
      %v2310 = vunpack.c.l.b16 %v2214
      %v2311 = vunpack.c.l.b16 %v2215
      %v2312 = vunpack.c.l.b16 %v2216
      %v2313 = vunpack.c.l.b16 %v2217
      %v2314 = vunpack.c.l.b16 %v2218
      %v2315 = vunpack.c.l.b16 %v2219
      %v2316 = vunpack.c.l.b16 %v2220
      %v2317 = vunpack.c.l.b16 %v2221
      %v2318 = vunpack.c.l.b16 %v2222
      %v2319 = vunpack.c.l.b16 %v2223
      %v2320 = vunpack.c.l.b16 %v2224
      %v2321 = vunpack.c.l.b16 %v2225
      %v2322 = vunpack.c.l.b16 %v2226
      %v2323 = vunpack.c.l.b16 %v2227
      %v2324 = vunpack.c.l.b16 %v2228
      %v2325 = vunpack.c.l.b16 %v2229
      %v2326 = vunpack.c.l.b16 %v2230
      %v2327 = vunpack.c.l.b16 %v2231
      %v2328 = vunpack.c.l.b16 %v2232
      %v2329 = vunpack.c.l.b16 %v2233
      %v2330 = vunpack.c.l.b16 %v2234
      %v2331 = vunpack.c.l.b16 %v2235
      %v2332 = vunpack.c.l.b16 %v2236
      %v2333 = vunpack.c.l.b16 %v2237
      %v2334 = vunpack.c.l.b16 %v2238
      %v2335 = vunpack.c.l.b16 %v2239
      %v2336 = vunpack.c.l.b16 %v2240
      %v2337 = vunpack.c.l.b16 %v2241
      %v2338 = vunpack.c.l.b16 %v2242
      %v2339 = vunpack.c.l.b16 %v2243
      %v2340 = vunpack.c.l.b16 %v2244
      %v2341 = vunpack.c.l.b16 %v2245
      %v2342 = vunpack.c.l.b16 %v2246
      %v2343 = vunpack.c.l.b16 %v2247
      %v2344 = vunpack.c.l.b16 %v2248
      %v2345 = vunpack.c.l.b16 %v2249
      %v2346 = vunpack.c.l.b16 %v2250
      %v2347 = vunpack.c.l.b16 %v2251
      %v2348 = vunpack.c.l.b16 %v2252
      %v2349 = vunpack.c.l.b16 %v2253
      %v2350 = vunpack.c.l.b16 %v2254
      %v2351 = vunpack.c.l.b16 %v2255
      %v2352 = vpack.c.b16 %v2305, %v2304
      %v2353 = vpack.c.b16 %v2307, %v2306
      %v2354 = vpack.c.b16 %v2309, %v2308
      %v2355 = vpack.c.b16 %v2311, %v2310
      %v2356 = vpack.c.b16 %v2313, %v2312
      %v2357 = vpack.c.b16 %v2315, %v2314
      %v2358 = vpack.c.b16 %v2317, %v2316
      %v2359 = vpack.c.b16 %v2319, %v2318
      %v2360 = vpack.c.b16 %v2321, %v2320
      %v2361 = vpack.c.b16 %v2323, %v2322
      %v2362 = vpack.c.b16 %v2325, %v2324
      %v2363 = vpack.c.b16 %v2327, %v2326
      %v2364 = vpack.c.b16 %v2329, %v2328
      %v2365 = vpack.c.b16 %v2331, %v2330
      %v2366 = vpack.c.b16 %v2333, %v2332
      %v2367 = vpack.c.b16 %v2335, %v2334
      %v2368 = vpack.c.b16 %v2337, %v2336
      %v2369 = vpack.c.b16 %v2339, %v2338
      %v2370 = vpack.c.b16 %v2341, %v2340
      %v2371 = vpack.c.b16 %v2343, %v2342
      %v2372 = vpack.c.b16 %v2345, %v2344
      %v2373 = vpack.c.b16 %v2347, %v2346
      %v2374 = vpack.c.b16 %v2349, %v2348
      %v2375 = vpack.c.b16 %v2351, %v2350
      %2400 = vmatprep.subr.bf16.mxu0 0
      %2401 = vmatpush1.bf16.msra.mxu0 %v2352
      %2402 = vmatprep.subr.bf16.mxu0 0
      %2403 = vmatpush1.bf16.msra.mxu0 %v2353
      %2404 = vmatprep.subr.bf16.mxu0 0
      %2405 = vmatpush1.bf16.msra.mxu0 %v2354
      %2406 = vmatprep.subr.bf16.mxu0 0
      %2407 = vmatpush1.bf16.msra.mxu0 %v2355
      %2408 = vmatprep.subr.bf16.mxu0 0
      %2409 = vmatpush1.bf16.msra.mxu0 %v2356
      %2410 = vmatprep.subr.bf16.mxu0 0
      %2411 = vmatpush1.bf16.msra.mxu0 %v2357
      %2412 = vmatprep.subr.bf16.mxu0 0
      %2413 = vmatpush1.bf16.msra.mxu0 %v2358
      %2414 = vmatprep.subr.bf16.mxu0 0
      %2415 = vmatpush1.bf16.msra.mxu0 %v2359
      %2416 = vmatprep.subr.bf16.mxu0 0
      %2417 = vmatpush1.bf16.msra.mxu0 %v2360
      %2418 = vmatprep.subr.bf16.mxu0 0
      %2419 = vmatpush1.bf16.msra.mxu0 %v2361
      %2420 = vmatprep.subr.bf16.mxu0 0
      %2421 = vmatpush1.bf16.msra.mxu0 %v2362
      %2422 = vmatprep.subr.bf16.mxu0 0
      %2423 = vmatpush1.bf16.msra.mxu0 %v2363
      %2424 = vmatprep.subr.bf16.mxu0 0
      %2425 = vmatpush1.bf16.msra.mxu0 %v2364
      %2426 = vmatprep.subr.bf16.mxu0 0
      %2427 = vmatpush1.bf16.msra.mxu0 %v2365
      %2428 = vmatprep.subr.bf16.mxu0 0
      %2429 = vmatpush1.bf16.msra.mxu0 %v2366
      %2430 = vmatprep.subr.bf16.mxu0 0
      %2431 = vmatpush1.bf16.msra.mxu0 %v2367
      %2432 = vmatprep.mubr.bf16.mxu0 %v2168
      %2433 = vmatmul.mubr.bf16.gmra.mrb[0].mxu0 %v2167
      %v2434 = vpop.f32.mrb[0].mxu0
      %v2435 = vadd.f32 0.0, %v2434
      %v2436 = vpop.f32.mrb[0].mxu0
      %v2437 = vpop.f32.mrb[0].mxu0
      %v2438 = vadd.f32 0.0, %v2437
      %v2439 = vpop.f32.mrb[0].mxu0
      %2440 = vmatprep.mubr.bf16.mxu0 %v2169
      %2441 = vmatmul.mubr.bf16.gmra.mrb[0].mxu0 %v2168
      %v2442 = vpop.f32.mrb[0].mxu0
      %v2443 = vadd.f32 0.0, %v2442
      %v2444 = vpop.f32.mrb[0].mxu0
      %v2445 = vpop.f32.mrb[0].mxu0
      %v2446 = vadd.f32 0.0, %v2445
      %v2447 = vpop.f32.mrb[0].mxu0
      %2448 = vmatprep.mubr.bf16.mxu0 %v2170
      %2449 = vmatmul.mubr.bf16.gmra.mrb[0].mxu0 %v2169
      %v2450 = vpop.f32.mrb[0].mxu0
      %v2451 = vadd.f32 0.0, %v2450
      %v2452 = vpop.f32.mrb[0].mxu0
      %v2453 = vpop.f32.mrb[0].mxu0
      %v2454 = vadd.f32 0.0, %v2453
      %v2455 = vpop.f32.mrb[0].mxu0
      %2456 = vmatprep.mubr.bf16.mxu0 %v2171
      %2457 = vmatmul.mubr.bf16.gmra.mrb[0].mxu0 %v2170
      %v2458 = vpop.f32.mrb[0].mxu0
      %v2459 = vadd.f32 0.0, %v2458
      %v2460 = vpop.f32.mrb[0].mxu0
      %v2461 = vpop.f32.mrb[0].mxu0
      %v2462 = vadd.f32 0.0, %v2461
      %v2463 = vpop.f32.mrb[0].mxu0
      %2464 = vmatprep.mubr.bf16.mxu0 %v2172
      %2465 = vmatmul.mubr.bf16.gmra.mrb[0].mxu0 %v2171
      %v2466 = vpop.f32.mrb[0].mxu0
      %v2467 = vadd.f32 0.0, %v2466
      %v2468 = vpop.f32.mrb[0].mxu0
      %v2469 = vpop.f32.mrb[0].mxu0
      %v2470 = vadd.f32 0.0, %v2469
      %v2471 = vpop.f32.mrb[0].mxu0
      %2472 = vmatprep.mubr.bf16.mxu0 %v2173
      %2473 = vmatmul.mubr.bf16.gmra.mrb[0].mxu0 %v2172
      %v2474 = vpop.f32.mrb[0].mxu0
      %v2475 = vadd.f32 0.0, %v2474
      %v2476 = vpop.f32.mrb[0].mxu0
      %v2477 = vpop.f32.mrb[0].mxu0
      %v2478 = vadd.f32 0.0, %v2477
      %v2479 = vpop.f32.mrb[0].mxu0
      %2480 = vmatprep.mubr.bf16.mxu0 %v2174
      %2481 = vmatmul.mubr.bf16.gmra.mrb[0].mxu0 %v2173
      %v2482 = vpop.f32.mrb[0].mxu0
      %v2483 = vadd.f32 0.0, %v2482
      %v2484 = vpop.f32.mrb[0].mxu0
      %v2485 = vpop.f32.mrb[0].mxu0
      %v2486 = vadd.f32 0.0, %v2485
      %v2487 = vpop.f32.mrb[0].mxu0
      %2488 = vmatprep.mubr.bf16.mxu0 %v2175
      %2489 = vmatmul.mubr.bf16.gmra.mrb[0].mxu0 %v2174
      %v2490 = vpop.f32.mrb[0].mxu0
      %v2491 = vadd.f32 0.0, %v2490
      %v2492 = vpop.f32.mrb[0].mxu0
      %v2493 = vpop.f32.mrb[0].mxu0
      %v2494 = vadd.f32 0.0, %v2493
      %v2495 = vpop.f32.mrb[0].mxu0
      %2496 = vmatprep.mubr.bf16.mxu0 %v2176
      %2497 = vmatmul.mubr.bf16.gmra.mrb[0].mxu0 %v2175
      %v2498 = vpop.f32.mrb[0].mxu0
      %v2499 = vadd.f32 0.0, %v2498
      %v2500 = vpop.f32.mrb[0].mxu0
      %v2501 = vpop.f32.mrb[0].mxu0
      %v2502 = vadd.f32 0.0, %v2501
      %v2503 = vpop.f32.mrb[0].mxu0
      %2504 = vmatprep.mubr.bf16.mxu0 %v2177
      %2505 = vmatmul.mubr.bf16.gmra.mrb[0].mxu0 %v2176
      %v2506 = vpop.f32.mrb[0].mxu0
      %v2507 = vadd.f32 0.0, %v2506
      %v2508 = vpop.f32.mrb[0].mxu0
      %v2509 = vpop.f32.mrb[0].mxu0
      %v2510 = vadd.f32 0.0, %v2509
      %v2511 = vpop.f32.mrb[0].mxu0
      %2512 = vmatprep.mubr.bf16.mxu0 %v2178
      %2513 = vmatmul.mubr.bf16.gmra.mrb[0].mxu0 %v2177
      %v2514 = vpop.f32.mrb[0].mxu0
      %v2515 = vadd.f32 0.0, %v2514
      %v2516 = vpop.f32.mrb[0].mxu0
      %v2517 = vpop.f32.mrb[0].mxu0
      %v2518 = vadd.f32 0.0, %v2517
      %v2519 = vpop.f32.mrb[0].mxu0
      %2520 = vmatprep.mubr.bf16.mxu0 %v2179
      %2521 = vmatmul.mubr.bf16.gmra.mrb[0].mxu0 %v2178
      %v2522 = vpop.f32.mrb[0].mxu0
      %v2523 = vadd.f32 0.0, %v2522
      %v2524 = vpop.f32.mrb[0].mxu0
      %v2525 = vpop.f32.mrb[0].mxu0
      %v2526 = vadd.f32 0.0, %v2525
      %v2527 = vpop.f32.mrb[0].mxu0
      %2528 = vmatprep.mubr.bf16.mxu0 %v2180
      %2529 = vmatmul.mubr.bf16.gmra.mrb[0].mxu0 %v2179
      %v2530 = vpop.f32.mrb[0].mxu0
      %v2531 = vadd.f32 0.0, %v2530
      %v2532 = vpop.f32.mrb[0].mxu0
      %v2533 = vpop.f32.mrb[0].mxu0
      %v2534 = vadd.f32 0.0, %v2533
      %v2535 = vpop.f32.mrb[0].mxu0
      %2536 = vmatprep.mubr.bf16.mxu0 %v2181
      %2537 = vmatmul.mubr.bf16.gmra.mrb[0].mxu0 %v2180
      %v2538 = vpop.f32.mrb[0].mxu0
      %v2539 = vadd.f32 0.0, %v2538
      %v2540 = vpop.f32.mrb[0].mxu0
      %v2541 = vpop.f32.mrb[0].mxu0
      %v2542 = vadd.f32 0.0, %v2541
      %v2543 = vpop.f32.mrb[0].mxu0
      %2544 = vmatprep.mubr.bf16.mxu0 %v2182
      %2545 = vmatmul.mubr.bf16.gmra.mrb[0].mxu0 %v2181
      %v2546 = vpop.f32.mrb[0].mxu0
      %v2547 = vadd.f32 0.0, %v2546
      %v2548 = vpop.f32.mrb[0].mxu0
      %v2549 = vpop.f32.mrb[0].mxu0
      %v2550 = vadd.f32 0.0, %v2549
      %v2551 = vpop.f32.mrb[0].mxu0
      %2552 = vmatprep.mubr.bf16.mxu0 %v2201
      %2553 = vmatmul.mubr.bf16.gmra.mrb[0].mxu0 %v2182
      %v2554 = vpop.f32.mrb[0].mxu0
      %v2555 = vadd.f32 0.0, %v2554
      %v2556 = vpop.f32.mrb[0].mxu0
      %v2557 = vpop.f32.mrb[0].mxu0
      %v2558 = vadd.f32 0.0, %v2557
      %v2559 = vpop.f32.mrb[0].mxu0
      %2560 = vdwg.mxu0
      %2561 = vmatprep.subr.bf16.mxu0 0
      %2562 = vmatpush1.bf16.msra.mxu0 %v2368
      %2563 = vmatprep.subr.bf16.mxu0 0
      %2564 = vmatpush1.bf16.msra.mxu0 %v2369
      %2565 = vmatprep.subr.bf16.mxu0 0
      %2566 = vmatpush1.bf16.msra.mxu0 %v2370
      %2567 = vmatprep.subr.bf16.mxu0 0
      %2568 = vmatpush1.bf16.msra.mxu0 %v2371
      %2569 = vmatprep.subr.bf16.mxu0 0
      %2570 = vmatpush1.bf16.msra.mxu0 %v2372
      %2571 = vmatprep.subr.bf16.mxu0 0
      %2572 = vmatpush1.bf16.msra.mxu0 %v2373
      %2573 = vmatprep.subr.bf16.mxu0 0
      %2574 = vmatpush1.bf16.msra.mxu0 %v2374
      %2575 = vmatprep.subr.bf16.mxu0 0
      %2576 = vmatpush1.bf16.msra.mxu0 %v2375
      %2577 = vmatprep.subr.bf16.mxu0 0
      %2578 = vmatpush1.bf16.msra.mxu0 0
      %2579 = vmatprep.subr.bf16.mxu0 0
      %2580 = vmatpush1.bf16.msra.mxu0 0
      %2581 = vmatprep.subr.bf16.mxu0 0
      %2582 = vmatpush1.bf16.msra.mxu0 0
      %2583 = vmatprep.subr.bf16.mxu0 0
      %2584 = vmatpush1.bf16.msra.mxu0 0
      %2585 = vmatprep.subr.bf16.mxu0 0
      %2586 = vmatpush1.bf16.msra.mxu0 0
      %2587 = vmatprep.subr.bf16.mxu0 0
      %2588 = vmatpush1.bf16.msra.mxu0 0
      %2589 = vmatprep.subr.bf16.mxu0 0
      %2590 = vmatpush1.bf16.msra.mxu0 0
      %2591 = vmatprep.subr.bf16.mxu0 0
      %2592 = vmatpush1.bf16.msra.mxu0 0
      %2593 = vmatprep.mubr.bf16.mxu0 0
      %2594 = vmatmul.mubr.bf16.gmra.mrb[0].mxu0 %v2169
      %v2595 = vpop.f32.mrb[0].mxu0
      %v2596 = vadd.f32 %v2435, %v2595
      %v2597 = vpop.f32.mrb[0].mxu0
      %v2598 = vpop.f32.mrb[0].mxu0
      %v2599 = vadd.f32 %v2438, %v2598
      %v2600 = vpop.f32.mrb[0].mxu0
      %2601 = vmatprep.mubr.bf16.mxu0 0
      %2602 = vmatmul.mubr.bf16.gmra.mrb[0].mxu0 %v2170
      %v2603 = vpop.f32.mrb[0].mxu0
      %v2604 = vadd.f32 %v2443, %v2603
      %v2605 = vpop.f32.mrb[0].mxu0
      %v2606 = vpop.f32.mrb[0].mxu0
      %v2607 = vadd.f32 %v2446, %v2606
      %v2608 = vpop.f32.mrb[0].mxu0
      %2609 = vmatprep.mubr.bf16.mxu0 0
      %2610 = vmatmul.mubr.bf16.gmra.mrb[0].mxu0 %v2171
      %v2611 = vpop.f32.mrb[0].mxu0
      %v2612 = vadd.f32 %v2451, %v2611
      %v2613 = vpop.f32.mrb[0].mxu0
      %v2614 = vpop.f32.mrb[0].mxu0
      %v2615 = vadd.f32 %v2454, %v2614
      %v2616 = vpop.f32.mrb[0].mxu0
      %2617 = vmatprep.mubr.bf16.mxu0 0
      %2618 = vmatmul.mubr.bf16.gmra.mrb[0].mxu0 %v2172
      %v2619 = vpop.f32.mrb[0].mxu0
      %v2620 = vadd.f32 %v2459, %v2619
      %v2621 = vpop.f32.mrb[0].mxu0
      %v2622 = vpop.f32.mrb[0].mxu0
      %v2623 = vadd.f32 %v2462, %v2622
      %v2624 = vpop.f32.mrb[0].mxu0
      %2625 = vmatprep.mubr.bf16.mxu0 0
      %2626 = vmatmul.mubr.bf16.gmra.mrb[0].mxu0 %v2173
      %v2627 = vpop.f32.mrb[0].mxu0
      %v2628 = vadd.f32 %v2467, %v2627
      %v2629 = vpop.f32.mrb[0].mxu0
      %v2630 = vpop.f32.mrb[0].mxu0
      %v2631 = vadd.f32 %v2470, %v2630
      %v2632 = vpop.f32.mrb[0].mxu0
      %2633 = vmatprep.mubr.bf16.mxu0 0
      %2634 = vmatmul.mubr.bf16.gmra.mrb[0].mxu0 %v2174
      %v2635 = vpop.f32.mrb[0].mxu0
      %v2636 = vadd.f32 %v2475, %v2635
      %v2637 = vpop.f32.mrb[0].mxu0
      %v2638 = vpop.f32.mrb[0].mxu0
      %v2639 = vadd.f32 %v2478, %v2638
      %v2640 = vpop.f32.mrb[0].mxu0
      %2641 = vmatprep.mubr.bf16.mxu0 0
      %2642 = vmatmul.mubr.bf16.gmra.mrb[0].mxu0 %v2175
      %v2643 = vpop.f32.mrb[0].mxu0
      %v2644 = vadd.f32 %v2483, %v2643
      %v2645 = vpop.f32.mrb[0].mxu0
      %v2646 = vpop.f32.mrb[0].mxu0
      %v2647 = vadd.f32 %v2486, %v2646
      %v2648 = vpop.f32.mrb[0].mxu0
      %2649 = vmatprep.mubr.bf16.mxu0 0
      %2650 = vmatmul.mubr.bf16.gmra.mrb[0].mxu0 %v2176
      %v2651 = vpop.f32.mrb[0].mxu0
      %v2652 = vadd.f32 %v2491, %v2651
      %v2653 = vpop.f32.mrb[0].mxu0
      %v2654 = vpop.f32.mrb[0].mxu0
      %v2655 = vadd.f32 %v2494, %v2654
      %v2656 = vpop.f32.mrb[0].mxu0
      %2657 = vmatprep.mubr.bf16.mxu0 0
      %2658 = vmatmul.mubr.bf16.gmra.mrb[0].mxu0 %v2177
      %v2659 = vpop.f32.mrb[0].mxu0
      %v2660 = vadd.f32 %v2499, %v2659
      %v2661 = vpop.f32.mrb[0].mxu0
      %v2662 = vpop.f32.mrb[0].mxu0
      %v2663 = vadd.f32 %v2502, %v2662
      %v2664 = vpop.f32.mrb[0].mxu0
      %2665 = vmatprep.mubr.bf16.mxu0 0
      %2666 = vmatmul.mubr.bf16.gmra.mrb[0].mxu0 %v2178
      %v2667 = vpop.f32.mrb[0].mxu0
      %v2668 = vadd.f32 %v2507, %v2667
      %v2669 = vpop.f32.mrb[0].mxu0
      %v2670 = vpop.f32.mrb[0].mxu0
      %v2671 = vadd.f32 %v2510, %v2670
      %v2672 = vpop.f32.mrb[0].mxu0
      %2673 = vmatprep.mubr.bf16.mxu0 0
      %2674 = vmatmul.mubr.bf16.gmra.mrb[0].mxu0 %v2179
      %v2675 = vpop.f32.mrb[0].mxu0
      %v2676 = vadd.f32 %v2515, %v2675
      %v2677 = vpop.f32.mrb[0].mxu0
      %v2678 = vpop.f32.mrb[0].mxu0
      %v2679 = vadd.f32 %v2518, %v2678
      %v2680 = vpop.f32.mrb[0].mxu0
      %2681 = vmatprep.mubr.bf16.mxu0 0
      %2682 = vmatmul.mubr.bf16.gmra.mrb[0].mxu0 %v2180
      %v2683 = vpop.f32.mrb[0].mxu0
      %v2684 = vadd.f32 %v2523, %v2683
      %v2685 = vpop.f32.mrb[0].mxu0
      %v2686 = vpop.f32.mrb[0].mxu0
      %v2687 = vadd.f32 %v2526, %v2686
      %v2688 = vpop.f32.mrb[0].mxu0
      %2689 = vmatprep.mubr.bf16.mxu0 0
      %2690 = vmatmul.mubr.bf16.gmra.mrb[0].mxu0 %v2181
      %v2691 = vpop.f32.mrb[0].mxu0
      %v2692 = vadd.f32 %v2531, %v2691
      %v2693 = vpop.f32.mrb[0].mxu0
      %v2694 = vpop.f32.mrb[0].mxu0
      %v2695 = vadd.f32 %v2534, %v2694
      %v2696 = vpop.f32.mrb[0].mxu0
      %2697 = vmatprep.mubr.bf16.mxu0 0
      %2698 = vmatmul.mubr.bf16.gmra.mrb[0].mxu0 %v2182
      %v2699 = vpop.f32.mrb[0].mxu0
      %v2700 = vadd.f32 %v2539, %v2699
      %v2701 = vpop.f32.mrb[0].mxu0
      %v2702 = vpop.f32.mrb[0].mxu0
      %v2703 = vadd.f32 %v2542, %v2702
      %v2704 = vpop.f32.mrb[0].mxu0
      %2705 = vmatprep.mubr.bf16.mxu0 0
      %2706 = vmatmul.mubr.bf16.gmra.mrb[0].mxu0 %v2201
      %v2707 = vpop.f32.mrb[0].mxu0
      %v2708 = vadd.f32 %v2547, %v2707
      %v2709 = vpop.f32.mrb[0].mxu0
      %v2710 = vpop.f32.mrb[0].mxu0
      %v2711 = vadd.f32 %v2550, %v2710
      %v2712 = vpop.f32.mrb[0].mxu0
      %2713 = vmatprep.mubr.bf16.mxu0 0
      %2714 = vmatmul.mubr.bf16.gmra.mrb[0].mxu0 %v2205
      %v2715 = vpop.f32.mrb[0].mxu0
      %v2716 = vadd.f32 %v2555, %v2715
      %v2717 = vpop.f32.mrb[0].mxu0
      %v2718 = vpop.f32.mrb[0].mxu0
      %v2719 = vadd.f32 %v2558, %v2718
      %v2720 = vpop.f32.mrb[0].mxu0
      %2721 = vdwg.mxu0
      %v2722 = vadd.f32 %v1826, %v2596
      %v2723 = vadd.f32 %v1829, %v2599
      %v2724 = vadd.f32 %v1834, %v2604
      %v2725 = vadd.f32 %v1837, %v2607
      %v2726 = vadd.f32 %v1842, %v2612
      %v2727 = vadd.f32 %v1845, %v2615
      %v2728 = vadd.f32 %v1850, %v2620
      %v2729 = vadd.f32 %v1853, %v2623
      %v2730 = vadd.f32 %v1858, %v2628
      %v2731 = vadd.f32 %v1861, %v2631
      %v2732 = vadd.f32 %v1866, %v2636
      %v2733 = vadd.f32 %v1869, %v2639
      %v2734 = vadd.f32 %v1874, %v2644
      %v2735 = vadd.f32 %v1877, %v2647
      %v2736 = vadd.f32 %v1882, %v2652
      %v2737 = vadd.f32 %v1885, %v2655
      %v2738 = vadd.f32 %v1890, %v2660
      %v2739 = vadd.f32 %v1893, %v2663
      %v2740 = vadd.f32 %v1898, %v2668
      %v2741 = vadd.f32 %v1901, %v2671
      %v2742 = vadd.f32 %v1906, %v2676
      %v2743 = vadd.f32 %v1909, %v2679
      %v2744 = vadd.f32 %v1914, %v2684
      %v2745 = vadd.f32 %v1917, %v2687
      %v2746 = vadd.f32 %v1922, %v2692
      %v2747 = vadd.f32 %v1925, %v2695
      %v2748 = vadd.f32 %v1930, %v2700
      %v2749 = vadd.f32 %v1933, %v2703
      %v2750 = vadd.f32 %v1938, %v2708
      %v2751 = vadd.f32 %v1941, %v2711
      %v2752 = vadd.f32 %v1946, %v2716
      %v2753 = vadd.f32 %v1949, %v2719
      %v2754 = vld [vmem:[%s2] sm:$0x1]
      %v2756 = vlaneseq
      %v2757 = vshrl.u32 %v2756, 7
      %v2758 = vsub.s32 0, %v2757
      %v2759 = vrot.slane %v2754, %v2758
      %v2761 = vadd.f32 %v2722, %v2759
      %v2762 = vadd.f32 %v2723, %v2759
      %v2763 = vadd.f32 %v2724, %v2759
      %v2764 = vadd.f32 %v2725, %v2759
      %v2765 = vadd.f32 %v2726, %v2759
      %v2766 = vadd.f32 %v2727, %v2759
      %v2767 = vadd.f32 %v2728, %v2759
      %v2768 = vadd.f32 %v2729, %v2759
      %v2769 = vadd.f32 %v2730, %v2759
      %v2770 = vadd.f32 %v2731, %v2759
      %v2771 = vadd.f32 %v2732, %v2759
      %v2772 = vadd.f32 %v2733, %v2759
      %v2773 = vadd.f32 %v2734, %v2759
      %v2774 = vadd.f32 %v2735, %v2759
      %v2775 = vadd.f32 %v2736, %v2759
      %v2776 = vadd.f32 %v2737, %v2759
      %v2777 = vadd.f32 %v2738, %v2759
      %v2778 = vadd.f32 %v2739, %v2759
      %v2779 = vadd.f32 %v2740, %v2759
      %v2780 = vadd.f32 %v2741, %v2759
      %v2781 = vadd.f32 %v2742, %v2759
      %v2782 = vadd.f32 %v2743, %v2759
      %v2783 = vadd.f32 %v2744, %v2759
      %v2784 = vadd.f32 %v2745, %v2759
      %v2785 = vadd.f32 %v2746, %v2759
      %v2786 = vadd.f32 %v2747, %v2759
      %v2787 = vadd.f32 %v2748, %v2759
      %v2788 = vadd.f32 %v2749, %v2759
      %v2789 = vadd.f32 %v2750, %v2759
      %v2790 = vadd.f32 %v2751, %v2759
      %v2791 = vadd.f32 %v2752, %v2759
      %v2792 = vadd.f32 %v2753, %v2759
      %v2793 = vpack.c.bf16 %v2762, %v2761
      %v2794 = vpack.c.bf16 %v2764, %v2763
      %v2795 = vpack.c.bf16 %v2766, %v2765
      %v2796 = vpack.c.bf16 %v2768, %v2767
      %v2797 = vpack.c.bf16 %v2770, %v2769
      %v2798 = vpack.c.bf16 %v2772, %v2771
      %v2799 = vpack.c.bf16 %v2774, %v2773
      %v2800 = vpack.c.bf16 %v2776, %v2775
      %v2801 = vpack.c.bf16 %v2778, %v2777
      %v2802 = vpack.c.bf16 %v2780, %v2779
      %v2803 = vpack.c.bf16 %v2782, %v2781
      %v2804 = vpack.c.bf16 %v2784, %v2783
      %v2805 = vpack.c.bf16 %v2786, %v2785
      %v2806 = vpack.c.bf16 %v2788, %v2787
      %v2807 = vpack.c.bf16 %v2790, %v2789
      %v2808 = vpack.c.bf16 %v2792, %v2791
      %v2825 = vunpack.c.l.b16 %v2793
      %v2826 = vunpack.c.h.b16 %v2793
      %v2827 = vunpack.c.l.b16 %v2794
      %v2828 = vunpack.c.h.b16 %v2794
      %v2829 = vunpack.c.l.b16 %v2795
      %v2830 = vunpack.c.h.b16 %v2795
      %v2831 = vunpack.c.l.b16 %v2796
      %v2832 = vunpack.c.h.b16 %v2796
      %v2833 = vunpack.c.l.b16 %v2797
      %v2834 = vunpack.c.h.b16 %v2797
      %v2835 = vunpack.c.l.b16 %v2798
      %v2836 = vunpack.c.h.b16 %v2798
      %v2837 = vunpack.c.l.b16 %v2799
      %v2838 = vunpack.c.h.b16 %v2799
      %v2839 = vunpack.c.l.b16 %v2800
      %v2840 = vunpack.c.h.b16 %v2800
      %v2841 = vunpack.c.l.b16 %v2801
      %v2842 = vunpack.c.h.b16 %v2801
      %v2843 = vunpack.c.l.b16 %v2802
      %v2844 = vunpack.c.h.b16 %v2802
      %v2845 = vunpack.c.l.b16 %v2803
      %v2846 = vunpack.c.h.b16 %v2803
      %v2847 = vunpack.c.l.b16 %v2804
      %v2848 = vunpack.c.h.b16 %v2804
      %v2849 = vunpack.c.l.b16 %v2805
      %v2850 = vunpack.c.h.b16 %v2805
      %v2851 = vunpack.c.l.b16 %v2806
      %v2852 = vunpack.c.h.b16 %v2806
      %v2853 = vunpack.c.l.b16 %v2807
      %v2854 = vunpack.c.h.b16 %v2807
      %v2855 = vunpack.c.l.b16 %v2808
      %v2856 = vunpack.c.h.b16 %v2808
      %v2857 = vpack.c.b16 %v2825, %v2825
      %v2858 = vpack.c.b16 %v2826, %v2826
      %v2859 = vpack.c.b16 %v2827, %v2827
      %v2860 = vpack.c.b16 %v2828, %v2828
      %v2861 = vpack.c.b16 %v2829, %v2829
      %v2862 = vpack.c.b16 %v2830, %v2830
      %v2863 = vpack.c.b16 %v2831, %v2831
      %v2864 = vpack.c.b16 %v2832, %v2832
      %v2865 = vpack.c.b16 %v2833, %v2833
      %v2866 = vpack.c.b16 %v2834, %v2834
      %v2867 = vpack.c.b16 %v2835, %v2835
      %v2868 = vpack.c.b16 %v2836, %v2836
      %v2869 = vpack.c.b16 %v2837, %v2837
      %v2870 = vpack.c.b16 %v2838, %v2838
      %v2871 = vpack.c.b16 %v2839, %v2839
      %v2872 = vpack.c.b16 %v2840, %v2840
      %v2873 = vpack.c.b16 %v2841, %v2841
      %v2874 = vpack.c.b16 %v2842, %v2842
      %v2875 = vpack.c.b16 %v2843, %v2843
      %v2876 = vpack.c.b16 %v2844, %v2844
      %v2877 = vpack.c.b16 %v2845, %v2845
      %v2878 = vpack.c.b16 %v2846, %v2846
      %v2879 = vpack.c.b16 %v2847, %v2847
      %v2880 = vpack.c.b16 %v2848, %v2848
      %v2881 = vpack.c.b16 %v2849, %v2849
      %v2882 = vpack.c.b16 %v2850, %v2850
      %v2883 = vpack.c.b16 %v2851, %v2851
      %v2884 = vpack.c.b16 %v2852, %v2852
      %v2885 = vpack.c.b16 %v2853, %v2853
      %v2886 = vpack.c.b16 %v2854, %v2854
      %v2887 = vpack.c.b16 %v2855, %v2855
      %v2888 = vpack.c.b16 %v2856, %v2856
      %2921 = vst [vmem:[%s245] sm:$0xf] %v2857
      %2922 = vst [vmem:[%s245 + $0x4] sm:$0xf] %v2858
      %2923 = vst [vmem:[%s245 + $0x8] sm:$0xf] %v2859
      %2924 = vst [vmem:[%s245 + $0xc] sm:$0xf] %v2860
      %2925 = vst [vmem:[%s245 + $0x10] sm:$0xf] %v2861
      %2926 = vst [vmem:[%s245 + $0x14] sm:$0xf] %v2862
      %2927 = vst [vmem:[%s245 + $0x18] sm:$0xf] %v2863
      %2928 = vst [vmem:[%s245 + $0x1c] sm:$0xf] %v2864
      %2929 = vst [vmem:[%s245 + $0x20] sm:$0xf] %v2865
      %2930 = vst [vmem:[%s245 + $0x24] sm:$0xf] %v2866
      %2931 = vst [vmem:[%s245 + $0x28] sm:$0xf] %v2867
      %2932 = vst [vmem:[%s245 + $0x2c] sm:$0xf] %v2868
      %2933 = vst [vmem:[%s245 + $0x30] sm:$0xf] %v2869
      %2934 = vst [vmem:[%s245 + $0x34] sm:$0xf] %v2870
      %2935 = vst [vmem:[%s245 + $0x38] sm:$0xf] %v2871
      %2936 = vst [vmem:[%s245 + $0x3c] sm:$0xf] %v2872
      %2937 = vst [vmem:[%s245 + $0x40] sm:$0xf] %v2873
      %2938 = vst [vmem:[%s245 + $0x44] sm:$0xf] %v2874
      %2939 = vst [vmem:[%s245 + $0x48] sm:$0xf] %v2875
      %2940 = vst [vmem:[%s245 + $0x4c] sm:$0xf] %v2876
      %2941 = vst [vmem:[%s245 + $0x50] sm:$0xf] %v2877
      %2942 = vst [vmem:[%s245 + $0x54] sm:$0xf] %v2878
      %2943 = vst [vmem:[%s245 + $0x58] sm:$0xf] %v2879
      %2944 = vst [vmem:[%s245 + $0x5c] sm:$0xf] %v2880
      %2945 = vst [vmem:[%s245 + $0x60] sm:$0xf] %v2881
      %2946 = vst [vmem:[%s245 + $0x64] sm:$0xf] %v2882
      %2947 = vst [vmem:[%s245 + $0x68] sm:$0xf] %v2883
      %2948 = vst [vmem:[%s245 + $0x6c] sm:$0xf] %v2884
      %2949 = vst [vmem:[%s245 + $0x70] sm:$0xf] %v2885
      %2950 = vst [vmem:[%s245 + $0x74] sm:$0xf] %v2886
      %2951 = vst [vmem:[%s245 + $0x78] sm:$0xf] %v2887
      %2952 = vst [vmem:[%s245 + $0x7c] sm:$0xf] %v2888
      %v2953 = vadd.f32 %v2761, %v2762
      %v2954 = vadd.f32 %v2953, %v2763
      %v2955 = vadd.f32 %v2954, %v2764
      %v2956 = vadd.f32 %v2955, %v2765
      %v2957 = vadd.f32 %v2956, %v2766
      %v2958 = vadd.f32 %v2957, %v2767
      %v2959 = vadd.f32 %v2958, %v2768
      %v2960 = vadd.f32 %v2959, %v2769
      %v2961 = vadd.f32 %v2960, %v2770
      %v2962 = vadd.f32 %v2961, %v2771
      %v2963 = vadd.f32 %v2962, %v2772
      %v2964 = vadd.f32 %v2963, %v2773
      %v2965 = vadd.f32 %v2964, %v2774
      %v2966 = vadd.f32 %v2965, %v2775
      %v2967 = vadd.f32 %v2966, %v2776
      %v2968 = vadd.f32 %v2967, %v2777
      %v2969 = vadd.f32 %v2968, %v2778
      %v2970 = vadd.f32 %v2969, %v2779
      %v2971 = vadd.f32 %v2970, %v2780
      %v2972 = vadd.f32 %v2971, %v2781
      %v2973 = vadd.f32 %v2972, %v2782
      %v2974 = vadd.f32 %v2973, %v2783
      %v2975 = vadd.f32 %v2974, %v2784
      %v2976 = vadd.f32 %v2975, %v2785
      %v2977 = vadd.f32 %v2976, %v2786
      %v2978 = vadd.f32 %v2977, %v2787
      %v2979 = vadd.f32 %v2978, %v2788
      %v2980 = vadd.f32 %v2979, %v2789
      %v2981 = vadd.f32 %v2980, %v2790
      %v2982 = vadd.f32 %v2981, %v2791
      %v2983 = vadd.f32 %v2982, %v2792
      %v2984 = vrot.slane %v2983, 4
      %v2985 = vadd.f32 %v2983, %v2984
      %v2986 = vrot.slane %v2985, 2
      %v2987 = vadd.f32 %v2985, %v2986
      %v2988 = vrot.slane %v2987, 1
      %v2989 = vadd.f32 %v2987, %v2988
      %v2990 = vmul.f32 %v2761, %v2761
      %v2991 = vmul.f32 %v2762, %v2762
      %v2992 = vmul.f32 %v2763, %v2763
      %v2993 = vmul.f32 %v2764, %v2764
      %v2994 = vmul.f32 %v2765, %v2765
      %v2995 = vmul.f32 %v2766, %v2766
      %v2996 = vmul.f32 %v2767, %v2767
      %v2997 = vmul.f32 %v2768, %v2768
      %v2998 = vmul.f32 %v2769, %v2769
      %v2999 = vmul.f32 %v2770, %v2770
      %v3000 = vmul.f32 %v2771, %v2771
      %v3001 = vmul.f32 %v2772, %v2772
      %v3002 = vmul.f32 %v2773, %v2773
      %v3003 = vmul.f32 %v2774, %v2774
      %v3004 = vmul.f32 %v2775, %v2775
      %v3005 = vmul.f32 %v2776, %v2776
      %v3006 = vmul.f32 %v2777, %v2777
      %v3007 = vmul.f32 %v2778, %v2778
      %v3008 = vmul.f32 %v2779, %v2779
      %v3009 = vmul.f32 %v2780, %v2780
      %v3010 = vmul.f32 %v2781, %v2781
      %v3011 = vmul.f32 %v2782, %v2782
      %v3012 = vmul.f32 %v2783, %v2783
      %v3013 = vmul.f32 %v2784, %v2784
      %v3014 = vmul.f32 %v2785, %v2785
      %v3015 = vmul.f32 %v2786, %v2786
      %v3016 = vmul.f32 %v2787, %v2787
      %v3017 = vmul.f32 %v2788, %v2788
      %v3018 = vmul.f32 %v2789, %v2789
      %v3019 = vmul.f32 %v2790, %v2790
      %v3020 = vmul.f32 %v2791, %v2791
      %v3021 = vmul.f32 %v2792, %v2792
      %v3022 = vadd.f32 %v2990, %v2991
      %v3023 = vadd.f32 %v3022, %v2992
      %v3024 = vadd.f32 %v3023, %v2993
      %v3025 = vadd.f32 %v3024, %v2994
      %v3026 = vadd.f32 %v3025, %v2995
      %v3027 = vadd.f32 %v3026, %v2996
      %v3028 = vadd.f32 %v3027, %v2997
      %v3029 = vadd.f32 %v3028, %v2998
      %v3030 = vadd.f32 %v3029, %v2999
      %v3031 = vadd.f32 %v3030, %v3000
      %v3032 = vadd.f32 %v3031, %v3001
      %v3033 = vadd.f32 %v3032, %v3002
      %v3034 = vadd.f32 %v3033, %v3003
      %v3035 = vadd.f32 %v3034, %v3004
      %v3036 = vadd.f32 %v3035, %v3005
      %v3037 = vadd.f32 %v3036, %v3006
      %v3038 = vadd.f32 %v3037, %v3007
      %v3039 = vadd.f32 %v3038, %v3008
      %v3040 = vadd.f32 %v3039, %v3009
      %v3041 = vadd.f32 %v3040, %v3010
      %v3042 = vadd.f32 %v3041, %v3011
      %v3043 = vadd.f32 %v3042, %v3012
      %v3044 = vadd.f32 %v3043, %v3013
      %v3045 = vadd.f32 %v3044, %v3014
      %v3046 = vadd.f32 %v3045, %v3015
      %v3047 = vadd.f32 %v3046, %v3016
      %v3048 = vadd.f32 %v3047, %v3017
      %v3049 = vadd.f32 %v3048, %v3018
      %v3050 = vadd.f32 %v3049, %v3019
      %v3051 = vadd.f32 %v3050, %v3020
      %v3052 = vadd.f32 %v3051, %v3021
      %v3053 = vrot.slane %v3052, 4
      %v3054 = vadd.f32 %v3052, %v3053
      %v3055 = vrot.slane %v3054, 2
      %v3056 = vadd.f32 %v3054, %v3055
      %v3057 = vrot.slane %v3056, 1
      %v3058 = vadd.f32 %v3056, %v3057
      %vm3059 = vcmask 1040384
      %v3060 = vsel %vm3059, %v2989, %v3058
      %3061 = vst [vmem:[%s251] sm:$0x3] %v3060
      %s3062 = smul.u32 16, %s21
      %p3063 = scmp.lt.s32.totalorder %s20, 1
      %s3064 = scalar_select %p3063, %s20, 1
      %p3065 = scmp.lt.s32.totalorder %s3062, 15
      %s3066 = scalar_select %p3065, %s3062, 15
      %s3067 = smul.addr %s3066, 2
      %s3068 = smul.addr %s3064, 32
      %s3069 = sadd.s32 %s3067, %s3068
      %s3070 = smul.addr %s3069, 4
      %s3071 = scalar_lea.vmem %s3, %s3070
      %s3072 = sadd.s32 %s20, %s21
      %p3073 = scmp.lt.s32.totalorder %s3072, 1
      %s3074 = scalar_select %p3073, %s3072, 1
      %s3075 = smul.addr %s3074, 2
      %s3076 = scalar_lea.vmem %s4, %s3075
      // Predicated region
      $region33: #{conv_block_forward.2} parent=31 // pred_check
        %p3077 = pneg %p118
      $region34: #{conv_block_forward.2} parent=31 // pred_check_branch
        %3079 = sbr.rel (%p3077) target = $region36
      $region35: #{conv_block_forward.2} parent=31 // pred_region
        %s3080 = smul.u32 16, %s21
      $region36: #{conv_block_forward.2} parent=31 // pred_fallthru
        _
      // Predicated region
      $region37: #{conv_block_forward.2} parent=31 // pred_check
        %p3081 = pneg %p146
      $region38: #{conv_block_forward.2} parent=31 // pred_check_branch
        %3083 = sbr.rel (%p3081) target = $region40
      $region39: #{conv_block_forward.2} parent=31 // pred_region
        %s3084 = sadd.s32 %s20, %s21
      $region40: #{conv_block_forward.2} parent=31 // pred_fallthru
        _
    $region32: #{conv_block_forward.2} parent=5 // pred_fallthru
      _
    %p3085 = scmp.le.s32.totalorder 2, %s11
    // Predicated region
    $region41: #{conv_block_forward.2} parent=5 // pred_check
      %p3086 = pneg %p3085
    $region42: #{conv_block_forward.2} parent=5 // pred_check_branch
      %3088 = sbr.rel (%p3086) target = $region44
    $region43: #{conv_block_forward.2} parent=5 // pred_region
      %s3089 = ssub.s32 %s11, 2
      // Predicated region
      $region45: #{conv_block_forward.2} parent=43 // pred_check
        %p3090 = pneg %p124
      $region46: #{conv_block_forward.2} parent=43 // pred_check_branch
        %3092 = sbr.rel (%p3090) target = $region48
      $region47: #{conv_block_forward.2} parent=43 // pred_region
        %s3093 = smul.u32 16, %s23
        %p3094 = scmp.lt.s32.totalorder %s22, 1
        %s3095 = scalar_select %p3094, %s22, 1
        %p3096 = scmp.lt.s32.totalorder %s3093, 15
        %s3097 = scalar_select %p3096, %s3093, 15
        %s3098 = smul.addr %s3097, 2
        %s3099 = smul.addr %s3095, 32
        %s3100 = sadd.s32 %s3098, %s3099
        %s3101 = smul.addr %s3100, 4
        %s3102 = scalar_lea.vmem %s3, %s3101
      $region48: #{conv_block_forward.2} parent=43 // pred_fallthru
        _
      // Predicated region
      $region49: #{conv_block_forward.2} parent=43 // pred_check
        %p3103 = pneg %p152
      $region50: #{conv_block_forward.2} parent=43 // pred_check_branch
        %3105 = sbr.rel (%p3103) target = $region52
      $region51: #{conv_block_forward.2} parent=43 // pred_region
        %s3106 = sadd.s32 %s22, %s23
        %p3107 = scmp.lt.s32.totalorder %s3106, 1
        %s3108 = scalar_select %p3107, %s3106, 1
        %s3109 = smul.addr %s3108, 2
        %s3110 = scalar_lea.vmem %s4, %s3109
      $region52: #{conv_block_forward.2} parent=43 // pred_fallthru
        _
    $region44: #{conv_block_forward.2} parent=5 // pred_fallthru
      _
  $region6: #{conv_block_forward.2} parent=0 // loop_footer
    %s15 = sadd.s32 1, %s11
  $region7: #{conv_block_forward.2} parent=0 // loop_footer_branch
    %10 = sbr.rel target = $region3
  $region8: #{conv_block_forward.2} parent=0 // loop_exit
    _

</llo_original>
